<compile_context>
chip_gen: v6e
topology: v6e:2x2x1
jax: 0.10.0
libtpu: 0.0.40
codegen_flags: <defaults>
</compile_context>

<pallas_src>
import jax
import jax.numpy as jnp
from jax.experimental import pallas as pl
from jax.experimental.pallas import tpu as pltpu

EPS = 1e-5  # nn.LayerNorm default eps


def _ln(h, g, b):
    mu = jnp.mean(h, axis=-1, keepdims=True)
    var = jnp.mean((h - mu) ** 2, axis=-1, keepdims=True)
    return (h - mu) * jax.lax.rsqrt(var + EPS) * g + b


# --------------------- single fused forward (gridless pallas_call) ---------------------
def fused_forward(x, A, coords, fp):
    M, coord_dim = coords.shape
    o = fp["offs"]
    in_dim, gnn, out_dim = o["in_dim"], o["gnn"], o["out_dim"]
    r_w2cat = o["r_w2cat"]
    r_w1l, r_w2, r_w3, r_w1c, r_end = o["r_w1l"], o["r_w2"], o["r_w3"], o["r_w1c"], o["r_end"]
    ffm_in = fp["ffm"].shape[0] - 1          # rows of the FFM projection (3) + 1 phase row

    def kernel(x_ref, a_ref, c_ref, w128_ref, ffm_ref, w64_ref, bias_ref, o_ref):
        xv = x_ref[...]                       # (N, in_dim) node features
        adj = a_ref[...]                      # (N, N) mean-normalized adjacency
        b = bias_ref[...]                     # (12, 64) packed bias / LayerNorm params
        bl1, g1, be1 = b[0:1], b[1:2], b[2:3]
        bl2, g2, be2 = b[3:4], b[4:5], b[5:6]
        bfc, gfc, befc = b[6:7], b[7:8], b[8:9]
        b1, b2, b3 = b[9:10], b[10:11], b[11:12]

        # ---- encoder: 2x [SAGEConv (mean agg) -> LayerNorm -> ReLU]
        # one lane-dense 128-wide matmul per layer ([wl|wr] merged host-side),
        # aggregate reordered as A@(h@wl) to keep operands lane-dense.
        def sage(h, wcat, bl, g, be):
            t = jnp.dot(h, wcat, preferred_element_type=jnp.float32)          # (N, 2*gnn)
            z = (jnp.dot(adj, t[:, :gnn], preferred_element_type=jnp.float32)
                 + t[:, gnn:] + bl)
            return jnp.maximum(_ln(z, g, be), 0.0)

        h1 = sage(xv, w128_ref[0:in_dim, :], bl1, g1, be1)
        h2 = sage(h1, w128_ref[r_w2cat:r_w2cat + gnn, :], bl2, g2, be2)

        # ---- multi-scale Fourier features: single sin pass over [B_all | B_all]
        # with a pi/2 phase on the second half (== [sin | cos]); scales pre-folded.
        proj = (jnp.dot(xv[:, :ffm_in], ffm_ref[0:ffm_in, :],
                        preferred_element_type=jnp.float32)
                + ffm_ref[ffm_in:ffm_in + 1, :])
        feats = jnp.sin(proj)                                                  # (N, 256)

        # ---- global mean pool -> ONE pooled matmul -> LayerNorm latent
        pooled = jnp.concatenate(
            [jnp.mean(feats, axis=0, keepdims=True),                           # (1, 256)
             jnp.mean(h2, axis=0, keepdims=True)], axis=1)                     # (1, 320)
        y = jnp.dot(pooled, w64_ref[0:r_w1l, :],
                    preferred_element_type=jnp.float32) + bfc
        latent = _ln(y, gfc, befc)                                             # (1, L)

        # ---- decoder (RegionMLP); coord Linear folded into the first matmul.
        lat_bias = jnp.dot(latent, w64_ref[r_w1l:r_w2, :],
                           preferred_element_type=jnp.float32) + b1
        h = jnp.maximum(jnp.dot(c_ref[...], w64_ref[r_w1c:r_end, :],
                                preferred_element_type=jnp.float32) + lat_bias, 0.0)
        h = jnp.maximum(jnp.dot(h, w64_ref[r_w2:r_w3, :],
                                preferred_element_type=jnp.float32) + b2, 0.0)
        out = jnp.dot(h, w64_ref[r_w3:r_w1c, :],
                      preferred_element_type=jnp.float32) + b3                 # (M, 64), cols>=8 are 0
        o_ref[...] = out[:, :out_dim]

    args = (x, A, coords, fp["w128"], fp["ffm"], fp["w64"], fp["bias"])
    vmem_spec = pl.BlockSpec(memory_space=pltpu.MemorySpace.VMEM)
    out_r = pl.pallas_call(
        kernel,
        out_shape=jax.ShapeDtypeStruct((M, out_dim), jnp.float32),
        in_specs=[vmem_spec] * len(args),
        out_specs=vmem_spec,
    )(*args)
    # imag part is just the (constant) imaginary decoder bias -> broadcast in the wrapper.
    return jax.lax.complex(out_r, jnp.broadcast_to(fp["bias_i"], out_r.shape))


# ------------- host-side one-time parameter folding (glue, no runtime compute) -------------
def fold_params(p, scales, bias_r, bias_i):
    f32 = jnp.float32
    ffm_dim = p["Bffm"].shape[1]
    nsc = len(scales)
    gnn = p["wl2"].shape[1]
    L = p["wc"].shape[1]                 # latent_dim
    coord_dim = p["wc"].shape[0]
    hidden = p["w2"].shape[0]
    out_dim = p["w3"].shape[1]
    in_dim = p["wl1"].shape[0]
    assert gnn == L == hidden, "bias/weight slabs assume a common 64-lane width"

    # SAGE: merge [wl | wr] per layer; stack both layers (8-sublane aligned) into one slab.
    w1cat = jnp.concatenate([p["wl1"], p["wr1"]], axis=1)                      # (in_dim, 2*gnn)
    w2cat = jnp.concatenate([p["wl2"], p["wr2"]], axis=1)                      # (gnn, 2*gnn)
    r_w2cat = ((in_dim + 7) // 8) * 8
    w128 = jnp.concatenate(
        [w1cat, jnp.zeros((r_w2cat - in_dim, 2 * gnn), f32), w2cat], axis=0)   # (r_w2cat+gnn, 128)

    # FFM: fold scales into B ((x*s)@B == x@(B*s)); duplicate columns + pi/2 phase so
    # a single sin pass yields [sin_all | cos_all].
    B_all = jnp.concatenate([p["Bffm"] * float(s) for s in scales], axis=1)    # (3, nsc*ffm)
    half = nsc * ffm_dim
    B_all2 = jnp.concatenate([B_all, B_all], axis=1)                           # (3, 2*half)
    phase = jnp.concatenate([jnp.zeros((1, half), f32),
                             jnp.full((1, half), jnp.pi / 2, f32)], axis=1)
    ffm = jnp.concatenate([B_all2, phase], axis=0)                             # (4, 2*half)

    # pooled-projection weight: reorder wfc rows from interleaved [sin_s0,cos_s0,...]
    # to [sin_all ; cos_all ; h] to match the pooled row [sin|cos|h2].
    wfc_h = p["wfc"][:gnn]
    wfc_f = p["wfc"][gnn:]
    sin_rows = jnp.array([2 * k * ffm_dim + c for k in range(nsc) for c in range(ffm_dim)],
                         dtype=jnp.int32)
    cos_rows = sin_rows + ffm_dim
    wfc_packed = jnp.concatenate([wfc_f[sin_rows], wfc_f[cos_rows], wfc_h], axis=0)  # (2*half+gnn, L)

    # decoder folds: split w1; fold the coord Linear into the coord half; fold biases.
    w1c, w1l = p["w1"][:L], p["w1"][L:]
    w1c_eff = p["wc"] @ w1c                                                    # (coord_dim, hidden)
    b1_eff = p["b1"] + p["bc"] @ w1c                                           # (1, hidden)
    w3_pad = jnp.zeros((hidden, hidden), f32).at[:, :out_dim].set(p["w3"])
    b3_pad = jnp.zeros((1, hidden), f32).at[:, :out_dim].set(p["b3"] + bias_r)

    # 64-lane weight slab and bias slab (each kernel slice is 8-sublane aligned).
    w64 = jnp.concatenate([wfc_packed, w1l, p["w2"], w3_pad, w1c_eff], axis=0)
    bias = jnp.concatenate([p["bl1"], p["g1"], p["be1"],
                            p["bl2"], p["g2"], p["be2"],
                            p["bfc"], p["gfc"], p["befc"],
                            b1_eff, p["b2"], b3_pad], axis=0)                  # (12, 64)

    r_w1l = wfc_packed.shape[0]
    offs = dict(in_dim=in_dim, gnn=gnn, out_dim=out_dim, r_w2cat=r_w2cat,
                r_w1l=r_w1l, r_w2=r_w1l + L, r_w3=r_w1l + L + hidden,
                r_w1c=r_w1l + L + 2 * hidden,
                r_end=r_w1l + L + 2 * hidden + coord_dim)
    return dict(w128=w128, ffm=ffm, w64=w64, bias=bias, bias_i=bias_i, offs=offs)


# --------------------------------- plain-JAX reference ----------------------------------
def reference_forward(x, A, coords, p, scales):
    def ln(h, g, b):
        mu = h.mean(-1, keepdims=True)
        var = ((h - mu) ** 2).mean(-1, keepdims=True)
        return (h - mu) / jnp.sqrt(var + EPS) * g + b

    h = jnp.maximum(ln(A @ x @ p["wl1"] + p["bl1"] + x @ p["wr1"], p["g1"], p["be1"]), 0.0)
    h = jnp.maximum(ln(A @ h @ p["wl2"] + p["bl2"] + h @ p["wr2"], p["g2"], p["be2"]), 0.0)
    proj = x[:, :3] @ p["Bffm"]
    feats = []
    for s in scales:
        feats += [jnp.sin(proj * s), jnp.cos(proj * s)]
    hg = jnp.concatenate([h] + feats, axis=-1).mean(0, keepdims=True)
    latent = ln(hg @ p["wfc"] + p["bfc"], p["gfc"], p["befc"])
    cf = coords @ p["wc"] + p["bc"]
    comb = jnp.concatenate(
        [cf, jnp.broadcast_to(latent, (coords.shape[0], latent.shape[1]))], axis=-1)
    hh = jnp.maximum(comb @ p["w1"] + p["b1"], 0.0)
    hh = jnp.maximum(hh @ p["w2"] + p["b2"], 0.0)
    return hh @ p["w3"] + p["b3"]


if __name__ == "__main__":
    # small shapes consistent with the module
    N, E, M = 64, 256, 128                 # graph nodes, edges, query points
    in_dim, ffm_dim, gnn_dim, latent_dim, out_dim = 6, 32, 64, 64, 8
    scales = (1.0, 5.0, 10.0, 30.0)
    ffm_out = len(scales) * 2 * ffm_dim

    key = jax.random.PRNGKey(0)
    ks = jax.random.split(key, 20)

    # ---- inputs: node features x (N,6), edge_index (2,E), query coords (M,3) ----
    x = jax.random.normal(ks[0], (N, in_dim), jnp.float32)
    edge_index = jax.random.randint(ks[1], (2, E), 0, N, dtype=jnp.int32)
    coords = jax.random.uniform(ks[2], (M, 3), jnp.float32, -1.0, 1.0)

    # normalized adjacency for SAGEConv mean aggregation (glue, built once)
    src, dst = edge_index[0], edge_index[1]
    A = jnp.zeros((N, N), jnp.float32).at[dst, src].add(1.0)
    deg = A.sum(axis=1, keepdims=True)
    A = A / jnp.maximum(deg, 1.0)

    # ---- deterministic parameters (stored as x@W layout) ----
    p = dict(
        wl1=0.1 * jax.random.normal(ks[3], (in_dim, gnn_dim), jnp.float32),
        bl1=jnp.zeros((1, gnn_dim), jnp.float32),
        wr1=0.1 * jax.random.normal(ks[4], (in_dim, gnn_dim), jnp.float32),
        g1=jnp.ones((1, gnn_dim), jnp.float32), be1=jnp.zeros((1, gnn_dim), jnp.float32),
        wl2=0.1 * jax.random.normal(ks[5], (gnn_dim, gnn_dim), jnp.float32),
        bl2=jnp.zeros((1, gnn_dim), jnp.float32),
        wr2=0.1 * jax.random.normal(ks[6], (gnn_dim, gnn_dim), jnp.float32),
        g2=jnp.ones((1, gnn_dim), jnp.float32), be2=jnp.zeros((1, gnn_dim), jnp.float32),
        Bffm=jax.random.normal(ks[7], (3, ffm_dim), jnp.float32),
        wfc=0.1 * jax.random.normal(ks[8], (gnn_dim + ffm_out, latent_dim), jnp.float32),
        bfc=jnp.zeros((1, latent_dim), jnp.float32),
        gfc=jnp.ones((1, latent_dim), jnp.float32), befc=jnp.zeros((1, latent_dim), jnp.float32),
        wc=0.1 * jax.random.normal(ks[9], (3, latent_dim), jnp.float32),
        bc=0.1 * jax.random.normal(ks[10], (1, latent_dim), jnp.float32),
        w1=0.1 * jax.random.normal(ks[11], (2 * latent_dim, 64), jnp.float32),
        b1=0.1 * jax.random.normal(ks[12], (1, 64), jnp.float32),
        w2=0.1 * jax.random.normal(ks[13], (64, 64), jnp.float32),
        b2=0.1 * jax.random.normal(ks[14], (1, 64), jnp.float32),
        w3=0.1 * jax.random.normal(ks[15], (64, out_dim), jnp.float32),
        b3=0.1 * jax.random.normal(ks[16], (1, out_dim), jnp.float32),
    )
    dec_bias_real = jnp.zeros((1, out_dim), jnp.float32)   # nn.Parameter cfloat zeros
    dec_bias_imag = jnp.zeros((1, out_dim), jnp.float32)

    # region mask / per-point PDE params (computed as in the PyTorch forward; unused
    # downstream because region_operator_config is None)
    center = jnp.array([0.0, 0.0, 0.5], jnp.float32)
    t_rad, b_rng, xy_rng, z_rng = 0.2, 0.05, 1.0, (0.0, 1.0)
    dists = jnp.linalg.norm(coords - center, axis=1)
    bmask = ((jnp.abs(coords[:, 0] + xy_rng) < b_rng) | (jnp.abs(coords[:, 0] - xy_rng) < b_rng)
             | (jnp.abs(coords[:, 1] + xy_rng) < b_rng) | (jnp.abs(coords[:, 1] - xy_rng) < b_rng)
             | (jnp.abs(coords[:, 2] - z_rng[0]) < b_rng) | (jnp.abs(coords[:, 2] - z_rng[1]) < b_rng))
    region_mask = jnp.where(dists < t_rad, 1, jnp.where(bmask, 2, 0))
    pde_params_all = jnp.where(region_mask == 1, 750.0,
                               jnp.where(region_mask == 2, 720.0, 730.0))[:, None]
    del region_mask, pde_params_all  # unused downstream (op_config is None)

    # ---------------- forward via a single fused Pallas kernel ----------------
    fp = fold_params(p, scales, dec_bias_real, dec_bias_imag)
    output = fused_forward(x, A, coords, fp)
    output = jax.block_until_ready(output)
    assert output.shape == (M, out_dim) and output.dtype == jnp.complex64

    # correctness check against a plain-JAX reference of the same math
    ref = reference_forward(x, A, coords, p, scales)
    assert jnp.allclose(output.real, ref, rtol=2e-3, atol=2e-3), "mismatch vs reference"
    assert jnp.allclose(output.imag, jnp.broadcast_to(dec_bias_imag, output.shape))

    print("KERNEL_OK")
</pallas_src>

<mosaic_0001>
module attributes {stable_mosaic.version = 11 : i64} {
  func.func @kernel(%arg0: memref<64x6xf32, #tpu.memory_space<vmem>>, %arg1: memref<64x64xf32, #tpu.memory_space<vmem>>, %arg2: memref<128x3xf32, #tpu.memory_space<vmem>>, %arg3: memref<72x128xf32, #tpu.memory_space<vmem>>, %arg4: memref<4x256xf32, #tpu.memory_space<vmem>>, %arg5: memref<515x64xf32, #tpu.memory_space<vmem>>, %arg6: memref<12x64xf32, #tpu.memory_space<vmem>>, %arg7: memref<128x8xf32, #tpu.memory_space<vmem>>) attributes {dimension_semantics = [], scalar_prefetch = 0 : i64, scratch_operands = 0 : i64, tpu.core_type = #tpu.core_type<tc>} {
    %c0 = arith.constant 0 : index
    %c0_0 = arith.constant 0 : index
    %0 = vector.load %arg0[%c0, %c0_0] : memref<64x6xf32, #tpu.memory_space<vmem>>, vector<64x6xf32>
    %c0_1 = arith.constant 0 : index
    %c0_2 = arith.constant 0 : index
    %1 = vector.load %arg1[%c0_1, %c0_2] : memref<64x64xf32, #tpu.memory_space<vmem>>, vector<64x64xf32>
    %c0_3 = arith.constant 0 : index
    %c0_4 = arith.constant 0 : index
    %2 = vector.load %arg6[%c0_3, %c0_4] : memref<12x64xf32, #tpu.memory_space<vmem>>, vector<12x64xf32>
    %3 = vector.extract_strided_slice %2 {offsets = [0, 0], sizes = [1, 64], strides = [1, 1]} : vector<12x64xf32> to vector<1x64xf32>
    %4 = vector.extract_strided_slice %2 {offsets = [1, 0], sizes = [1, 64], strides = [1, 1]} : vector<12x64xf32> to vector<1x64xf32>
    %5 = vector.extract_strided_slice %2 {offsets = [2, 0], sizes = [1, 64], strides = [1, 1]} : vector<12x64xf32> to vector<1x64xf32>
    %6 = vector.extract_strided_slice %2 {offsets = [3, 0], sizes = [1, 64], strides = [1, 1]} : vector<12x64xf32> to vector<1x64xf32>
    %7 = vector.extract_strided_slice %2 {offsets = [4, 0], sizes = [1, 64], strides = [1, 1]} : vector<12x64xf32> to vector<1x64xf32>
    %8 = vector.extract_strided_slice %2 {offsets = [5, 0], sizes = [1, 64], strides = [1, 1]} : vector<12x64xf32> to vector<1x64xf32>
    %9 = vector.extract_strided_slice %2 {offsets = [6, 0], sizes = [1, 64], strides = [1, 1]} : vector<12x64xf32> to vector<1x64xf32>
    %10 = vector.extract_strided_slice %2 {offsets = [7, 0], sizes = [1, 64], strides = [1, 1]} : vector<12x64xf32> to vector<1x64xf32>
    %11 = vector.extract_strided_slice %2 {offsets = [8, 0], sizes = [1, 64], strides = [1, 1]} : vector<12x64xf32> to vector<1x64xf32>
    %12 = vector.extract_strided_slice %2 {offsets = [9, 0], sizes = [1, 64], strides = [1, 1]} : vector<12x64xf32> to vector<1x64xf32>
    %13 = vector.extract_strided_slice %2 {offsets = [10, 0], sizes = [1, 64], strides = [1, 1]} : vector<12x64xf32> to vector<1x64xf32>
    %14 = vector.extract_strided_slice %2 {offsets = [11, 0], sizes = [1, 64], strides = [1, 1]} : vector<12x64xf32> to vector<1x64xf32>
    %c0_5 = arith.constant 0 : index
    %c0_6 = arith.constant 0 : index
    %15 = vector.load %arg3[%c0_5, %c0_6] : memref<72x128xf32, #tpu.memory_space<vmem>>, vector<6x128xf32>
    %cst = arith.constant dense<0.000000e+00> : vector<64x128xf32>
    %16 = tpu.matmul %0, %15, %cst {dimension_numbers = #tpu.dot_dimension_numbers<[1], [0], [0], [1], [0, 0, 1, 1], [], []>} : vector<64x6xf32>, vector<6x128xf32>, vector<64x128xf32> -> vector<64x128xf32>
    %17 = vector.extract_strided_slice %16 {offsets = [0, 0], sizes = [64, 64], strides = [1, 1]} : vector<64x128xf32> to vector<64x64xf32>
    %cst_7 = arith.constant dense<0.000000e+00> : vector<64x64xf32>
    %18 = tpu.matmul %1, %17, %cst_7 {dimension_numbers = #tpu.dot_dimension_numbers<[1], [0], [0], [1], [0, 0, 1, 1], [], []>} : vector<64x64xf32>, vector<64x64xf32>, vector<64x64xf32> -> vector<64x64xf32>
    %19 = vector.extract_strided_slice %16 {offsets = [0, 64], sizes = [64, 64], strides = [1, 1]} : vector<64x128xf32> to vector<64x64xf32>
    %20 = arith.addf %18, %19 : vector<64x64xf32>
    %21 = vector.broadcast %3 : vector<1x64xf32> to vector<64x64xf32>
    %22 = arith.addf %20, %21 : vector<64x64xf32>
    %cst_8 = arith.constant dense<0.000000e+00> : vector<64xf32>
    %23 = vector.multi_reduction <add>, %22, %cst_8 [1] : vector<64x64xf32> to vector<64xf32>
    %24 = vector.shape_cast %23 : vector<64xf32> to vector<64x1xf32>
    %cst_9 = arith.constant 6.400000e+01 : f32
    %25 = vector.broadcast %cst_9 : f32 to vector<64x1xf32>
    %26 = arith.divf %24, %25 : vector<64x1xf32>
    %27 = vector.broadcast %26 : vector<64x1xf32> to vector<64x64xf32>
    %28 = arith.subf %22, %27 : vector<64x64xf32>
    %29 = arith.mulf %28, %28 : vector<64x64xf32>
    %cst_10 = arith.constant dense<0.000000e+00> : vector<64xf32>
    %30 = vector.multi_reduction <add>, %29, %cst_10 [1] : vector<64x64xf32> to vector<64xf32>
    %31 = vector.shape_cast %30 : vector<64xf32> to vector<64x1xf32>
    %cst_11 = arith.constant 6.400000e+01 : f32
    %32 = vector.broadcast %cst_11 : f32 to vector<64x1xf32>
    %33 = arith.divf %31, %32 : vector<64x1xf32>
    %34 = vector.broadcast %26 : vector<64x1xf32> to vector<64x64xf32>
    %35 = arith.subf %22, %34 : vector<64x64xf32>
    %cst_12 = arith.constant 9.99999974E-6 : f32
    %36 = vector.broadcast %cst_12 : f32 to vector<64x1xf32>
    %37 = arith.addf %33, %36 : vector<64x1xf32>
    %38 = math.rsqrt %37 : vector<64x1xf32>
    %39 = vector.broadcast %38 : vector<64x1xf32> to vector<64x64xf32>
    %40 = arith.mulf %35, %39 : vector<64x64xf32>
    %41 = vector.broadcast %4 : vector<1x64xf32> to vector<64x64xf32>
    %42 = arith.mulf %40, %41 : vector<64x64xf32>
    %43 = vector.broadcast %5 : vector<1x64xf32> to vector<64x64xf32>
    %44 = arith.addf %42, %43 : vector<64x64xf32>
    %cst_13 = arith.constant 0.000000e+00 : f32
    %45 = vector.broadcast %cst_13 : f32 to vector<64x64xf32>
    %46 = arith.maximumf %44, %45 : vector<64x64xf32>
    %c8 = arith.constant 8 : index
    %c0_14 = arith.constant 0 : index
    %47 = vector.load %arg3[%c8, %c0_14] : memref<72x128xf32, #tpu.memory_space<vmem>>, vector<64x128xf32>
    %cst_15 = arith.constant dense<0.000000e+00> : vector<64x128xf32>
    %48 = tpu.matmul %46, %47, %cst_15 {dimension_numbers = #tpu.dot_dimension_numbers<[1], [0], [0], [1], [0, 0, 1, 1], [], []>} : vector<64x64xf32>, vector<64x128xf32>, vector<64x128xf32> -> vector<64x128xf32>
    %49 = vector.extract_strided_slice %48 {offsets = [0, 0], sizes = [64, 64], strides = [1, 1]} : vector<64x128xf32> to vector<64x64xf32>
    %cst_16 = arith.constant dense<0.000000e+00> : vector<64x64xf32>
    %50 = tpu.matmul %1, %49, %cst_16 {dimension_numbers = #tpu.dot_dimension_numbers<[1], [0], [0], [1], [0, 0, 1, 1], [], []>} : vector<64x64xf32>, vector<64x64xf32>, vector<64x64xf32> -> vector<64x64xf32>
    %51 = vector.extract_strided_slice %48 {offsets = [0, 64], sizes = [64, 64], strides = [1, 1]} : vector<64x128xf32> to vector<64x64xf32>
    %52 = arith.addf %50, %51 : vector<64x64xf32>
    %53 = vector.broadcast %6 : vector<1x64xf32> to vector<64x64xf32>
    %54 = arith.addf %52, %53 : vector<64x64xf32>
    %cst_17 = arith.constant dense<0.000000e+00> : vector<64xf32>
    %55 = vector.multi_reduction <add>, %54, %cst_17 [1] : vector<64x64xf32> to vector<64xf32>
    %56 = vector.shape_cast %55 : vector<64xf32> to vector<64x1xf32>
    %cst_18 = arith.constant 6.400000e+01 : f32
    %57 = vector.broadcast %cst_18 : f32 to vector<64x1xf32>
    %58 = arith.divf %56, %57 : vector<64x1xf32>
    %59 = vector.broadcast %58 : vector<64x1xf32> to vector<64x64xf32>
    %60 = arith.subf %54, %59 : vector<64x64xf32>
    %61 = arith.mulf %60, %60 : vector<64x64xf32>
    %cst_19 = arith.constant dense<0.000000e+00> : vector<64xf32>
    %62 = vector.multi_reduction <add>, %61, %cst_19 [1] : vector<64x64xf32> to vector<64xf32>
    %63 = vector.shape_cast %62 : vector<64xf32> to vector<64x1xf32>
    %cst_20 = arith.constant 6.400000e+01 : f32
    %64 = vector.broadcast %cst_20 : f32 to vector<64x1xf32>
    %65 = arith.divf %63, %64 : vector<64x1xf32>
    %66 = vector.broadcast %58 : vector<64x1xf32> to vector<64x64xf32>
    %67 = arith.subf %54, %66 : vector<64x64xf32>
    %cst_21 = arith.constant 9.99999974E-6 : f32
    %68 = vector.broadcast %cst_21 : f32 to vector<64x1xf32>
    %69 = arith.addf %65, %68 : vector<64x1xf32>
    %70 = math.rsqrt %69 : vector<64x1xf32>
    %71 = vector.broadcast %70 : vector<64x1xf32> to vector<64x64xf32>
    %72 = arith.mulf %67, %71 : vector<64x64xf32>
    %73 = vector.broadcast %7 : vector<1x64xf32> to vector<64x64xf32>
    %74 = arith.mulf %72, %73 : vector<64x64xf32>
    %75 = vector.broadcast %8 : vector<1x64xf32> to vector<64x64xf32>
    %76 = arith.addf %74, %75 : vector<64x64xf32>
    %cst_22 = arith.constant 0.000000e+00 : f32
    %77 = vector.broadcast %cst_22 : f32 to vector<64x64xf32>
    %78 = arith.maximumf %76, %77 : vector<64x64xf32>
    %79 = vector.extract_strided_slice %0 {offsets = [0, 0], sizes = [64, 3], strides = [1, 1]} : vector<64x6xf32> to vector<64x3xf32>
    %c0_23 = arith.constant 0 : index
    %c0_24 = arith.constant 0 : index
    %80 = vector.load %arg4[%c0_23, %c0_24] : memref<4x256xf32, #tpu.memory_space<vmem>>, vector<3x256xf32>
    %cst_25 = arith.constant dense<0.000000e+00> : vector<64x256xf32>
    %81 = tpu.matmul %79, %80, %cst_25 {dimension_numbers = #tpu.dot_dimension_numbers<[1], [0], [0], [1], [0, 0, 1, 1], [], []>} : vector<64x3xf32>, vector<3x256xf32>, vector<64x256xf32> -> vector<64x256xf32>
    %c3 = arith.constant 3 : index
    %c0_26 = arith.constant 0 : index
    %82 = vector.load %arg4[%c3, %c0_26] : memref<4x256xf32, #tpu.memory_space<vmem>>, vector<1x256xf32>
    %83 = vector.broadcast %82 : vector<1x256xf32> to vector<64x256xf32>
    %84 = arith.addf %81, %83 : vector<64x256xf32>
    %85 = math.sin %84 : vector<64x256xf32>
    %cst_27 = arith.constant dense<0.000000e+00> : vector<256xf32>
    %86 = vector.multi_reduction <add>, %85, %cst_27 [0] : vector<64x256xf32> to vector<256xf32>
    %87 = vector.shape_cast %86 : vector<256xf32> to vector<1x256xf32>
    %cst_28 = arith.constant 6.400000e+01 : f32
    %88 = vector.broadcast %cst_28 : f32 to vector<1x256xf32>
    %89 = arith.divf %87, %88 : vector<1x256xf32>
    %cst_29 = arith.constant dense<0.000000e+00> : vector<64xf32>
    %90 = vector.multi_reduction <add>, %78, %cst_29 [0] : vector<64x64xf32> to vector<64xf32>
    %91 = vector.shape_cast %90 : vector<64xf32> to vector<1x64xf32>
    %cst_30 = arith.constant 6.400000e+01 : f32
    %92 = vector.broadcast %cst_30 : f32 to vector<1x64xf32>
    %93 = arith.divf %91, %92 : vector<1x64xf32>
    %94 = tpu.concatenate %89, %93 in 1 : vector<1x256xf32>, vector<1x64xf32> -> vector<1x320xf32>
    %c0_31 = arith.constant 0 : index
    %c0_32 = arith.constant 0 : index
    %95 = vector.load %arg5[%c0_31, %c0_32] : memref<515x64xf32, #tpu.memory_space<vmem>>, vector<320x64xf32>
    %cst_33 = arith.constant dense<0.000000e+00> : vector<1x64xf32>
    %96 = tpu.matmul %94, %95, %cst_33 {dimension_numbers = #tpu.dot_dimension_numbers<[1], [0], [0], [1], [0, 0, 1, 1], [], []>} : vector<1x320xf32>, vector<320x64xf32>, vector<1x64xf32> -> vector<1x64xf32>
    %97 = arith.addf %96, %9 : vector<1x64xf32>
    %cst_34 = arith.constant dense<0.000000e+00> : vector<1xf32>
    %98 = vector.multi_reduction <add>, %97, %cst_34 [1] : vector<1x64xf32> to vector<1xf32>
    %99 = vector.shape_cast %98 : vector<1xf32> to vector<1x1xf32>
    %cst_35 = arith.constant 6.400000e+01 : f32
    %100 = vector.broadcast %cst_35 : f32 to vector<1x1xf32>
    %101 = arith.divf %99, %100 : vector<1x1xf32>
    %102 = vector.broadcast %101 : vector<1x1xf32> to vector<1x64xf32>
    %103 = arith.subf %97, %102 : vector<1x64xf32>
    %104 = arith.mulf %103, %103 : vector<1x64xf32>
    %cst_36 = arith.constant dense<0.000000e+00> : vector<1xf32>
    %105 = vector.multi_reduction <add>, %104, %cst_36 [1] : vector<1x64xf32> to vector<1xf32>
    %106 = vector.shape_cast %105 : vector<1xf32> to vector<1x1xf32>
    %cst_37 = arith.constant 6.400000e+01 : f32
    %107 = vector.broadcast %cst_37 : f32 to vector<1x1xf32>
    %108 = arith.divf %106, %107 : vector<1x1xf32>
    %109 = vector.broadcast %101 : vector<1x1xf32> to vector<1x64xf32>
    %110 = arith.subf %97, %109 : vector<1x64xf32>
    %cst_38 = arith.constant 9.99999974E-6 : f32
    %111 = vector.broadcast %cst_38 : f32 to vector<1x1xf32>
    %112 = arith.addf %108, %111 : vector<1x1xf32>
    %113 = math.rsqrt %112 : vector<1x1xf32>
    %114 = vector.broadcast %113 : vector<1x1xf32> to vector<1x64xf32>
    %115 = arith.mulf %110, %114 : vector<1x64xf32>
    %116 = arith.mulf %115, %10 : vector<1x64xf32>
    %117 = arith.addf %116, %11 : vector<1x64xf32>
    %c320 = arith.constant 320 : index
    %c0_39 = arith.constant 0 : index
    %118 = vector.load %arg5[%c320, %c0_39] : memref<515x64xf32, #tpu.memory_space<vmem>>, vector<64x64xf32>
    %cst_40 = arith.constant dense<0.000000e+00> : vector<1x64xf32>
    %119 = tpu.matmul %117, %118, %cst_40 {dimension_numbers = #tpu.dot_dimension_numbers<[1], [0], [0], [1], [0, 0, 1, 1], [], []>} : vector<1x64xf32>, vector<64x64xf32>, vector<1x64xf32> -> vector<1x64xf32>
    %120 = arith.addf %119, %12 : vector<1x64xf32>
    %c0_41 = arith.constant 0 : index
    %c0_42 = arith.constant 0 : index
    %121 = vector.load %arg2[%c0_41, %c0_42] : memref<128x3xf32, #tpu.memory_space<vmem>>, vector<128x3xf32>
    %c512 = arith.constant 512 : index
    %c0_43 = arith.constant 0 : index
    %122 = vector.load %arg5[%c512, %c0_43] : memref<515x64xf32, #tpu.memory_space<vmem>>, vector<3x64xf32>
    %cst_44 = arith.constant dense<0.000000e+00> : vector<128x64xf32>
    %123 = tpu.matmul %121, %122, %cst_44 {dimension_numbers = #tpu.dot_dimension_numbers<[1], [0], [0], [1], [0, 0, 1, 1], [], []>} : vector<128x3xf32>, vector<3x64xf32>, vector<128x64xf32> -> vector<128x64xf32>
    %124 = vector.broadcast %120 : vector<1x64xf32> to vector<128x64xf32>
    %125 = arith.addf %123, %124 : vector<128x64xf32>
    %cst_45 = arith.constant 0.000000e+00 : f32
    %126 = vector.broadcast %cst_45 : f32 to vector<128x64xf32>
    %127 = arith.maximumf %125, %126 : vector<128x64xf32>
    %c384 = arith.constant 384 : index
    %c0_46 = arith.constant 0 : index
    %128 = vector.load %arg5[%c384, %c0_46] : memref<515x64xf32, #tpu.memory_space<vmem>>, vector<64x64xf32>
    %cst_47 = arith.constant dense<0.000000e+00> : vector<128x64xf32>
    %129 = tpu.matmul %127, %128, %cst_47 {dimension_numbers = #tpu.dot_dimension_numbers<[1], [0], [0], [1], [0, 0, 1, 1], [], []>} : vector<128x64xf32>, vector<64x64xf32>, vector<128x64xf32> -> vector<128x64xf32>
    %130 = vector.broadcast %13 : vector<1x64xf32> to vector<128x64xf32>
    %131 = arith.addf %129, %130 : vector<128x64xf32>
    %cst_48 = arith.constant 0.000000e+00 : f32
    %132 = vector.broadcast %cst_48 : f32 to vector<128x64xf32>
    %133 = arith.maximumf %131, %132 : vector<128x64xf32>
    %c448 = arith.constant 448 : index
    %c0_49 = arith.constant 0 : index
    %134 = vector.load %arg5[%c448, %c0_49] : memref<515x64xf32, #tpu.memory_space<vmem>>, vector<64x64xf32>
    %cst_50 = arith.constant dense<0.000000e+00> : vector<128x64xf32>
    %135 = tpu.matmul %133, %134, %cst_50 {dimension_numbers = #tpu.dot_dimension_numbers<[1], [0], [0], [1], [0, 0, 1, 1], [], []>} : vector<128x64xf32>, vector<64x64xf32>, vector<128x64xf32> -> vector<128x64xf32>
    %136 = vector.broadcast %14 : vector<1x64xf32> to vector<128x64xf32>
    %137 = arith.addf %135, %136 : vector<128x64xf32>
    %138 = vector.extract_strided_slice %137 {offsets = [0, 0], sizes = [128, 8], strides = [1, 1]} : vector<128x64xf32> to vector<128x8xf32>
    %c0_51 = arith.constant 0 : index
    %c0_52 = arith.constant 0 : index
    %139 = vector.load %arg7[%c0_51, %c0_52] : memref<128x8xf32, #tpu.memory_space<vmem>>, vector<128x8xf32>
    tpu.vector_store %arg7[%c0_51, %c0_52], %138 {strides = array<i32>} : memref<128x8xf32, #tpu.memory_space<vmem>>, vector<128x8xf32>,
    return
  }
}

</mosaic_0001>

<llo_original>
// kernel: tpu_custom_call.1
$region0: #{tpu_custom_call.1}
  #allocation0 [shape = 'u32[]', space=smem, size = 0x4, offset = 0x4, fixed_abs, tag = 'smem constant byte address 0x4 - core index']
  #allocation1 [shape = 'u32[144,128]{1,0:T(1,128)}', space=vmem, size = 0x12000, scoped, tag = 'internal scratch']
  %s0 = inlined_call_operand.vmem [shape: f32[64,6], index: 0, kind: input, shape index: {}]
  %s1 = inlined_call_operand.vmem [shape: f32[64,64], index: 1, kind: input, shape index: {}]
  %s2 = inlined_call_operand.vmem [shape: f32[128,3], index: 2, kind: input, shape index: {}]
  %s3 = inlined_call_operand.vmem [shape: f32[72,128], index: 3, kind: input, shape index: {}]
  %s4 = inlined_call_operand.vmem [shape: f32[4,256], index: 4, kind: input, shape index: {}]
  %s5 = inlined_call_operand.vmem [shape: f32[515,64], index: 5, kind: input, shape index: {}]
  %s6 = inlined_call_operand.vmem [shape: f32[12,64], index: 6, kind: input, shape index: {}]
  %s7 = inlined_call_operand.vmem [shape: f32[128,8], index: 7, kind: output, shape index: {}]
  %s8 = sld [smem:[#allocation0]]
  $region38: #{tpu_custom_call.1} parent=0
    _
  %s10 = ssub.s32 1, %s8
  %s11 = scalar_select 0, %s10, %s8
  // Predicated region
  $region2: #{tpu_custom_call.1} parent=0 // pred_check
    _
  $region3: #{tpu_custom_call.1} parent=0 // pred_check_branch
    %13 = sbr.rel (0) target = $region5
  $region4: #{tpu_custom_call.1} parent=0 // pred_region
    _
  $region5: #{tpu_custom_call.1} parent=0 // pred_fallthru
    _
  // Predicated region
  $region6: #{tpu_custom_call.1} parent=0 // pred_check
    _
  $region7: #{tpu_custom_call.1} parent=0 // pred_check_branch
    %15 = sbr.rel (0) target = $region9
  $region8: #{tpu_custom_call.1} parent=0 // pred_region
    _
  $region9: #{tpu_custom_call.1} parent=0 // pred_fallthru
    _
  // Predicated region
  $region10: #{tpu_custom_call.1} parent=0 // pred_check
    _
  $region11: #{tpu_custom_call.1} parent=0 // pred_check_branch
    %17 = sbr.rel (0) target = $region13
  $region12: #{tpu_custom_call.1} parent=0 // pred_region
    _
  $region13: #{tpu_custom_call.1} parent=0 // pred_fallthru
    _
  // Predicated region
  $region14: #{tpu_custom_call.1} parent=0 // pred_check
    _
  $region15: #{tpu_custom_call.1} parent=0 // pred_check_branch
    %19 = sbr.rel (0) target = $region17
  $region16: #{tpu_custom_call.1} parent=0 // pred_region
    _
  $region17: #{tpu_custom_call.1} parent=0 // pred_fallthru
    _
  // Predicated region
  $region18: #{tpu_custom_call.1} parent=0 // pred_check
    _
  $region19: #{tpu_custom_call.1} parent=0 // pred_check_branch
    %21 = sbr.rel (0) target = $region21
  $region20: #{tpu_custom_call.1} parent=0 // pred_region
    _
  $region21: #{tpu_custom_call.1} parent=0 // pred_fallthru
    _
  // Predicated region
  $region22: #{tpu_custom_call.1} parent=0 // pred_check
    _
  $region23: #{tpu_custom_call.1} parent=0 // pred_check_branch
    %23 = sbr.rel (0) target = $region25
  $region24: #{tpu_custom_call.1} parent=0 // pred_region
    _
  $region25: #{tpu_custom_call.1} parent=0 // pred_fallthru
    _
  // Predicated region
  $region26: #{tpu_custom_call.1} parent=0 // pred_check
    _
  $region27: #{tpu_custom_call.1} parent=0 // pred_check_branch
    %25 = sbr.rel (0) target = $region29
  $region28: #{tpu_custom_call.1} parent=0 // pred_region
    _
  $region29: #{tpu_custom_call.1} parent=0 // pred_fallthru
    _
  %v26 = vld [vmem:[%s0] sm:$0xff]
  %v27 = vld [vmem:[%s0 + $0x8] sm:$0xff]
  %v28 = vld [vmem:[%s0 + $0x10] sm:$0xff]
  %v29 = vld [vmem:[%s0 + $0x18] sm:$0xff]
  %v30 = vld [vmem:[%s0 + $0x20] sm:$0xff]
  %v31 = vld [vmem:[%s0 + $0x28] sm:$0xff]
  %v32 = vld [vmem:[%s0 + $0x30] sm:$0xff]
  %v33 = vld [vmem:[%s0 + $0x38] sm:$0xff]
  %v34 = vld [vmem:[%s1] sm:$0xff]
  %v35 = vld [vmem:[%s1 + $0x8] sm:$0xff]
  %v36 = vld [vmem:[%s1 + $0x10] sm:$0xff]
  %v37 = vld [vmem:[%s1 + $0x18] sm:$0xff]
  %v38 = vld [vmem:[%s1 + $0x20] sm:$0xff]
  %v39 = vld [vmem:[%s1 + $0x28] sm:$0xff]
  %v40 = vld [vmem:[%s1 + $0x30] sm:$0xff]
  %v41 = vld [vmem:[%s1 + $0x38] sm:$0xff]
  %v42 = vld [vmem:[%s6] sm:$0xff]
  %v43 = vld [vmem:[%s6 + $0x8] sm:$0xf]
  %v44 = vld [vmem:[%s3] sm:$0x3f]
  %vm45 = vcmask 48128
  %v47 = vsel %vm45, %v26, 0
  %v50 = vsel %vm45, %v27, 0
  %v53 = vsel %vm45, %v28, 0
  %v56 = vsel %vm45, %v29, 0
  %v59 = vsel %vm45, %v30, 0
  %v62 = vsel %vm45, %v31, 0
  %v65 = vsel %vm45, %v32, 0
  %v68 = vsel %vm45, %v33, 0
  %vm70 = vcmask 1045504
  %v72 = vsel %vm70, %v44, 0
  %74 = vmatprep.subr.mxu0 0.0
  %75 = vmatpush1.msra.mxu0 0.0
  %76 = vmatprep.subr.mxu0 0.0
  %77 = vmatpush1.msra.mxu0 0.0
  %78 = vmatprep.subr.mxu0 0.0
  %79 = vmatpush1.msra.mxu0 0.0
  %80 = vmatprep.subr.mxu0 0.0
  %81 = vmatpush1.msra.mxu0 0.0
  %82 = vmatprep.subr.mxu0 0.0
  %83 = vmatpush1.msra.mxu0 0.0
  %84 = vmatprep.subr.mxu0 0.0
  %85 = vmatpush1.msra.mxu0 0.0
  %86 = vmatprep.subr.mxu0 0.0
  %87 = vmatpush1.msra.mxu0 0.0
  %88 = vmatprep.subr.mxu0 0.0
  %89 = vmatpush1.msra.mxu0 0.0
  %90 = vmatprep.subr.mxu0 0.0
  %91 = vmatpush1.msra.mxu0 0.0
  %92 = vmatprep.subr.mxu0 0.0
  %93 = vmatpush1.msra.mxu0 0.0
  %94 = vmatprep.subr.mxu0 0.0
  %95 = vmatpush1.msra.mxu0 0.0
  %96 = vmatprep.subr.mxu0 0.0
  %97 = vmatpush1.msra.mxu0 0.0
  %98 = vmatprep.subr.mxu0 0.0
  %99 = vmatpush1.msra.mxu0 0.0
  %100 = vmatprep.subr.mxu0 0.0
  %101 = vmatpush1.msra.mxu0 0.0
  %102 = vmatprep.subr.mxu0 0.0
  %103 = vmatpush1.msra.mxu0 0.0
  %104 = vmatprep.subr.mxu0 0.0
  %105 = vmatpush1.msra.mxu0 %v72
  %106 = vmatprep.subr.mxu0 0.0
  %107 = vmatpush2.msra.mxu0 0.0
  %108 = vmatprep.subr.mxu0 0.0
  %109 = vmatpush2.msra.mxu0 0.0
  %110 = vmatprep.subr.mxu0 0.0
  %111 = vmatpush2.msra.mxu0 0.0
  %112 = vmatprep.subr.mxu0 0.0
  %113 = vmatpush2.msra.mxu0 0.0
  %114 = vmatprep.subr.mxu0 0.0
  %115 = vmatpush2.msra.mxu0 0.0
  %116 = vmatprep.subr.mxu0 0.0
  %117 = vmatpush2.msra.mxu0 0.0
  %118 = vmatprep.subr.mxu0 0.0
  %119 = vmatpush2.msra.mxu0 0.0
  %120 = vmatprep.subr.mxu0 0.0
  %121 = vmatpush2.msra.mxu0 0.0
  %122 = vmatprep.subr.mxu0 0.0
  %123 = vmatpush2.msra.mxu0 0.0
  %124 = vmatprep.subr.mxu0 0.0
  %125 = vmatpush2.msra.mxu0 0.0
  %126 = vmatprep.subr.mxu0 0.0
  %127 = vmatpush2.msra.mxu0 0.0
  %128 = vmatprep.subr.mxu0 0.0
  %129 = vmatpush2.msra.mxu0 0.0
  %130 = vmatprep.subr.mxu0 0.0
  %131 = vmatpush2.msra.mxu0 0.0
  %132 = vmatprep.subr.mxu0 0.0
  %133 = vmatpush2.msra.mxu0 0.0
  %134 = vmatprep.subr.mxu0 0.0
  %135 = vmatpush2.msra.mxu0 0.0
  %136 = vmatprep.subr.mxu0 0.0
  %137 = vmatpush2.msra.mxu0 0.0
  %138 = vmatprep.mubr.f32.mxu0 0.0
  %139 = vmatmul.mubr.f32.gmra.mxu0 %v47
  %v140 = vpop.f32.mrf.mxu0
  %v141 = vadd.f32 0.0, %v140
  %v142 = vpop.f32.mrf.mxu0
  %143 = vmatprep.mubr.f32.mxu0 0.0
  %144 = vmatmul.mubr.f32.gmra.mxu0 %v50
  %v145 = vpop.f32.mrf.mxu0
  %v146 = vadd.f32 0.0, %v145
  %v147 = vpop.f32.mrf.mxu0
  %148 = vmatprep.mubr.f32.mxu0 0.0
  %149 = vmatmul.mubr.f32.gmra.mxu0 %v53
  %v150 = vpop.f32.mrf.mxu0
  %v151 = vadd.f32 0.0, %v150
  %v152 = vpop.f32.mrf.mxu0
  %153 = vmatprep.mubr.f32.mxu0 0.0
  %154 = vmatmul.mubr.f32.gmra.mxu0 %v56
  %v155 = vpop.f32.mrf.mxu0
  %v156 = vadd.f32 0.0, %v155
  %v157 = vpop.f32.mrf.mxu0
  %158 = vmatprep.mubr.f32.mxu0 0.0
  %159 = vmatmul.mubr.f32.gmra.mxu0 %v59
  %v160 = vpop.f32.mrf.mxu0
  %v161 = vadd.f32 0.0, %v160
  %v162 = vpop.f32.mrf.mxu0
  %163 = vmatprep.mubr.f32.mxu0 0.0
  %164 = vmatmul.mubr.f32.gmra.mxu0 %v62
  %v165 = vpop.f32.mrf.mxu0
  %v166 = vadd.f32 0.0, %v165
  %v167 = vpop.f32.mrf.mxu0
  %168 = vmatprep.mubr.f32.mxu0 0.0
  %169 = vmatmul.mubr.f32.gmra.mxu0 %v65
  %v170 = vpop.f32.mrf.mxu0
  %v171 = vadd.f32 0.0, %v170
  %v172 = vpop.f32.mrf.mxu0
  %173 = vmatprep.mubr.f32.mxu0 0.0
  %174 = vmatmul.mubr.f32.gmra.mxu0 %v68
  %v175 = vpop.f32.mrf.mxu0
  %v176 = vadd.f32 0.0, %v175
  %v177 = vpop.f32.mrf.mxu0
  %178 = vdwg.mxu0
  %187 = vrot.lane.b32.xlu0 %v141, 64
  %v188 = vpop.permute.xlu0 %187
  %189 = vrot.lane.b32.xlu0 %v146, 64
  %v190 = vpop.permute.xlu0 %189
  %191 = vrot.lane.b32.xlu0 %v151, 64
  %v192 = vpop.permute.xlu0 %191
  %193 = vrot.lane.b32.xlu0 %v156, 64
  %v194 = vpop.permute.xlu0 %193
  %195 = vrot.lane.b32.xlu0 %v161, 64
  %v196 = vpop.permute.xlu0 %195
  %197 = vrot.lane.b32.xlu0 %v166, 64
  %v198 = vpop.permute.xlu0 %197
  %199 = vrot.lane.b32.xlu0 %v171, 64
  %v200 = vpop.permute.xlu0 %199
  %201 = vrot.lane.b32.xlu0 %v176, 64
  %v202 = vpop.permute.xlu0 %201
  %vm211 = vcmask 523264
  %v213 = vsel %vm211, %v34, 0
  %v216 = vsel %vm211, %v35, 0
  %v219 = vsel %vm211, %v36, 0
  %v222 = vsel %vm211, %v37, 0
  %v225 = vsel %vm211, %v38, 0
  %v228 = vsel %vm211, %v39, 0
  %v231 = vsel %vm211, %v40, 0
  %v234 = vsel %vm211, %v41, 0
  %236 = vmatprep.subr.mxu0 0.0
  %237 = vmatpush1.msra.mxu0 0.0
  %238 = vmatprep.subr.mxu0 0.0
  %239 = vmatpush1.msra.mxu0 0.0
  %240 = vmatprep.subr.mxu0 0.0
  %241 = vmatpush1.msra.mxu0 0.0
  %242 = vmatprep.subr.mxu0 0.0
  %243 = vmatpush1.msra.mxu0 0.0
  %244 = vmatprep.subr.mxu0 0.0
  %245 = vmatpush1.msra.mxu0 0.0
  %246 = vmatprep.subr.mxu0 0.0
  %247 = vmatpush1.msra.mxu0 0.0
  %248 = vmatprep.subr.mxu0 0.0
  %249 = vmatpush1.msra.mxu0 0.0
  %250 = vmatprep.subr.mxu0 0.0
  %251 = vmatpush1.msra.mxu0 0.0
  %252 = vmatprep.subr.mxu0 0.0
  %253 = vmatpush1.msra.mxu0 %v176
  %254 = vmatprep.subr.mxu0 0.0
  %255 = vmatpush1.msra.mxu0 %v171
  %256 = vmatprep.subr.mxu0 0.0
  %257 = vmatpush1.msra.mxu0 %v166
  %258 = vmatprep.subr.mxu0 0.0
  %259 = vmatpush1.msra.mxu0 %v161
  %260 = vmatprep.subr.mxu0 0.0
  %261 = vmatpush1.msra.mxu0 %v156
  %262 = vmatprep.subr.mxu0 0.0
  %263 = vmatpush1.msra.mxu0 %v151
  %264 = vmatprep.subr.mxu0 0.0
  %265 = vmatpush1.msra.mxu0 %v146
  %266 = vmatprep.subr.mxu0 0.0
  %267 = vmatpush1.msra.mxu0 %v141
  %268 = vmatprep.subr.mxu0 0.0
  %269 = vmatpush2.msra.mxu0 0.0
  %270 = vmatprep.subr.mxu0 0.0
  %271 = vmatpush2.msra.mxu0 0.0
  %272 = vmatprep.subr.mxu0 0.0
  %273 = vmatpush2.msra.mxu0 0.0
  %274 = vmatprep.subr.mxu0 0.0
  %275 = vmatpush2.msra.mxu0 0.0
  %276 = vmatprep.subr.mxu0 0.0
  %277 = vmatpush2.msra.mxu0 0.0
  %278 = vmatprep.subr.mxu0 0.0
  %279 = vmatpush2.msra.mxu0 0.0
  %280 = vmatprep.subr.mxu0 0.0
  %281 = vmatpush2.msra.mxu0 0.0
  %282 = vmatprep.subr.mxu0 0.0
  %283 = vmatpush2.msra.mxu0 0.0
  %284 = vmatprep.subr.mxu0 0.0
  %285 = vmatpush2.msra.mxu0 0.0
  %286 = vmatprep.subr.mxu0 0.0
  %287 = vmatpush2.msra.mxu0 0.0
  %288 = vmatprep.subr.mxu0 0.0
  %289 = vmatpush2.msra.mxu0 0.0
  %290 = vmatprep.subr.mxu0 0.0
  %291 = vmatpush2.msra.mxu0 0.0
  %292 = vmatprep.subr.mxu0 0.0
  %293 = vmatpush2.msra.mxu0 0.0
  %294 = vmatprep.subr.mxu0 0.0
  %295 = vmatpush2.msra.mxu0 0.0
  %296 = vmatprep.subr.mxu0 0.0
  %297 = vmatpush2.msra.mxu0 0.0
  %298 = vmatprep.subr.mxu0 0.0
  %299 = vmatpush2.msra.mxu0 0.0
  %300 = vmatprep.mubr.f32.mxu0 0.0
  %301 = vmatmul.mubr.f32.gmra.mxu0 %v213
  %v302 = vpop.f32.mrf.mxu0
  %v303 = vadd.f32 %v188, %v302
  %v304 = vpop.f32.mrf.mxu0
  %305 = vmatprep.mubr.f32.mxu0 0.0
  %306 = vmatmul.mubr.f32.gmra.mxu0 %v216
  %v307 = vpop.f32.mrf.mxu0
  %v308 = vadd.f32 %v190, %v307
  %v309 = vpop.f32.mrf.mxu0
  %310 = vmatprep.mubr.f32.mxu0 0.0
  %311 = vmatmul.mubr.f32.gmra.mxu0 %v219
  %v312 = vpop.f32.mrf.mxu0
  %v313 = vadd.f32 %v192, %v312
  %v314 = vpop.f32.mrf.mxu0
  %315 = vmatprep.mubr.f32.mxu0 0.0
  %316 = vmatmul.mubr.f32.gmra.mxu0 %v222
  %v317 = vpop.f32.mrf.mxu0
  %v318 = vadd.f32 %v194, %v317
  %v319 = vpop.f32.mrf.mxu0
  %320 = vmatprep.mubr.f32.mxu0 0.0
  %321 = vmatmul.mubr.f32.gmra.mxu0 %v225
  %v322 = vpop.f32.mrf.mxu0
  %v323 = vadd.f32 %v196, %v322
  %v324 = vpop.f32.mrf.mxu0
  %325 = vmatprep.mubr.f32.mxu0 0.0
  %326 = vmatmul.mubr.f32.gmra.mxu0 %v228
  %v327 = vpop.f32.mrf.mxu0
  %v328 = vadd.f32 %v198, %v327
  %v329 = vpop.f32.mrf.mxu0
  %330 = vmatprep.mubr.f32.mxu0 0.0
  %331 = vmatmul.mubr.f32.gmra.mxu0 %v231
  %v332 = vpop.f32.mrf.mxu0
  %v333 = vadd.f32 %v200, %v332
  %v334 = vpop.f32.mrf.mxu0
  %335 = vmatprep.mubr.f32.mxu0 0.0
  %336 = vmatmul.mubr.f32.gmra.mxu0 %v234
  %v337 = vpop.f32.mrf.mxu0
  %v338 = vadd.f32 %v202, %v337
  %v339 = vpop.f32.mrf.mxu0
  %340 = vdwg.mxu0
  %v341 = vlaneseq
  %v342 = vshrl.u32 %v341, 7
  %v343 = vsub.s32 0, %v342
  %v344 = vrot.slane %v42, %v343
  %v345 = vadd.f32 %v303, %v344
  %v346 = vadd.f32 %v308, %v344
  %v347 = vadd.f32 %v313, %v344
  %v348 = vadd.f32 %v318, %v344
  %v349 = vadd.f32 %v323, %v344
  %v350 = vadd.f32 %v328, %v344
  %v351 = vadd.f32 %v333, %v344
  %v352 = vadd.f32 %v338, %v344
  %v353 = vsel %vm211, %v345, 0.0
  %354 = vadd.xlane.f32.xlu0 %v353
  %v355 = vpop.xlane.xlu0 %354
  %v356 = vsel %vm211, %v346, 0.0
  %357 = vadd.xlane.f32.xlu0 %v356
  %v358 = vpop.xlane.xlu0 %357
  %v359 = vsel %vm211, %v347, 0.0
  %360 = vadd.xlane.f32.xlu0 %v359
  %v361 = vpop.xlane.xlu0 %360
  %v362 = vsel %vm211, %v348, 0.0
  %363 = vadd.xlane.f32.xlu0 %v362
  %v364 = vpop.xlane.xlu0 %363
  %v365 = vsel %vm211, %v349, 0.0
  %366 = vadd.xlane.f32.xlu0 %v365
  %v367 = vpop.xlane.xlu0 %366
  %v368 = vsel %vm211, %v350, 0.0
  %369 = vadd.xlane.f32.xlu0 %v368
  %v370 = vpop.xlane.xlu0 %369
  %v371 = vsel %vm211, %v351, 0.0
  %372 = vadd.xlane.f32.xlu0 %v371
  %v373 = vpop.xlane.xlu0 %372
  %v374 = vsel %vm211, %v352, 0.0
  %375 = vadd.xlane.f32.xlu0 %v374
  %v376 = vpop.xlane.xlu0 %375
  %v377 = vrcp.pop 64.0
  %v378 = vmul.f32 %v355, %v377
  %v379 = vmul.f32 %v358, %v377
  %v380 = vmul.f32 %v361, %v377
  %v381 = vmul.f32 %v364, %v377
  %v382 = vmul.f32 %v367, %v377
  %v383 = vmul.f32 %v370, %v377
  %v384 = vmul.f32 %v373, %v377
  %v385 = vmul.f32 %v376, %v377
  %v386 = vsub.f32 %v345, %v378
  %v387 = vsub.f32 %v346, %v379
  %v388 = vsub.f32 %v347, %v380
  %v389 = vsub.f32 %v348, %v381
  %v390 = vsub.f32 %v349, %v382
  %v391 = vsub.f32 %v350, %v383
  %v392 = vsub.f32 %v351, %v384
  %v393 = vsub.f32 %v352, %v385
  %v394 = vmul.f32 %v386, %v386
  %v395 = vmul.f32 %v387, %v387
  %v396 = vmul.f32 %v388, %v388
  %v397 = vmul.f32 %v389, %v389
  %v398 = vmul.f32 %v390, %v390
  %v399 = vmul.f32 %v391, %v391
  %v400 = vmul.f32 %v392, %v392
  %v401 = vmul.f32 %v393, %v393
  %v402 = vsel %vm211, %v394, 0.0
  %403 = vadd.xlane.f32.xlu0 %v402
  %v404 = vpop.xlane.xlu0 %403
  %v405 = vsel %vm211, %v395, 0.0
  %406 = vadd.xlane.f32.xlu0 %v405
  %v407 = vpop.xlane.xlu0 %406
  %v408 = vsel %vm211, %v396, 0.0
  %409 = vadd.xlane.f32.xlu0 %v408
  %v410 = vpop.xlane.xlu0 %409
  %v411 = vsel %vm211, %v397, 0.0
  %412 = vadd.xlane.f32.xlu0 %v411
  %v413 = vpop.xlane.xlu0 %412
  %v414 = vsel %vm211, %v398, 0.0
  %415 = vadd.xlane.f32.xlu0 %v414
  %v416 = vpop.xlane.xlu0 %415
  %v417 = vsel %vm211, %v399, 0.0
  %418 = vadd.xlane.f32.xlu0 %v417
  %v419 = vpop.xlane.xlu0 %418
  %v420 = vsel %vm211, %v400, 0.0
  %421 = vadd.xlane.f32.xlu0 %v420
  %v422 = vpop.xlane.xlu0 %421
  %v423 = vsel %vm211, %v401, 0.0
  %424 = vadd.xlane.f32.xlu0 %v423
  %v425 = vpop.xlane.xlu0 %424
  %v426 = vmul.f32 %v404, %v377
  %v427 = vmul.f32 %v407, %v377
  %v428 = vmul.f32 %v410, %v377
  %v429 = vmul.f32 %v413, %v377
  %v430 = vmul.f32 %v416, %v377
  %v431 = vmul.f32 %v419, %v377
  %v432 = vmul.f32 %v422, %v377
  %v433 = vmul.f32 %v425, %v377
  %v434 = vadd.f32 %v426, 1e-05
  %v435 = vadd.f32 %v427, 1e-05
  %v436 = vadd.f32 %v428, 1e-05
  %v437 = vadd.f32 %v429, 1e-05
  %v438 = vadd.f32 %v430, 1e-05
  %v439 = vadd.f32 %v431, 1e-05
  %v440 = vadd.f32 %v432, 1e-05
  %v441 = vadd.f32 %v433, 1e-05
  %v442 = vrsqrt.pop %v434
  %v443 = vrsqrt.pop %v435
  %v444 = vrsqrt.pop %v436
  %v445 = vrsqrt.pop %v437
  %v446 = vrsqrt.pop %v438
  %v447 = vrsqrt.pop %v439
  %v448 = vrsqrt.pop %v440
  %v449 = vrsqrt.pop %v441
  %v450 = vmul.f32 %v386, %v442
  %v451 = vmul.f32 %v387, %v443
  %v452 = vmul.f32 %v388, %v444
  %v453 = vmul.f32 %v389, %v445
  %v454 = vmul.f32 %v390, %v446
  %v455 = vmul.f32 %v391, %v447
  %v456 = vmul.f32 %v392, %v448
  %v457 = vmul.f32 %v393, %v449
  %v458 = vlaneseq
  %v459 = vshrl.u32 %v458, 7
  %v460 = vsub.s32 1, %v459
  %v461 = vrot.slane %v42, %v460
  %v462 = vmul.f32 %v450, %v461
  %v463 = vmul.f32 %v451, %v461
  %v464 = vmul.f32 %v452, %v461
  %v465 = vmul.f32 %v453, %v461
  %v466 = vmul.f32 %v454, %v461
  %v467 = vmul.f32 %v455, %v461
  %v468 = vmul.f32 %v456, %v461
  %v469 = vmul.f32 %v457, %v461
  %v470 = vlaneseq
  %v471 = vshrl.u32 %v470, 7
  %v472 = vsub.s32 2, %v471
  %v473 = vrot.slane %v42, %v472
  %v474 = vadd.f32 %v462, %v473
  %v475 = vadd.f32 %v463, %v473
  %v476 = vadd.f32 %v464, %v473
  %v477 = vadd.f32 %v465, %v473
  %v478 = vadd.f32 %v466, %v473
  %v479 = vadd.f32 %v467, %v473
  %v480 = vadd.f32 %v468, %v473
  %v481 = vadd.f32 %v469, %v473
  %v482 = vmax.f32 %v474, 0.0
  %v483 = vmax.f32 %v475, 0.0
  %v484 = vmax.f32 %v476, 0.0
  %v485 = vmax.f32 %v477, 0.0
  %v486 = vmax.f32 %v478, 0.0
  %v487 = vmax.f32 %v479, 0.0
  %v488 = vmax.f32 %v480, 0.0
  %v489 = vmax.f32 %v481, 0.0
  %v490 = vld [vmem:[%s3 + $0x8] sm:$0xff]
  %v491 = vld [vmem:[%s3 + $0x10] sm:$0xff]
  %v492 = vld [vmem:[%s3 + $0x18] sm:$0xff]
  %v493 = vld [vmem:[%s3 + $0x20] sm:$0xff]
  %v494 = vld [vmem:[%s3 + $0x28] sm:$0xff]
  %v495 = vld [vmem:[%s3 + $0x30] sm:$0xff]
  %v496 = vld [vmem:[%s3 + $0x38] sm:$0xff]
  %v497 = vld [vmem:[%s3 + $0x40] sm:$0xff]
  %v499 = vsel %vm211, %v482, 0
  %v502 = vsel %vm211, %v483, 0
  %v505 = vsel %vm211, %v484, 0
  %v508 = vsel %vm211, %v485, 0
  %v511 = vsel %vm211, %v486, 0
  %v514 = vsel %vm211, %v487, 0
  %v517 = vsel %vm211, %v488, 0
  %v520 = vsel %vm211, %v489, 0
  %522 = vmatprep.subr.mxu0 0.0
  %523 = vmatpush1.msra.mxu0 0.0
  %524 = vmatprep.subr.mxu0 0.0
  %525 = vmatpush1.msra.mxu0 0.0
  %526 = vmatprep.subr.mxu0 0.0
  %527 = vmatpush1.msra.mxu0 0.0
  %528 = vmatprep.subr.mxu0 0.0
  %529 = vmatpush1.msra.mxu0 0.0
  %530 = vmatprep.subr.mxu0 0.0
  %531 = vmatpush1.msra.mxu0 0.0
  %532 = vmatprep.subr.mxu0 0.0
  %533 = vmatpush1.msra.mxu0 0.0
  %534 = vmatprep.subr.mxu0 0.0
  %535 = vmatpush1.msra.mxu0 0.0
  %536 = vmatprep.subr.mxu0 0.0
  %537 = vmatpush1.msra.mxu0 0.0
  %538 = vmatprep.subr.mxu0 0.0
  %539 = vmatpush1.msra.mxu0 %v497
  %540 = vmatprep.subr.mxu0 0.0
  %541 = vmatpush1.msra.mxu0 %v496
  %542 = vmatprep.subr.mxu0 0.0
  %543 = vmatpush1.msra.mxu0 %v495
  %544 = vmatprep.subr.mxu0 0.0
  %545 = vmatpush1.msra.mxu0 %v494
  %546 = vmatprep.subr.mxu0 0.0
  %547 = vmatpush1.msra.mxu0 %v493
  %548 = vmatprep.subr.mxu0 0.0
  %549 = vmatpush1.msra.mxu0 %v492
  %550 = vmatprep.subr.mxu0 0.0
  %551 = vmatpush1.msra.mxu0 %v491
  %552 = vmatprep.subr.mxu0 0.0
  %553 = vmatpush1.msra.mxu0 %v490
  %554 = vmatprep.subr.mxu0 0.0
  %555 = vmatpush2.msra.mxu0 0.0
  %556 = vmatprep.subr.mxu0 0.0
  %557 = vmatpush2.msra.mxu0 0.0
  %558 = vmatprep.subr.mxu0 0.0
  %559 = vmatpush2.msra.mxu0 0.0
  %560 = vmatprep.subr.mxu0 0.0
  %561 = vmatpush2.msra.mxu0 0.0
  %562 = vmatprep.subr.mxu0 0.0
  %563 = vmatpush2.msra.mxu0 0.0
  %564 = vmatprep.subr.mxu0 0.0
  %565 = vmatpush2.msra.mxu0 0.0
  %566 = vmatprep.subr.mxu0 0.0
  %567 = vmatpush2.msra.mxu0 0.0
  %568 = vmatprep.subr.mxu0 0.0
  %569 = vmatpush2.msra.mxu0 0.0
  %570 = vmatprep.subr.mxu0 0.0
  %571 = vmatpush2.msra.mxu0 0.0
  %572 = vmatprep.subr.mxu0 0.0
  %573 = vmatpush2.msra.mxu0 0.0
  %574 = vmatprep.subr.mxu0 0.0
  %575 = vmatpush2.msra.mxu0 0.0
  %576 = vmatprep.subr.mxu0 0.0
  %577 = vmatpush2.msra.mxu0 0.0
  %578 = vmatprep.subr.mxu0 0.0
  %579 = vmatpush2.msra.mxu0 0.0
  %580 = vmatprep.subr.mxu0 0.0
  %581 = vmatpush2.msra.mxu0 0.0
  %582 = vmatprep.subr.mxu0 0.0
  %583 = vmatpush2.msra.mxu0 0.0
  %584 = vmatprep.subr.mxu0 0.0
  %585 = vmatpush2.msra.mxu0 0.0
  %586 = vmatprep.mubr.f32.mxu0 0.0
  %587 = vmatmul.mubr.f32.gmra.mxu0 %v499
  %v588 = vpop.f32.mrf.mxu0
  %v589 = vadd.f32 0.0, %v588
  %v590 = vpop.f32.mrf.mxu0
  %591 = vmatprep.mubr.f32.mxu0 0.0
  %592 = vmatmul.mubr.f32.gmra.mxu0 %v502
  %v593 = vpop.f32.mrf.mxu0
  %v594 = vadd.f32 0.0, %v593
  %v595 = vpop.f32.mrf.mxu0
  %596 = vmatprep.mubr.f32.mxu0 0.0
  %597 = vmatmul.mubr.f32.gmra.mxu0 %v505
  %v598 = vpop.f32.mrf.mxu0
  %v599 = vadd.f32 0.0, %v598
  %v600 = vpop.f32.mrf.mxu0
  %601 = vmatprep.mubr.f32.mxu0 0.0
  %602 = vmatmul.mubr.f32.gmra.mxu0 %v508
  %v603 = vpop.f32.mrf.mxu0
  %v604 = vadd.f32 0.0, %v603
  %v605 = vpop.f32.mrf.mxu0
  %606 = vmatprep.mubr.f32.mxu0 0.0
  %607 = vmatmul.mubr.f32.gmra.mxu0 %v511
  %v608 = vpop.f32.mrf.mxu0
  %v609 = vadd.f32 0.0, %v608
  %v610 = vpop.f32.mrf.mxu0
  %611 = vmatprep.mubr.f32.mxu0 0.0
  %612 = vmatmul.mubr.f32.gmra.mxu0 %v514
  %v613 = vpop.f32.mrf.mxu0
  %v614 = vadd.f32 0.0, %v613
  %v615 = vpop.f32.mrf.mxu0
  %616 = vmatprep.mubr.f32.mxu0 0.0
  %617 = vmatmul.mubr.f32.gmra.mxu0 %v517
  %v618 = vpop.f32.mrf.mxu0
  %v619 = vadd.f32 0.0, %v618
  %v620 = vpop.f32.mrf.mxu0
  %621 = vmatprep.mubr.f32.mxu0 0.0
  %622 = vmatmul.mubr.f32.gmra.mxu0 %v520
  %v623 = vpop.f32.mrf.mxu0
  %v624 = vadd.f32 0.0, %v623
  %v625 = vpop.f32.mrf.mxu0
  %626 = vdwg.mxu0
  %635 = vrot.lane.b32.xlu0 %v589, 64
  %v636 = vpop.permute.xlu0 %635
  %637 = vrot.lane.b32.xlu0 %v594, 64
  %v638 = vpop.permute.xlu0 %637
  %639 = vrot.lane.b32.xlu0 %v599, 64
  %v640 = vpop.permute.xlu0 %639
  %641 = vrot.lane.b32.xlu0 %v604, 64
  %v642 = vpop.permute.xlu0 %641
  %643 = vrot.lane.b32.xlu0 %v609, 64
  %v644 = vpop.permute.xlu0 %643
  %645 = vrot.lane.b32.xlu0 %v614, 64
  %v646 = vpop.permute.xlu0 %645
  %647 = vrot.lane.b32.xlu0 %v619, 64
  %v648 = vpop.permute.xlu0 %647
  %649 = vrot.lane.b32.xlu0 %v624, 64
  %v650 = vpop.permute.xlu0 %649
  %659 = vmatprep.subr.mxu0 0.0
  %660 = vmatpush1.msra.mxu0 0.0
  %661 = vmatprep.subr.mxu0 0.0
  %662 = vmatpush1.msra.mxu0 0.0
  %663 = vmatprep.subr.mxu0 0.0
  %664 = vmatpush1.msra.mxu0 0.0
  %665 = vmatprep.subr.mxu0 0.0
  %666 = vmatpush1.msra.mxu0 0.0
  %667 = vmatprep.subr.mxu0 0.0
  %668 = vmatpush1.msra.mxu0 0.0
  %669 = vmatprep.subr.mxu0 0.0
  %670 = vmatpush1.msra.mxu0 0.0
  %671 = vmatprep.subr.mxu0 0.0
  %672 = vmatpush1.msra.mxu0 0.0
  %673 = vmatprep.subr.mxu0 0.0
  %674 = vmatpush1.msra.mxu0 0.0
  %675 = vmatprep.subr.mxu0 0.0
  %676 = vmatpush1.msra.mxu0 %v624
  %677 = vmatprep.subr.mxu0 0.0
  %678 = vmatpush1.msra.mxu0 %v619
  %679 = vmatprep.subr.mxu0 0.0
  %680 = vmatpush1.msra.mxu0 %v614
  %681 = vmatprep.subr.mxu0 0.0
  %682 = vmatpush1.msra.mxu0 %v609
  %683 = vmatprep.subr.mxu0 0.0
  %684 = vmatpush1.msra.mxu0 %v604
  %685 = vmatprep.subr.mxu0 0.0
  %686 = vmatpush1.msra.mxu0 %v599
  %687 = vmatprep.subr.mxu0 0.0
  %688 = vmatpush1.msra.mxu0 %v594
  %689 = vmatprep.subr.mxu0 0.0
  %690 = vmatpush1.msra.mxu0 %v589
  %691 = vmatprep.subr.mxu0 0.0
  %692 = vmatpush2.msra.mxu0 0.0
  %693 = vmatprep.subr.mxu0 0.0
  %694 = vmatpush2.msra.mxu0 0.0
  %695 = vmatprep.subr.mxu0 0.0
  %696 = vmatpush2.msra.mxu0 0.0
  %697 = vmatprep.subr.mxu0 0.0
  %698 = vmatpush2.msra.mxu0 0.0
  %699 = vmatprep.subr.mxu0 0.0
  %700 = vmatpush2.msra.mxu0 0.0
  %701 = vmatprep.subr.mxu0 0.0
  %702 = vmatpush2.msra.mxu0 0.0
  %703 = vmatprep.subr.mxu0 0.0
  %704 = vmatpush2.msra.mxu0 0.0
  %705 = vmatprep.subr.mxu0 0.0
  %706 = vmatpush2.msra.mxu0 0.0
  %707 = vmatprep.subr.mxu0 0.0
  %708 = vmatpush2.msra.mxu0 0.0
  %709 = vmatprep.subr.mxu0 0.0
  %710 = vmatpush2.msra.mxu0 0.0
  %711 = vmatprep.subr.mxu0 0.0
  %712 = vmatpush2.msra.mxu0 0.0
  %713 = vmatprep.subr.mxu0 0.0
  %714 = vmatpush2.msra.mxu0 0.0
  %715 = vmatprep.subr.mxu0 0.0
  %716 = vmatpush2.msra.mxu0 0.0
  %717 = vmatprep.subr.mxu0 0.0
  %718 = vmatpush2.msra.mxu0 0.0
  %719 = vmatprep.subr.mxu0 0.0
  %720 = vmatpush2.msra.mxu0 0.0
  %721 = vmatprep.subr.mxu0 0.0
  %722 = vmatpush2.msra.mxu0 0.0
  %723 = vmatprep.mubr.f32.mxu0 0.0
  %724 = vmatmul.mubr.f32.gmra.mxu0 %v213
  %v725 = vpop.f32.mrf.mxu0
  %v726 = vadd.f32 %v636, %v725
  %v727 = vpop.f32.mrf.mxu0
  %728 = vmatprep.mubr.f32.mxu0 0.0
  %729 = vmatmul.mubr.f32.gmra.mxu0 %v216
  %v730 = vpop.f32.mrf.mxu0
  %v731 = vadd.f32 %v638, %v730
  %v732 = vpop.f32.mrf.mxu0
  %733 = vmatprep.mubr.f32.mxu0 0.0
  %734 = vmatmul.mubr.f32.gmra.mxu0 %v219
  %v735 = vpop.f32.mrf.mxu0
  %v736 = vadd.f32 %v640, %v735
  %v737 = vpop.f32.mrf.mxu0
  %738 = vmatprep.mubr.f32.mxu0 0.0
  %739 = vmatmul.mubr.f32.gmra.mxu0 %v222
  %v740 = vpop.f32.mrf.mxu0
  %v741 = vadd.f32 %v642, %v740
  %v742 = vpop.f32.mrf.mxu0
  %743 = vmatprep.mubr.f32.mxu0 0.0
  %744 = vmatmul.mubr.f32.gmra.mxu0 %v225
  %v745 = vpop.f32.mrf.mxu0
  %v746 = vadd.f32 %v644, %v745
  %v747 = vpop.f32.mrf.mxu0
  %748 = vmatprep.mubr.f32.mxu0 0.0
  %749 = vmatmul.mubr.f32.gmra.mxu0 %v228
  %v750 = vpop.f32.mrf.mxu0
  %v751 = vadd.f32 %v646, %v750
  %v752 = vpop.f32.mrf.mxu0
  %753 = vmatprep.mubr.f32.mxu0 0.0
  %754 = vmatmul.mubr.f32.gmra.mxu0 %v231
  %v755 = vpop.f32.mrf.mxu0
  %v756 = vadd.f32 %v648, %v755
  %v757 = vpop.f32.mrf.mxu0
  %758 = vmatprep.mubr.f32.mxu0 0.0
  %759 = vmatmul.mubr.f32.gmra.mxu0 %v234
  %v760 = vpop.f32.mrf.mxu0
  %v761 = vadd.f32 %v650, %v760
  %v762 = vpop.f32.mrf.mxu0
  %763 = vdwg.mxu0
  %v764 = vlaneseq
  %v765 = vshrl.u32 %v764, 7
  %v766 = vsub.s32 3, %v765
  %v767 = vrot.slane %v42, %v766
  %v768 = vadd.f32 %v726, %v767
  %v769 = vadd.f32 %v731, %v767
  %v770 = vadd.f32 %v736, %v767
  %v771 = vadd.f32 %v741, %v767
  %v772 = vadd.f32 %v746, %v767
  %v773 = vadd.f32 %v751, %v767
  %v774 = vadd.f32 %v756, %v767
  %v775 = vadd.f32 %v761, %v767
  %v776 = vsel %vm211, %v768, 0.0
  %777 = vadd.xlane.f32.xlu0 %v776
  %v778 = vpop.xlane.xlu0 %777
  %v779 = vsel %vm211, %v769, 0.0
  %780 = vadd.xlane.f32.xlu0 %v779
  %v781 = vpop.xlane.xlu0 %780
  %v782 = vsel %vm211, %v770, 0.0
  %783 = vadd.xlane.f32.xlu0 %v782
  %v784 = vpop.xlane.xlu0 %783
  %v785 = vsel %vm211, %v771, 0.0
  %786 = vadd.xlane.f32.xlu0 %v785
  %v787 = vpop.xlane.xlu0 %786
  %v788 = vsel %vm211, %v772, 0.0
  %789 = vadd.xlane.f32.xlu0 %v788
  %v790 = vpop.xlane.xlu0 %789
  %v791 = vsel %vm211, %v773, 0.0
  %792 = vadd.xlane.f32.xlu0 %v791
  %v793 = vpop.xlane.xlu0 %792
  %v794 = vsel %vm211, %v774, 0.0
  %795 = vadd.xlane.f32.xlu0 %v794
  %v796 = vpop.xlane.xlu0 %795
  %v797 = vsel %vm211, %v775, 0.0
  %798 = vadd.xlane.f32.xlu0 %v797
  %v799 = vpop.xlane.xlu0 %798
  %v800 = vmul.f32 %v778, %v377
  %v801 = vmul.f32 %v781, %v377
  %v802 = vmul.f32 %v784, %v377
  %v803 = vmul.f32 %v787, %v377
  %v804 = vmul.f32 %v790, %v377
  %v805 = vmul.f32 %v793, %v377
  %v806 = vmul.f32 %v796, %v377
  %v807 = vmul.f32 %v799, %v377
  %v808 = vsub.f32 %v768, %v800
  %v809 = vsub.f32 %v769, %v801
  %v810 = vsub.f32 %v770, %v802
  %v811 = vsub.f32 %v771, %v803
  %v812 = vsub.f32 %v772, %v804
  %v813 = vsub.f32 %v773, %v805
  %v814 = vsub.f32 %v774, %v806
  %v815 = vsub.f32 %v775, %v807
  %v816 = vmul.f32 %v808, %v808
  %v817 = vmul.f32 %v809, %v809
  %v818 = vmul.f32 %v810, %v810
  %v819 = vmul.f32 %v811, %v811
  %v820 = vmul.f32 %v812, %v812
  %v821 = vmul.f32 %v813, %v813
  %v822 = vmul.f32 %v814, %v814
  %v823 = vmul.f32 %v815, %v815
  %v824 = vsel %vm211, %v816, 0.0
  %825 = vadd.xlane.f32.xlu0 %v824
  %v826 = vpop.xlane.xlu0 %825
  %v827 = vsel %vm211, %v817, 0.0
  %828 = vadd.xlane.f32.xlu0 %v827
  %v829 = vpop.xlane.xlu0 %828
  %v830 = vsel %vm211, %v818, 0.0
  %831 = vadd.xlane.f32.xlu0 %v830
  %v832 = vpop.xlane.xlu0 %831
  %v833 = vsel %vm211, %v819, 0.0
  %834 = vadd.xlane.f32.xlu0 %v833
  %v835 = vpop.xlane.xlu0 %834
  %v836 = vsel %vm211, %v820, 0.0
  %837 = vadd.xlane.f32.xlu0 %v836
  %v838 = vpop.xlane.xlu0 %837
  %v839 = vsel %vm211, %v821, 0.0
  %840 = vadd.xlane.f32.xlu0 %v839
  %v841 = vpop.xlane.xlu0 %840
  %v842 = vsel %vm211, %v822, 0.0
  %843 = vadd.xlane.f32.xlu0 %v842
  %v844 = vpop.xlane.xlu0 %843
  %v845 = vsel %vm211, %v823, 0.0
  %846 = vadd.xlane.f32.xlu0 %v845
  %v847 = vpop.xlane.xlu0 %846
  %v848 = vmul.f32 %v826, %v377
  %v849 = vmul.f32 %v829, %v377
  %v850 = vmul.f32 %v832, %v377
  %v851 = vmul.f32 %v835, %v377
  %v852 = vmul.f32 %v838, %v377
  %v853 = vmul.f32 %v841, %v377
  %v854 = vmul.f32 %v844, %v377
  %v855 = vmul.f32 %v847, %v377
  %v856 = vadd.f32 %v848, 1e-05
  %v857 = vadd.f32 %v849, 1e-05
  %v858 = vadd.f32 %v850, 1e-05
  %v859 = vadd.f32 %v851, 1e-05
  %v860 = vadd.f32 %v852, 1e-05
  %v861 = vadd.f32 %v853, 1e-05
  %v862 = vadd.f32 %v854, 1e-05
  %v863 = vadd.f32 %v855, 1e-05
  %v864 = vrsqrt.pop %v856
  %v865 = vrsqrt.pop %v857
  %v866 = vrsqrt.pop %v858
  %v867 = vrsqrt.pop %v859
  %v868 = vrsqrt.pop %v860
  %v869 = vrsqrt.pop %v861
  %v870 = vrsqrt.pop %v862
  %v871 = vrsqrt.pop %v863
  %v872 = vmul.f32 %v808, %v864
  %v873 = vmul.f32 %v809, %v865
  %v874 = vmul.f32 %v810, %v866
  %v875 = vmul.f32 %v811, %v867
  %v876 = vmul.f32 %v812, %v868
  %v877 = vmul.f32 %v813, %v869
  %v878 = vmul.f32 %v814, %v870
  %v879 = vmul.f32 %v815, %v871
  %v880 = vlaneseq
  %v881 = vshrl.u32 %v880, 7
  %v882 = vsub.s32 4, %v881
  %v883 = vrot.slane %v42, %v882
  %v884 = vmul.f32 %v872, %v883
  %v885 = vmul.f32 %v873, %v883
  %v886 = vmul.f32 %v874, %v883
  %v887 = vmul.f32 %v875, %v883
  %v888 = vmul.f32 %v876, %v883
  %v889 = vmul.f32 %v877, %v883
  %v890 = vmul.f32 %v878, %v883
  %v891 = vmul.f32 %v879, %v883
  %v892 = vlaneseq
  %v893 = vshrl.u32 %v892, 7
  %v894 = vsub.s32 5, %v893
  %v895 = vrot.slane %v42, %v894
  %v896 = vadd.f32 %v884, %v895
  %v897 = vadd.f32 %v885, %v895
  %v898 = vadd.f32 %v886, %v895
  %v899 = vadd.f32 %v887, %v895
  %v900 = vadd.f32 %v888, %v895
  %v901 = vadd.f32 %v889, %v895
  %v902 = vadd.f32 %v890, %v895
  %v903 = vadd.f32 %v891, %v895
  %v904 = vmax.f32 %v896, 0.0
  %v905 = vmax.f32 %v897, 0.0
  %v906 = vmax.f32 %v898, 0.0
  %v907 = vmax.f32 %v899, 0.0
  %v908 = vmax.f32 %v900, 0.0
  %v909 = vmax.f32 %v901, 0.0
  %v910 = vmax.f32 %v902, 0.0
  %v911 = vmax.f32 %v903, 0.0
  %v912 = vld [vmem:[%s4] sm:$0x77]
  %s913 = scalar_lea.vmem %s4, 3
  %v914 = vld [vmem:[%s913] ss:$4 sm:$0x3]
  %v916 = vlaneseq
  %v917 = vshrl.u32 %v916, 7
  %v918 = vsub.s32 0, %v917
  %v919 = vrot.slane %v914, %v918
  %v920 = vlaneseq
  %v921 = vshrl.u32 %v920, 7
  %v922 = vsub.s32 1, %v921
  %v923 = vrot.slane %v914, %v922
  %v927 = vcombine.high %v912, %v912
  %vm928 = vcmask 23552
  %v929 = vsel %vm928, %v26, 0
  %v931 = vsel %vm928, %v27, 0
  %v933 = vsel %vm928, %v28, 0
  %v935 = vsel %vm928, %v29, 0
  %v937 = vsel %vm928, %v30, 0
  %v939 = vsel %vm928, %v31, 0
  %v941 = vsel %vm928, %v32, 0
  %v943 = vsel %vm928, %v33, 0
  %vm945 = vcmask 1042432
  %v946 = vsel %vm945, %v912, 0
  %v948 = vsel %vm945, %v927, 0
  %950 = vmatprep.subr.mxu0 0.0
  %951 = vmatpush1.msra.mxu0 0.0
  %952 = vmatprep.subr.mxu0 0.0
  %953 = vmatpush1.msra.mxu0 0.0
  %954 = vmatprep.subr.mxu0 0.0
  %955 = vmatpush1.msra.mxu0 0.0
  %956 = vmatprep.subr.mxu0 0.0
  %957 = vmatpush1.msra.mxu0 0.0
  %958 = vmatprep.subr.mxu0 0.0
  %959 = vmatpush1.msra.mxu0 0.0
  %960 = vmatprep.subr.mxu0 0.0
  %961 = vmatpush1.msra.mxu0 0.0
  %962 = vmatprep.subr.mxu0 0.0
  %963 = vmatpush1.msra.mxu0 0.0
  %964 = vmatprep.subr.mxu0 0.0
  %965 = vmatpush1.msra.mxu0 0.0
  %966 = vmatprep.subr.mxu0 0.0
  %967 = vmatpush1.msra.mxu0 0.0
  %968 = vmatprep.subr.mxu0 0.0
  %969 = vmatpush1.msra.mxu0 0.0
  %970 = vmatprep.subr.mxu0 0.0
  %971 = vmatpush1.msra.mxu0 0.0
  %972 = vmatprep.subr.mxu0 0.0
  %973 = vmatpush1.msra.mxu0 0.0
  %974 = vmatprep.subr.mxu0 0.0
  %975 = vmatpush1.msra.mxu0 0.0
  %976 = vmatprep.subr.mxu0 0.0
  %977 = vmatpush1.msra.mxu0 0.0
  %978 = vmatprep.subr.mxu0 0.0
  %979 = vmatpush1.msra.mxu0 0.0
  %980 = vmatprep.subr.mxu0 %v948
  %981 = vmatpush1.msra.mxu0 %v946
  %982 = vmatprep.subr.mxu0 0.0
  %983 = vmatpush2.msra.mxu0 0.0
  %984 = vmatprep.subr.mxu0 0.0
  %985 = vmatpush2.msra.mxu0 0.0
  %986 = vmatprep.subr.mxu0 0.0
  %987 = vmatpush2.msra.mxu0 0.0
  %988 = vmatprep.subr.mxu0 0.0
  %989 = vmatpush2.msra.mxu0 0.0
  %990 = vmatprep.subr.mxu0 0.0
  %991 = vmatpush2.msra.mxu0 0.0
  %992 = vmatprep.subr.mxu0 0.0
  %993 = vmatpush2.msra.mxu0 0.0
  %994 = vmatprep.subr.mxu0 0.0
  %995 = vmatpush2.msra.mxu0 0.0
  %996 = vmatprep.subr.mxu0 0.0
  %997 = vmatpush2.msra.mxu0 0.0
  %998 = vmatprep.subr.mxu0 0.0
  %999 = vmatpush2.msra.mxu0 0.0
  %1000 = vmatprep.subr.mxu0 0.0
  %1001 = vmatpush2.msra.mxu0 0.0
  %1002 = vmatprep.subr.mxu0 0.0
  %1003 = vmatpush2.msra.mxu0 0.0
  %1004 = vmatprep.subr.mxu0 0.0
  %1005 = vmatpush2.msra.mxu0 0.0
  %1006 = vmatprep.subr.mxu0 0.0
  %1007 = vmatpush2.msra.mxu0 0.0
  %1008 = vmatprep.subr.mxu0 0.0
  %1009 = vmatpush2.msra.mxu0 0.0
  %1010 = vmatprep.subr.mxu0 0.0
  %1011 = vmatpush2.msra.mxu0 0.0
  %1012 = vmatprep.subr.mxu0 0.0
  %1013 = vmatpush2.msra.mxu0 0.0
  %1014 = vmatprep.mubr.f32.mxu0 0.0
  %1015 = vmatmul.mubr.f32.gmra.mxu0 %v929
  %v1016 = vpop.f32.mrf.mxu0
  %v1017 = vadd.f32 %v919, %v1016
  %v1018 = vpop.f32.mrf.mxu0
  %v1019 = vadd.f32 %v923, %v1018
  %1020 = vmatprep.mubr.f32.mxu0 0.0
  %1021 = vmatmul.mubr.f32.gmra.mxu0 %v931
  %v1022 = vpop.f32.mrf.mxu0
  %v1023 = vadd.f32 %v919, %v1022
  %v1024 = vpop.f32.mrf.mxu0
  %v1025 = vadd.f32 %v923, %v1024
  %1026 = vmatprep.mubr.f32.mxu0 0.0
  %1027 = vmatmul.mubr.f32.gmra.mxu0 %v933
  %v1028 = vpop.f32.mrf.mxu0
  %v1029 = vadd.f32 %v919, %v1028
  %v1030 = vpop.f32.mrf.mxu0
  %v1031 = vadd.f32 %v923, %v1030
  %1032 = vmatprep.mubr.f32.mxu0 0.0
  %1033 = vmatmul.mubr.f32.gmra.mxu0 %v935
  %v1034 = vpop.f32.mrf.mxu0
  %v1035 = vadd.f32 %v919, %v1034
  %v1036 = vpop.f32.mrf.mxu0
  %v1037 = vadd.f32 %v923, %v1036
  %1038 = vmatprep.mubr.f32.mxu0 0.0
  %1039 = vmatmul.mubr.f32.gmra.mxu0 %v937
  %v1040 = vpop.f32.mrf.mxu0
  %v1041 = vadd.f32 %v919, %v1040
  %v1042 = vpop.f32.mrf.mxu0
  %v1043 = vadd.f32 %v923, %v1042
  %1044 = vmatprep.mubr.f32.mxu0 0.0
  %1045 = vmatmul.mubr.f32.gmra.mxu0 %v939
  %v1046 = vpop.f32.mrf.mxu0
  %v1047 = vadd.f32 %v919, %v1046
  %v1048 = vpop.f32.mrf.mxu0
  %v1049 = vadd.f32 %v923, %v1048
  %1050 = vmatprep.mubr.f32.mxu0 0.0
  %1051 = vmatmul.mubr.f32.gmra.mxu0 %v941
  %v1052 = vpop.f32.mrf.mxu0
  %v1053 = vadd.f32 %v919, %v1052
  %v1054 = vpop.f32.mrf.mxu0
  %v1055 = vadd.f32 %v923, %v1054
  %1056 = vmatprep.mubr.f32.mxu0 0.0
  %1057 = vmatmul.mubr.f32.gmra.mxu0 %v943
  %v1058 = vpop.f32.mrf.mxu0
  %v1059 = vadd.f32 %v919, %v1058
  %v1060 = vpop.f32.mrf.mxu0
  %v1061 = vadd.f32 %v923, %v1060
  %1062 = vdwg.mxu0
  %v1063 = vand.u32 2147483647, %v1017
  %vm1064 = vcmp.le.f32.partialorder %v1063, 0.7853982
  %vm1065 = vcmp.lt.s32.totalorder %v1017, 0
  %v1066 = vand.u32 %v1017, 2139095040
  %v1067 = vshrl.u32 %v1066, 23
  %v1068 = vsub.s32 %v1067, 127
  %v1069 = vand.u32 2147483647, %v1017
  %v1070 = vand.u32 %v1069, 8388607
  %v1071 = vor.u32 %v1070, 8388608
  %v1072 = vsub.s32 0, %v1071
  %v1073 = vadd.s32 %v1068, 1
  %vm1074 = vcmp.gt.s32.totalorder %v1073, 0
  %v1075 = vsel %vm1074, %v1073, 0
  %v1076 = vshrl.u32 %v1075, 5
  %v1077 = vand.u32 %v1075, 31
  %v1078 = vsub.s32 32, %v1077
  %v1079 = vshrl.u32 683565275, %v1078
  %v1080 = vshll.u32 683565275, %v1077
  %v1081 = vshrl.u32 2475754826, %v1078
  %v1082 = vor.u32 %v1080, %v1081
  %v1083 = vshll.u32 2475754826, %v1077
  %v1084 = vshrl.u32 2131351028, %v1078
  %v1085 = vor.u32 %v1083, %v1084
  %v1086 = vshll.u32 2131351028, %v1077
  %v1087 = vshrl.u32 2102212464, %v1078
  %v1088 = vor.u32 %v1086, %v1087
  %v1089 = vshll.u32 2102212464, %v1077
  %v1090 = vshrl.u32 920167782, %v1078
  %v1091 = vor.u32 %v1089, %v1090
  %v1092 = vshll.u32 920167782, %v1077
  %v1093 = vshrl.u32 1326507024, %v1078
  %v1094 = vor.u32 %v1092, %v1093
  %vm1095 = vcmp.lt.s32.totalorder %v1076, 1
  %vm1096 = vcmp.lt.s32.totalorder %v1076, 2
  %vm1097 = vcmp.lt.s32.totalorder %v1076, 3
  %vm1098 = vcmp.lt.s32.totalorder %v1076, 4
  %v1099 = vsel %vm1095, %v1079, %v1082
  %v1100 = vsel %vm1098, %v1088, 2102212464
  %v1101 = vsel %vm1097, %v1085, %v1100
  %v1102 = vsel %vm1096, %v1099, %v1101
  %v1103 = vsel %vm1095, %v1082, %v1085
  %v1104 = vsel %vm1098, %v1091, 920167782
  %v1105 = vsel %vm1097, %v1088, %v1104
  %v1106 = vsel %vm1096, %v1103, %v1105
  %v1107 = vsel %vm1095, %v1085, %v1088
  %v1108 = vsel %vm1098, %v1094, 1326507024
  %v1109 = vsel %vm1097, %v1091, %v1108
  %v1110 = vsel %vm1096, %v1107, %v1109
  %v1111 = vshll.u32 %v1071, 8
  %v1112 = vmul.u32.u64.compose %v1111, %v1110
  %v1113 = vextract.low.u32 %v1112
  %v1114 = vextract.high.u32 %v1112
  %v1115 = vmul.u32.u64.compose %v1111, %v1106
  %v1116 = vextract.low.u32 %v1115
  %v1117 = vextract.high.u32 %v1115
  %v1118 = vmul.u32 %v1111, %v1102
  %v1119 = vadd.s32 %v1114, %v1116
  %vm1120 = vc.u32 %v1114, %v1116
  %v1121 = vadd.s32 %v1117, 1
  %v1122 = vsel %vm1120, %v1121, %v1117
  %v1123 = vadd.s32 %v1118, %v1122
  %v1124 = vadd.s32 %v1123, 536870912
  %v1125 = vshrl.u32 %v1124, 30
  %v1126 = vshll.u32 %v1125, 30
  %v1127 = vsub.s32 %v1123, %v1126
  %vm1128 = vcmp.lt.s32.totalorder %v1127, 0
  %v1129 = vsub.s32 0, %v1127
  %v1130 = vsel %vm1128, %v1129, %v1127
  %v1131 = vclz %v1130
  %v1132 = vsub.s32 %v1131, 2
  %vm1133 = vcmp.gt.s32.totalorder 0, %v1132
  %v1134 = vsel %vm1133, 0, %v1132
  %v1135 = vsub.s32 32, %v1134
  %v1136 = vshll.u32 %v1127, %v1134
  %v1137 = vshrl.u32 %v1119, %v1135
  %v1138 = vor.u32 %v1136, %v1137
  %v1139 = vsub.s32 4294967266, %v1134
  %v1140 = vadd.s32 %v1139, 127
  %v1141 = vshll.u32 %v1140, 23
  %v1142 = vor.u32 4788187, %v1141
  %v1143 = vand.u32 2147483647, %v1142
  %v1145 = vcvt.s32.f32 %v1138
  %v1146 = vmul.f32 %v1145, %v1143
  %v1147 = vxor.u32 %v1146, 2147483648
  %v1148 = vsel %vm1065, %v1147, %v1146
  %v1149 = vsub.s32 4, %v1125
  %v1150 = vsel %vm1065, %v1149, %v1125
  %v1151 = vsel %vm1064, %v1017, %v1148
  %v1152 = vsel %vm1064, 0, %v1150
  %v1153 = vcosq.f32.pop %v1151
  %v1154 = vsinq.f32.pop %v1151
  %vm1155 = vweird.f32 %v1017
  %v1156 = vadd.s32 %v1152, 3
  %v1157 = vand.u32 %v1156, 3
  %vm1158 = vcmp.lt.s32.totalorder %v1157, 2
  %vm1159 = vcmp.eq.s32.totalorder %v1157, 0
  %v1160 = vxor.u32 %v1154, 2147483648
  %v1161 = vsel %vm1159, %v1153, %v1160
  %vm1162 = vcmp.eq.s32.totalorder %v1157, 2
  %v1163 = vxor.u32 %v1153, 2147483648
  %v1164 = vsel %vm1162, %v1163, %v1154
  %v1165 = vsel %vm1158, %v1161, %v1164
  %v1166 = vsel %vm1155, nan, %v1165
  %v1167 = vand.u32 2147483647, %v1019
  %vm1168 = vcmp.le.f32.partialorder %v1167, 0.7853982
  %vm1169 = vcmp.lt.s32.totalorder %v1019, 0
  %v1170 = vand.u32 %v1019, 2139095040
  %v1171 = vshrl.u32 %v1170, 23
  %v1172 = vsub.s32 %v1171, 127
  %v1173 = vand.u32 2147483647, %v1019
  %v1174 = vand.u32 %v1173, 8388607
  %v1175 = vor.u32 %v1174, 8388608
  %v1176 = vsub.s32 0, %v1175
  %v1177 = vadd.s32 %v1172, 1
  %vm1178 = vcmp.gt.s32.totalorder %v1177, 0
  %v1179 = vsel %vm1178, %v1177, 0
  %v1180 = vshrl.u32 %v1179, 5
  %v1181 = vand.u32 %v1179, 31
  %v1182 = vsub.s32 32, %v1181
  %v1183 = vshrl.u32 683565275, %v1182
  %v1184 = vshll.u32 683565275, %v1181
  %v1185 = vshrl.u32 2475754826, %v1182
  %v1186 = vor.u32 %v1184, %v1185
  %v1187 = vshll.u32 2475754826, %v1181
  %v1188 = vshrl.u32 2131351028, %v1182
  %v1189 = vor.u32 %v1187, %v1188
  %v1190 = vshll.u32 2131351028, %v1181
  %v1191 = vshrl.u32 2102212464, %v1182
  %v1192 = vor.u32 %v1190, %v1191
  %v1193 = vshll.u32 2102212464, %v1181
  %v1194 = vshrl.u32 920167782, %v1182
  %v1195 = vor.u32 %v1193, %v1194
  %v1196 = vshll.u32 920167782, %v1181
  %v1197 = vshrl.u32 1326507024, %v1182
  %v1198 = vor.u32 %v1196, %v1197
  %vm1199 = vcmp.lt.s32.totalorder %v1180, 1
  %vm1200 = vcmp.lt.s32.totalorder %v1180, 2
  %vm1201 = vcmp.lt.s32.totalorder %v1180, 3
  %vm1202 = vcmp.lt.s32.totalorder %v1180, 4
  %v1203 = vsel %vm1199, %v1183, %v1186
  %v1204 = vsel %vm1202, %v1192, 2102212464
  %v1205 = vsel %vm1201, %v1189, %v1204
  %v1206 = vsel %vm1200, %v1203, %v1205
  %v1207 = vsel %vm1199, %v1186, %v1189
  %v1208 = vsel %vm1202, %v1195, 920167782
  %v1209 = vsel %vm1201, %v1192, %v1208
  %v1210 = vsel %vm1200, %v1207, %v1209
  %v1211 = vsel %vm1199, %v1189, %v1192
  %v1212 = vsel %vm1202, %v1198, 1326507024
  %v1213 = vsel %vm1201, %v1195, %v1212
  %v1214 = vsel %vm1200, %v1211, %v1213
  %v1215 = vshll.u32 %v1175, 8
  %v1216 = vmul.u32.u64.compose %v1215, %v1214
  %v1217 = vextract.low.u32 %v1216
  %v1218 = vextract.high.u32 %v1216
  %v1219 = vmul.u32.u64.compose %v1215, %v1210
  %v1220 = vextract.low.u32 %v1219
  %v1221 = vextract.high.u32 %v1219
  %v1222 = vmul.u32 %v1215, %v1206
  %v1223 = vadd.s32 %v1218, %v1220
  %vm1224 = vc.u32 %v1218, %v1220
  %v1225 = vadd.s32 %v1221, 1
  %v1226 = vsel %vm1224, %v1225, %v1221
  %v1227 = vadd.s32 %v1222, %v1226
  %v1228 = vadd.s32 %v1227, 536870912
  %v1229 = vshrl.u32 %v1228, 30
  %v1230 = vshll.u32 %v1229, 30
  %v1231 = vsub.s32 %v1227, %v1230
  %vm1232 = vcmp.lt.s32.totalorder %v1231, 0
  %v1233 = vsub.s32 0, %v1231
  %v1234 = vsel %vm1232, %v1233, %v1231
  %v1235 = vclz %v1234
  %v1236 = vsub.s32 %v1235, 2
  %vm1237 = vcmp.gt.s32.totalorder 0, %v1236
  %v1238 = vsel %vm1237, 0, %v1236
  %v1239 = vsub.s32 32, %v1238
  %v1240 = vshll.u32 %v1231, %v1238
  %v1241 = vshrl.u32 %v1223, %v1239
  %v1242 = vor.u32 %v1240, %v1241
  %v1243 = vsub.s32 4294967266, %v1238
  %v1244 = vadd.s32 %v1243, 127
  %v1245 = vshll.u32 %v1244, 23
  %v1246 = vor.u32 4788187, %v1245
  %v1247 = vand.u32 2147483647, %v1246
  %v1249 = vcvt.s32.f32 %v1242
  %v1250 = vmul.f32 %v1249, %v1247
  %v1251 = vxor.u32 %v1250, 2147483648
  %v1252 = vsel %vm1169, %v1251, %v1250
  %v1253 = vsub.s32 4, %v1229
  %v1254 = vsel %vm1169, %v1253, %v1229
  %v1255 = vsel %vm1168, %v1019, %v1252
  %v1256 = vsel %vm1168, 0, %v1254
  %v1257 = vcosq.f32.pop %v1255
  %v1258 = vsinq.f32.pop %v1255
  %vm1259 = vweird.f32 %v1019
  %v1260 = vadd.s32 %v1256, 3
  %v1261 = vand.u32 %v1260, 3
  %vm1262 = vcmp.lt.s32.totalorder %v1261, 2
  %vm1263 = vcmp.eq.s32.totalorder %v1261, 0
  %v1264 = vxor.u32 %v1258, 2147483648
  %v1265 = vsel %vm1263, %v1257, %v1264
  %vm1266 = vcmp.eq.s32.totalorder %v1261, 2
  %v1267 = vxor.u32 %v1257, 2147483648
  %v1268 = vsel %vm1266, %v1267, %v1258
  %v1269 = vsel %vm1262, %v1265, %v1268
  %v1270 = vsel %vm1259, nan, %v1269
  %v1271 = vand.u32 2147483647, %v1023
  %vm1272 = vcmp.le.f32.partialorder %v1271, 0.7853982
  %vm1273 = vcmp.lt.s32.totalorder %v1023, 0
  %v1274 = vand.u32 %v1023, 2139095040
  %v1275 = vshrl.u32 %v1274, 23
  %v1276 = vsub.s32 %v1275, 127
  %v1277 = vand.u32 2147483647, %v1023
  %v1278 = vand.u32 %v1277, 8388607
  %v1279 = vor.u32 %v1278, 8388608
  %v1280 = vsub.s32 0, %v1279
  %v1281 = vadd.s32 %v1276, 1
  %vm1282 = vcmp.gt.s32.totalorder %v1281, 0
  %v1283 = vsel %vm1282, %v1281, 0
  %v1284 = vshrl.u32 %v1283, 5
  %v1285 = vand.u32 %v1283, 31
  %v1286 = vsub.s32 32, %v1285
  %v1287 = vshrl.u32 683565275, %v1286
  %v1288 = vshll.u32 683565275, %v1285
  %v1289 = vshrl.u32 2475754826, %v1286
  %v1290 = vor.u32 %v1288, %v1289
  %v1291 = vshll.u32 2475754826, %v1285
  %v1292 = vshrl.u32 2131351028, %v1286
  %v1293 = vor.u32 %v1291, %v1292
  %v1294 = vshll.u32 2131351028, %v1285
  %v1295 = vshrl.u32 2102212464, %v1286
  %v1296 = vor.u32 %v1294, %v1295
  %v1297 = vshll.u32 2102212464, %v1285
  %v1298 = vshrl.u32 920167782, %v1286
  %v1299 = vor.u32 %v1297, %v1298
  %v1300 = vshll.u32 920167782, %v1285
  %v1301 = vshrl.u32 1326507024, %v1286
  %v1302 = vor.u32 %v1300, %v1301
  %vm1303 = vcmp.lt.s32.totalorder %v1284, 1
  %vm1304 = vcmp.lt.s32.totalorder %v1284, 2
  %vm1305 = vcmp.lt.s32.totalorder %v1284, 3
  %vm1306 = vcmp.lt.s32.totalorder %v1284, 4
  %v1307 = vsel %vm1303, %v1287, %v1290
  %v1308 = vsel %vm1306, %v1296, 2102212464
  %v1309 = vsel %vm1305, %v1293, %v1308
  %v1310 = vsel %vm1304, %v1307, %v1309
  %v1311 = vsel %vm1303, %v1290, %v1293
  %v1312 = vsel %vm1306, %v1299, 920167782
  %v1313 = vsel %vm1305, %v1296, %v1312
  %v1314 = vsel %vm1304, %v1311, %v1313
  %v1315 = vsel %vm1303, %v1293, %v1296
  %v1316 = vsel %vm1306, %v1302, 1326507024
  %v1317 = vsel %vm1305, %v1299, %v1316
  %v1318 = vsel %vm1304, %v1315, %v1317
  %v1319 = vshll.u32 %v1279, 8
  %v1320 = vmul.u32.u64.compose %v1319, %v1318
  %v1321 = vextract.low.u32 %v1320
  %v1322 = vextract.high.u32 %v1320
  %v1323 = vmul.u32.u64.compose %v1319, %v1314
  %v1324 = vextract.low.u32 %v1323
  %v1325 = vextract.high.u32 %v1323
  %v1326 = vmul.u32 %v1319, %v1310
  %v1327 = vadd.s32 %v1322, %v1324
  %vm1328 = vc.u32 %v1322, %v1324
  %v1329 = vadd.s32 %v1325, 1
  %v1330 = vsel %vm1328, %v1329, %v1325
  %v1331 = vadd.s32 %v1326, %v1330
  %v1332 = vadd.s32 %v1331, 536870912
  %v1333 = vshrl.u32 %v1332, 30
  %v1334 = vshll.u32 %v1333, 30
  %v1335 = vsub.s32 %v1331, %v1334
  %vm1336 = vcmp.lt.s32.totalorder %v1335, 0
  %v1337 = vsub.s32 0, %v1335
  %v1338 = vsel %vm1336, %v1337, %v1335
  %v1339 = vclz %v1338
  %v1340 = vsub.s32 %v1339, 2
  %vm1341 = vcmp.gt.s32.totalorder 0, %v1340
  %v1342 = vsel %vm1341, 0, %v1340
  %v1343 = vsub.s32 32, %v1342
  %v1344 = vshll.u32 %v1335, %v1342
  %v1345 = vshrl.u32 %v1327, %v1343
  %v1346 = vor.u32 %v1344, %v1345
  %v1347 = vsub.s32 4294967266, %v1342
  %v1348 = vadd.s32 %v1347, 127
  %v1349 = vshll.u32 %v1348, 23
  %v1350 = vor.u32 4788187, %v1349
  %v1351 = vand.u32 2147483647, %v1350
  %v1353 = vcvt.s32.f32 %v1346
  %v1354 = vmul.f32 %v1353, %v1351
  %v1355 = vxor.u32 %v1354, 2147483648
  %v1356 = vsel %vm1273, %v1355, %v1354
  %v1357 = vsub.s32 4, %v1333
  %v1358 = vsel %vm1273, %v1357, %v1333
  %v1359 = vsel %vm1272, %v1023, %v1356
  %v1360 = vsel %vm1272, 0, %v1358
  %v1361 = vcosq.f32.pop %v1359
  %v1362 = vsinq.f32.pop %v1359
  %vm1363 = vweird.f32 %v1023
  %v1364 = vadd.s32 %v1360, 3
  %v1365 = vand.u32 %v1364, 3
  %vm1366 = vcmp.lt.s32.totalorder %v1365, 2
  %vm1367 = vcmp.eq.s32.totalorder %v1365, 0
  %v1368 = vxor.u32 %v1362, 2147483648
  %v1369 = vsel %vm1367, %v1361, %v1368
  %vm1370 = vcmp.eq.s32.totalorder %v1365, 2
  %v1371 = vxor.u32 %v1361, 2147483648
  %v1372 = vsel %vm1370, %v1371, %v1362
  %v1373 = vsel %vm1366, %v1369, %v1372
  %v1374 = vsel %vm1363, nan, %v1373
  %v1375 = vand.u32 2147483647, %v1025
  %vm1376 = vcmp.le.f32.partialorder %v1375, 0.7853982
  %vm1377 = vcmp.lt.s32.totalorder %v1025, 0
  %v1378 = vand.u32 %v1025, 2139095040
  %v1379 = vshrl.u32 %v1378, 23
  %v1380 = vsub.s32 %v1379, 127
  %v1381 = vand.u32 2147483647, %v1025
  %v1382 = vand.u32 %v1381, 8388607
  %v1383 = vor.u32 %v1382, 8388608
  %v1384 = vsub.s32 0, %v1383
  %v1385 = vadd.s32 %v1380, 1
  %vm1386 = vcmp.gt.s32.totalorder %v1385, 0
  %v1387 = vsel %vm1386, %v1385, 0
  %v1388 = vshrl.u32 %v1387, 5
  %v1389 = vand.u32 %v1387, 31
  %v1390 = vsub.s32 32, %v1389
  %v1391 = vshrl.u32 683565275, %v1390
  %v1392 = vshll.u32 683565275, %v1389
  %v1393 = vshrl.u32 2475754826, %v1390
  %v1394 = vor.u32 %v1392, %v1393
  %v1395 = vshll.u32 2475754826, %v1389
  %v1396 = vshrl.u32 2131351028, %v1390
  %v1397 = vor.u32 %v1395, %v1396
  %v1398 = vshll.u32 2131351028, %v1389
  %v1399 = vshrl.u32 2102212464, %v1390
  %v1400 = vor.u32 %v1398, %v1399
  %v1401 = vshll.u32 2102212464, %v1389
  %v1402 = vshrl.u32 920167782, %v1390
  %v1403 = vor.u32 %v1401, %v1402
  %v1404 = vshll.u32 920167782, %v1389
  %v1405 = vshrl.u32 1326507024, %v1390
  %v1406 = vor.u32 %v1404, %v1405
  %vm1407 = vcmp.lt.s32.totalorder %v1388, 1
  %vm1408 = vcmp.lt.s32.totalorder %v1388, 2
  %vm1409 = vcmp.lt.s32.totalorder %v1388, 3
  %vm1410 = vcmp.lt.s32.totalorder %v1388, 4
  %v1411 = vsel %vm1407, %v1391, %v1394
  %v1412 = vsel %vm1410, %v1400, 2102212464
  %v1413 = vsel %vm1409, %v1397, %v1412
  %v1414 = vsel %vm1408, %v1411, %v1413
  %v1415 = vsel %vm1407, %v1394, %v1397
  %v1416 = vsel %vm1410, %v1403, 920167782
  %v1417 = vsel %vm1409, %v1400, %v1416
  %v1418 = vsel %vm1408, %v1415, %v1417
  %v1419 = vsel %vm1407, %v1397, %v1400
  %v1420 = vsel %vm1410, %v1406, 1326507024
  %v1421 = vsel %vm1409, %v1403, %v1420
  %v1422 = vsel %vm1408, %v1419, %v1421
  %v1423 = vshll.u32 %v1383, 8
  %v1424 = vmul.u32.u64.compose %v1423, %v1422
  %v1425 = vextract.low.u32 %v1424
  %v1426 = vextract.high.u32 %v1424
  %v1427 = vmul.u32.u64.compose %v1423, %v1418
  %v1428 = vextract.low.u32 %v1427
  %v1429 = vextract.high.u32 %v1427
  %v1430 = vmul.u32 %v1423, %v1414
  %v1431 = vadd.s32 %v1426, %v1428
  %vm1432 = vc.u32 %v1426, %v1428
  %v1433 = vadd.s32 %v1429, 1
  %v1434 = vsel %vm1432, %v1433, %v1429
  %v1435 = vadd.s32 %v1430, %v1434
  %v1436 = vadd.s32 %v1435, 536870912
  %v1437 = vshrl.u32 %v1436, 30
  %v1438 = vshll.u32 %v1437, 30
  %v1439 = vsub.s32 %v1435, %v1438
  %vm1440 = vcmp.lt.s32.totalorder %v1439, 0
  %v1441 = vsub.s32 0, %v1439
  %v1442 = vsel %vm1440, %v1441, %v1439
  %v1443 = vclz %v1442
  %v1444 = vsub.s32 %v1443, 2
  %vm1445 = vcmp.gt.s32.totalorder 0, %v1444
  %v1446 = vsel %vm1445, 0, %v1444
  %v1447 = vsub.s32 32, %v1446
  %v1448 = vshll.u32 %v1439, %v1446
  %v1449 = vshrl.u32 %v1431, %v1447
  %v1450 = vor.u32 %v1448, %v1449
  %v1451 = vsub.s32 4294967266, %v1446
  %v1452 = vadd.s32 %v1451, 127
  %v1453 = vshll.u32 %v1452, 23
  %v1454 = vor.u32 4788187, %v1453
  %v1455 = vand.u32 2147483647, %v1454
  %v1457 = vcvt.s32.f32 %v1450
  %v1458 = vmul.f32 %v1457, %v1455
  %v1459 = vxor.u32 %v1458, 2147483648
  %v1460 = vsel %vm1377, %v1459, %v1458
  %v1461 = vsub.s32 4, %v1437
  %v1462 = vsel %vm1377, %v1461, %v1437
  %v1463 = vsel %vm1376, %v1025, %v1460
  %v1464 = vsel %vm1376, 0, %v1462
  %v1465 = vcosq.f32.pop %v1463
  %v1466 = vsinq.f32.pop %v1463
  %vm1467 = vweird.f32 %v1025
  %v1468 = vadd.s32 %v1464, 3
  %v1469 = vand.u32 %v1468, 3
  %vm1470 = vcmp.lt.s32.totalorder %v1469, 2
  %vm1471 = vcmp.eq.s32.totalorder %v1469, 0
  %v1472 = vxor.u32 %v1466, 2147483648
  %v1473 = vsel %vm1471, %v1465, %v1472
  %vm1474 = vcmp.eq.s32.totalorder %v1469, 2
  %v1475 = vxor.u32 %v1465, 2147483648
  %v1476 = vsel %vm1474, %v1475, %v1466
  %v1477 = vsel %vm1470, %v1473, %v1476
  %v1478 = vsel %vm1467, nan, %v1477
  %v1479 = vand.u32 2147483647, %v1029
  %vm1480 = vcmp.le.f32.partialorder %v1479, 0.7853982
  %vm1481 = vcmp.lt.s32.totalorder %v1029, 0
  %v1482 = vand.u32 %v1029, 2139095040
  %v1483 = vshrl.u32 %v1482, 23
  %v1484 = vsub.s32 %v1483, 127
  %v1485 = vand.u32 2147483647, %v1029
  %v1486 = vand.u32 %v1485, 8388607
  %v1487 = vor.u32 %v1486, 8388608
  %v1488 = vsub.s32 0, %v1487
  %v1489 = vadd.s32 %v1484, 1
  %vm1490 = vcmp.gt.s32.totalorder %v1489, 0
  %v1491 = vsel %vm1490, %v1489, 0
  %v1492 = vshrl.u32 %v1491, 5
  %v1493 = vand.u32 %v1491, 31
  %v1494 = vsub.s32 32, %v1493
  %v1495 = vshrl.u32 683565275, %v1494
  %v1496 = vshll.u32 683565275, %v1493
  %v1497 = vshrl.u32 2475754826, %v1494
  %v1498 = vor.u32 %v1496, %v1497
  %v1499 = vshll.u32 2475754826, %v1493
  %v1500 = vshrl.u32 2131351028, %v1494
  %v1501 = vor.u32 %v1499, %v1500
  %v1502 = vshll.u32 2131351028, %v1493
  %v1503 = vshrl.u32 2102212464, %v1494
  %v1504 = vor.u32 %v1502, %v1503
  %v1505 = vshll.u32 2102212464, %v1493
  %v1506 = vshrl.u32 920167782, %v1494
  %v1507 = vor.u32 %v1505, %v1506
  %v1508 = vshll.u32 920167782, %v1493
  %v1509 = vshrl.u32 1326507024, %v1494
  %v1510 = vor.u32 %v1508, %v1509
  %vm1511 = vcmp.lt.s32.totalorder %v1492, 1
  %vm1512 = vcmp.lt.s32.totalorder %v1492, 2
  %vm1513 = vcmp.lt.s32.totalorder %v1492, 3
  %vm1514 = vcmp.lt.s32.totalorder %v1492, 4
  %v1515 = vsel %vm1511, %v1495, %v1498
  %v1516 = vsel %vm1514, %v1504, 2102212464
  %v1517 = vsel %vm1513, %v1501, %v1516
  %v1518 = vsel %vm1512, %v1515, %v1517
  %v1519 = vsel %vm1511, %v1498, %v1501
  %v1520 = vsel %vm1514, %v1507, 920167782
  %v1521 = vsel %vm1513, %v1504, %v1520
  %v1522 = vsel %vm1512, %v1519, %v1521
  %v1523 = vsel %vm1511, %v1501, %v1504
  %v1524 = vsel %vm1514, %v1510, 1326507024
  %v1525 = vsel %vm1513, %v1507, %v1524
  %v1526 = vsel %vm1512, %v1523, %v1525
  %v1527 = vshll.u32 %v1487, 8
  %v1528 = vmul.u32.u64.compose %v1527, %v1526
  %v1529 = vextract.low.u32 %v1528
  %v1530 = vextract.high.u32 %v1528
  %v1531 = vmul.u32.u64.compose %v1527, %v1522
  %v1532 = vextract.low.u32 %v1531
  %v1533 = vextract.high.u32 %v1531
  %v1534 = vmul.u32 %v1527, %v1518
  %v1535 = vadd.s32 %v1530, %v1532
  %vm1536 = vc.u32 %v1530, %v1532
  %v1537 = vadd.s32 %v1533, 1
  %v1538 = vsel %vm1536, %v1537, %v1533
  %v1539 = vadd.s32 %v1534, %v1538
  %v1540 = vadd.s32 %v1539, 536870912
  %v1541 = vshrl.u32 %v1540, 30
  %v1542 = vshll.u32 %v1541, 30
  %v1543 = vsub.s32 %v1539, %v1542
  %vm1544 = vcmp.lt.s32.totalorder %v1543, 0
  %v1545 = vsub.s32 0, %v1543
  %v1546 = vsel %vm1544, %v1545, %v1543
  %v1547 = vclz %v1546
  %v1548 = vsub.s32 %v1547, 2
  %vm1549 = vcmp.gt.s32.totalorder 0, %v1548
  %v1550 = vsel %vm1549, 0, %v1548
  %v1551 = vsub.s32 32, %v1550
  %v1552 = vshll.u32 %v1543, %v1550
  %v1553 = vshrl.u32 %v1535, %v1551
  %v1554 = vor.u32 %v1552, %v1553
  %v1555 = vsub.s32 4294967266, %v1550
  %v1556 = vadd.s32 %v1555, 127
  %v1557 = vshll.u32 %v1556, 23
  %v1558 = vor.u32 4788187, %v1557
  %v1559 = vand.u32 2147483647, %v1558
  %v1561 = vcvt.s32.f32 %v1554
  %v1562 = vmul.f32 %v1561, %v1559
  %v1563 = vxor.u32 %v1562, 2147483648
  %v1564 = vsel %vm1481, %v1563, %v1562
  %v1565 = vsub.s32 4, %v1541
  %v1566 = vsel %vm1481, %v1565, %v1541
  %v1567 = vsel %vm1480, %v1029, %v1564
  %v1568 = vsel %vm1480, 0, %v1566
  %v1569 = vcosq.f32.pop %v1567
  %v1570 = vsinq.f32.pop %v1567
  %vm1571 = vweird.f32 %v1029
  %v1572 = vadd.s32 %v1568, 3
  %v1573 = vand.u32 %v1572, 3
  %vm1574 = vcmp.lt.s32.totalorder %v1573, 2
  %vm1575 = vcmp.eq.s32.totalorder %v1573, 0
  %v1576 = vxor.u32 %v1570, 2147483648
  %v1577 = vsel %vm1575, %v1569, %v1576
  %vm1578 = vcmp.eq.s32.totalorder %v1573, 2
  %v1579 = vxor.u32 %v1569, 2147483648
  %v1580 = vsel %vm1578, %v1579, %v1570
  %v1581 = vsel %vm1574, %v1577, %v1580
  %v1582 = vsel %vm1571, nan, %v1581
  %v1583 = vand.u32 2147483647, %v1031
  %vm1584 = vcmp.le.f32.partialorder %v1583, 0.7853982
  %vm1585 = vcmp.lt.s32.totalorder %v1031, 0
  %v1586 = vand.u32 %v1031, 2139095040
  %v1587 = vshrl.u32 %v1586, 23
  %v1588 = vsub.s32 %v1587, 127
  %v1589 = vand.u32 2147483647, %v1031
  %v1590 = vand.u32 %v1589, 8388607
  %v1591 = vor.u32 %v1590, 8388608
  %v1592 = vsub.s32 0, %v1591
  %v1593 = vadd.s32 %v1588, 1
  %vm1594 = vcmp.gt.s32.totalorder %v1593, 0
  %v1595 = vsel %vm1594, %v1593, 0
  %v1596 = vshrl.u32 %v1595, 5
  %v1597 = vand.u32 %v1595, 31
  %v1598 = vsub.s32 32, %v1597
  %v1599 = vshrl.u32 683565275, %v1598
  %v1600 = vshll.u32 683565275, %v1597
  %v1601 = vshrl.u32 2475754826, %v1598
  %v1602 = vor.u32 %v1600, %v1601
  %v1603 = vshll.u32 2475754826, %v1597
  %v1604 = vshrl.u32 2131351028, %v1598
  %v1605 = vor.u32 %v1603, %v1604
  %v1606 = vshll.u32 2131351028, %v1597
  %v1607 = vshrl.u32 2102212464, %v1598
  %v1608 = vor.u32 %v1606, %v1607
  %v1609 = vshll.u32 2102212464, %v1597
  %v1610 = vshrl.u32 920167782, %v1598
  %v1611 = vor.u32 %v1609, %v1610
  %v1612 = vshll.u32 920167782, %v1597
  %v1613 = vshrl.u32 1326507024, %v1598
  %v1614 = vor.u32 %v1612, %v1613
  %vm1615 = vcmp.lt.s32.totalorder %v1596, 1
  %vm1616 = vcmp.lt.s32.totalorder %v1596, 2
  %vm1617 = vcmp.lt.s32.totalorder %v1596, 3
  %vm1618 = vcmp.lt.s32.totalorder %v1596, 4
  %v1619 = vsel %vm1615, %v1599, %v1602
  %v1620 = vsel %vm1618, %v1608, 2102212464
  %v1621 = vsel %vm1617, %v1605, %v1620
  %v1622 = vsel %vm1616, %v1619, %v1621
  %v1623 = vsel %vm1615, %v1602, %v1605
  %v1624 = vsel %vm1618, %v1611, 920167782
  %v1625 = vsel %vm1617, %v1608, %v1624
  %v1626 = vsel %vm1616, %v1623, %v1625
  %v1627 = vsel %vm1615, %v1605, %v1608
  %v1628 = vsel %vm1618, %v1614, 1326507024
  %v1629 = vsel %vm1617, %v1611, %v1628
  %v1630 = vsel %vm1616, %v1627, %v1629
  %v1631 = vshll.u32 %v1591, 8
  %v1632 = vmul.u32.u64.compose %v1631, %v1630
  %v1633 = vextract.low.u32 %v1632
  %v1634 = vextract.high.u32 %v1632
  %v1635 = vmul.u32.u64.compose %v1631, %v1626
  %v1636 = vextract.low.u32 %v1635
  %v1637 = vextract.high.u32 %v1635
  %v1638 = vmul.u32 %v1631, %v1622
  %v1639 = vadd.s32 %v1634, %v1636
  %vm1640 = vc.u32 %v1634, %v1636
  %v1641 = vadd.s32 %v1637, 1
  %v1642 = vsel %vm1640, %v1641, %v1637
  %v1643 = vadd.s32 %v1638, %v1642
  %v1644 = vadd.s32 %v1643, 536870912
  %v1645 = vshrl.u32 %v1644, 30
  %v1646 = vshll.u32 %v1645, 30
  %v1647 = vsub.s32 %v1643, %v1646
  %vm1648 = vcmp.lt.s32.totalorder %v1647, 0
  %v1649 = vsub.s32 0, %v1647
  %v1650 = vsel %vm1648, %v1649, %v1647
  %v1651 = vclz %v1650
  %v1652 = vsub.s32 %v1651, 2
  %vm1653 = vcmp.gt.s32.totalorder 0, %v1652
  %v1654 = vsel %vm1653, 0, %v1652
  %v1655 = vsub.s32 32, %v1654
  %v1656 = vshll.u32 %v1647, %v1654
  %v1657 = vshrl.u32 %v1639, %v1655
  %v1658 = vor.u32 %v1656, %v1657
  %v1659 = vsub.s32 4294967266, %v1654
  %v1660 = vadd.s32 %v1659, 127
  %v1661 = vshll.u32 %v1660, 23
  %v1662 = vor.u32 4788187, %v1661
  %v1663 = vand.u32 2147483647, %v1662
  %v1665 = vcvt.s32.f32 %v1658
  %v1666 = vmul.f32 %v1665, %v1663
  %v1667 = vxor.u32 %v1666, 2147483648
  %v1668 = vsel %vm1585, %v1667, %v1666
  %v1669 = vsub.s32 4, %v1645
  %v1670 = vsel %vm1585, %v1669, %v1645
  %v1671 = vsel %vm1584, %v1031, %v1668
  %v1672 = vsel %vm1584, 0, %v1670
  %v1673 = vcosq.f32.pop %v1671
  %v1674 = vsinq.f32.pop %v1671
  %vm1675 = vweird.f32 %v1031
  %v1676 = vadd.s32 %v1672, 3
  %v1677 = vand.u32 %v1676, 3
  %vm1678 = vcmp.lt.s32.totalorder %v1677, 2
  %vm1679 = vcmp.eq.s32.totalorder %v1677, 0
  %v1680 = vxor.u32 %v1674, 2147483648
  %v1681 = vsel %vm1679, %v1673, %v1680
  %vm1682 = vcmp.eq.s32.totalorder %v1677, 2
  %v1683 = vxor.u32 %v1673, 2147483648
  %v1684 = vsel %vm1682, %v1683, %v1674
  %v1685 = vsel %vm1678, %v1681, %v1684
  %v1686 = vsel %vm1675, nan, %v1685
  %v1687 = vand.u32 2147483647, %v1035
  %vm1688 = vcmp.le.f32.partialorder %v1687, 0.7853982
  %vm1689 = vcmp.lt.s32.totalorder %v1035, 0
  %v1690 = vand.u32 %v1035, 2139095040
  %v1691 = vshrl.u32 %v1690, 23
  %v1692 = vsub.s32 %v1691, 127
  %v1693 = vand.u32 2147483647, %v1035
  %v1694 = vand.u32 %v1693, 8388607
  %v1695 = vor.u32 %v1694, 8388608
  %v1696 = vsub.s32 0, %v1695
  %v1697 = vadd.s32 %v1692, 1
  %vm1698 = vcmp.gt.s32.totalorder %v1697, 0
  %v1699 = vsel %vm1698, %v1697, 0
  %v1700 = vshrl.u32 %v1699, 5
  %v1701 = vand.u32 %v1699, 31
  %v1702 = vsub.s32 32, %v1701
  %v1703 = vshrl.u32 683565275, %v1702
  %v1704 = vshll.u32 683565275, %v1701
  %v1705 = vshrl.u32 2475754826, %v1702
  %v1706 = vor.u32 %v1704, %v1705
  %v1707 = vshll.u32 2475754826, %v1701
  %v1708 = vshrl.u32 2131351028, %v1702
  %v1709 = vor.u32 %v1707, %v1708
  %v1710 = vshll.u32 2131351028, %v1701
  %v1711 = vshrl.u32 2102212464, %v1702
  %v1712 = vor.u32 %v1710, %v1711
  %v1713 = vshll.u32 2102212464, %v1701
  %v1714 = vshrl.u32 920167782, %v1702
  %v1715 = vor.u32 %v1713, %v1714
  %v1716 = vshll.u32 920167782, %v1701
  %v1717 = vshrl.u32 1326507024, %v1702
  %v1718 = vor.u32 %v1716, %v1717
  %vm1719 = vcmp.lt.s32.totalorder %v1700, 1
  %vm1720 = vcmp.lt.s32.totalorder %v1700, 2
  %vm1721 = vcmp.lt.s32.totalorder %v1700, 3
  %vm1722 = vcmp.lt.s32.totalorder %v1700, 4
  %v1723 = vsel %vm1719, %v1703, %v1706
  %v1724 = vsel %vm1722, %v1712, 2102212464
  %v1725 = vsel %vm1721, %v1709, %v1724
  %v1726 = vsel %vm1720, %v1723, %v1725
  %v1727 = vsel %vm1719, %v1706, %v1709
  %v1728 = vsel %vm1722, %v1715, 920167782
  %v1729 = vsel %vm1721, %v1712, %v1728
  %v1730 = vsel %vm1720, %v1727, %v1729
  %v1731 = vsel %vm1719, %v1709, %v1712
  %v1732 = vsel %vm1722, %v1718, 1326507024
  %v1733 = vsel %vm1721, %v1715, %v1732
  %v1734 = vsel %vm1720, %v1731, %v1733
  %v1735 = vshll.u32 %v1695, 8
  %v1736 = vmul.u32.u64.compose %v1735, %v1734
  %v1737 = vextract.low.u32 %v1736
  %v1738 = vextract.high.u32 %v1736
  %v1739 = vmul.u32.u64.compose %v1735, %v1730
  %v1740 = vextract.low.u32 %v1739
  %v1741 = vextract.high.u32 %v1739
  %v1742 = vmul.u32 %v1735, %v1726
  %v1743 = vadd.s32 %v1738, %v1740
  %vm1744 = vc.u32 %v1738, %v1740
  %v1745 = vadd.s32 %v1741, 1
  %v1746 = vsel %vm1744, %v1745, %v1741
  %v1747 = vadd.s32 %v1742, %v1746
  %v1748 = vadd.s32 %v1747, 536870912
  %v1749 = vshrl.u32 %v1748, 30
  %v1750 = vshll.u32 %v1749, 30
  %v1751 = vsub.s32 %v1747, %v1750
  %vm1752 = vcmp.lt.s32.totalorder %v1751, 0
  %v1753 = vsub.s32 0, %v1751
  %v1754 = vsel %vm1752, %v1753, %v1751
  %v1755 = vclz %v1754
  %v1756 = vsub.s32 %v1755, 2
  %vm1757 = vcmp.gt.s32.totalorder 0, %v1756
  %v1758 = vsel %vm1757, 0, %v1756
  %v1759 = vsub.s32 32, %v1758
  %v1760 = vshll.u32 %v1751, %v1758
  %v1761 = vshrl.u32 %v1743, %v1759
  %v1762 = vor.u32 %v1760, %v1761
  %v1763 = vsub.s32 4294967266, %v1758
  %v1764 = vadd.s32 %v1763, 127
  %v1765 = vshll.u32 %v1764, 23
  %v1766 = vor.u32 4788187, %v1765
  %v1767 = vand.u32 2147483647, %v1766
  %v1769 = vcvt.s32.f32 %v1762
  %v1770 = vmul.f32 %v1769, %v1767
  %v1771 = vxor.u32 %v1770, 2147483648
  %v1772 = vsel %vm1689, %v1771, %v1770
  %v1773 = vsub.s32 4, %v1749
  %v1774 = vsel %vm1689, %v1773, %v1749
  %v1775 = vsel %vm1688, %v1035, %v1772
  %v1776 = vsel %vm1688, 0, %v1774
  %v1777 = vcosq.f32.pop %v1775
  %v1778 = vsinq.f32.pop %v1775
  %vm1779 = vweird.f32 %v1035
  %v1780 = vadd.s32 %v1776, 3
  %v1781 = vand.u32 %v1780, 3
  %vm1782 = vcmp.lt.s32.totalorder %v1781, 2
  %vm1783 = vcmp.eq.s32.totalorder %v1781, 0
  %v1784 = vxor.u32 %v1778, 2147483648
  %v1785 = vsel %vm1783, %v1777, %v1784
  %vm1786 = vcmp.eq.s32.totalorder %v1781, 2
  %v1787 = vxor.u32 %v1777, 2147483648
  %v1788 = vsel %vm1786, %v1787, %v1778
  %v1789 = vsel %vm1782, %v1785, %v1788
  %v1790 = vsel %vm1779, nan, %v1789
  %v1791 = vand.u32 2147483647, %v1037
  %vm1792 = vcmp.le.f32.partialorder %v1791, 0.7853982
  %vm1793 = vcmp.lt.s32.totalorder %v1037, 0
  %v1794 = vand.u32 %v1037, 2139095040
  %v1795 = vshrl.u32 %v1794, 23
  %v1796 = vsub.s32 %v1795, 127
  %v1797 = vand.u32 2147483647, %v1037
  %v1798 = vand.u32 %v1797, 8388607
  %v1799 = vor.u32 %v1798, 8388608
  %v1800 = vsub.s32 0, %v1799
  %v1801 = vadd.s32 %v1796, 1
  %vm1802 = vcmp.gt.s32.totalorder %v1801, 0
  %v1803 = vsel %vm1802, %v1801, 0
  %v1804 = vshrl.u32 %v1803, 5
  %v1805 = vand.u32 %v1803, 31
  %v1806 = vsub.s32 32, %v1805
  %v1807 = vshrl.u32 683565275, %v1806
  %v1808 = vshll.u32 683565275, %v1805
  %v1809 = vshrl.u32 2475754826, %v1806
  %v1810 = vor.u32 %v1808, %v1809
  %v1811 = vshll.u32 2475754826, %v1805
  %v1812 = vshrl.u32 2131351028, %v1806
  %v1813 = vor.u32 %v1811, %v1812
  %v1814 = vshll.u32 2131351028, %v1805
  %v1815 = vshrl.u32 2102212464, %v1806
  %v1816 = vor.u32 %v1814, %v1815
  %v1817 = vshll.u32 2102212464, %v1805
  %v1818 = vshrl.u32 920167782, %v1806
  %v1819 = vor.u32 %v1817, %v1818
  %v1820 = vshll.u32 920167782, %v1805
  %v1821 = vshrl.u32 1326507024, %v1806
  %v1822 = vor.u32 %v1820, %v1821
  %vm1823 = vcmp.lt.s32.totalorder %v1804, 1
  %vm1824 = vcmp.lt.s32.totalorder %v1804, 2
  %vm1825 = vcmp.lt.s32.totalorder %v1804, 3
  %vm1826 = vcmp.lt.s32.totalorder %v1804, 4
  %v1827 = vsel %vm1823, %v1807, %v1810
  %v1828 = vsel %vm1826, %v1816, 2102212464
  %v1829 = vsel %vm1825, %v1813, %v1828
  %v1830 = vsel %vm1824, %v1827, %v1829
  %v1831 = vsel %vm1823, %v1810, %v1813
  %v1832 = vsel %vm1826, %v1819, 920167782
  %v1833 = vsel %vm1825, %v1816, %v1832
  %v1834 = vsel %vm1824, %v1831, %v1833
  %v1835 = vsel %vm1823, %v1813, %v1816
  %v1836 = vsel %vm1826, %v1822, 1326507024
  %v1837 = vsel %vm1825, %v1819, %v1836
  %v1838 = vsel %vm1824, %v1835, %v1837
  %v1839 = vshll.u32 %v1799, 8
  %v1840 = vmul.u32.u64.compose %v1839, %v1838
  %v1841 = vextract.low.u32 %v1840
  %v1842 = vextract.high.u32 %v1840
  %v1843 = vmul.u32.u64.compose %v1839, %v1834
  %v1844 = vextract.low.u32 %v1843
  %v1845 = vextract.high.u32 %v1843
  %v1846 = vmul.u32 %v1839, %v1830
  %v1847 = vadd.s32 %v1842, %v1844
  %vm1848 = vc.u32 %v1842, %v1844
  %v1849 = vadd.s32 %v1845, 1
  %v1850 = vsel %vm1848, %v1849, %v1845
  %v1851 = vadd.s32 %v1846, %v1850
  %v1852 = vadd.s32 %v1851, 536870912
  %v1853 = vshrl.u32 %v1852, 30
  %v1854 = vshll.u32 %v1853, 30
  %v1855 = vsub.s32 %v1851, %v1854
  %vm1856 = vcmp.lt.s32.totalorder %v1855, 0
  %v1857 = vsub.s32 0, %v1855
  %v1858 = vsel %vm1856, %v1857, %v1855
  %v1859 = vclz %v1858
  %v1860 = vsub.s32 %v1859, 2
  %vm1861 = vcmp.gt.s32.totalorder 0, %v1860
  %v1862 = vsel %vm1861, 0, %v1860
  %v1863 = vsub.s32 32, %v1862
  %v1864 = vshll.u32 %v1855, %v1862
  %v1865 = vshrl.u32 %v1847, %v1863
  %v1866 = vor.u32 %v1864, %v1865
  %v1867 = vsub.s32 4294967266, %v1862
  %v1868 = vadd.s32 %v1867, 127
  %v1869 = vshll.u32 %v1868, 23
  %v1870 = vor.u32 4788187, %v1869
  %v1871 = vand.u32 2147483647, %v1870
  %v1873 = vcvt.s32.f32 %v1866
  %v1874 = vmul.f32 %v1873, %v1871
  %v1875 = vxor.u32 %v1874, 2147483648
  %v1876 = vsel %vm1793, %v1875, %v1874
  %v1877 = vsub.s32 4, %v1853
  %v1878 = vsel %vm1793, %v1877, %v1853
  %v1879 = vsel %vm1792, %v1037, %v1876
  %v1880 = vsel %vm1792, 0, %v1878
  %v1881 = vcosq.f32.pop %v1879
  %v1882 = vsinq.f32.pop %v1879
  %vm1883 = vweird.f32 %v1037
  %v1884 = vadd.s32 %v1880, 3
  %v1885 = vand.u32 %v1884, 3
  %vm1886 = vcmp.lt.s32.totalorder %v1885, 2
  %vm1887 = vcmp.eq.s32.totalorder %v1885, 0
  %v1888 = vxor.u32 %v1882, 2147483648
  %v1889 = vsel %vm1887, %v1881, %v1888
  %vm1890 = vcmp.eq.s32.totalorder %v1885, 2
  %v1891 = vxor.u32 %v1881, 2147483648
  %v1892 = vsel %vm1890, %v1891, %v1882
  %v1893 = vsel %vm1886, %v1889, %v1892
  %v1894 = vsel %vm1883, nan, %v1893
  %v1895 = vand.u32 2147483647, %v1041
  %vm1896 = vcmp.le.f32.partialorder %v1895, 0.7853982
  %vm1897 = vcmp.lt.s32.totalorder %v1041, 0
  %v1898 = vand.u32 %v1041, 2139095040
  %v1899 = vshrl.u32 %v1898, 23
  %v1900 = vsub.s32 %v1899, 127
  %v1901 = vand.u32 2147483647, %v1041
  %v1902 = vand.u32 %v1901, 8388607
  %v1903 = vor.u32 %v1902, 8388608
  %v1904 = vsub.s32 0, %v1903
  %v1905 = vadd.s32 %v1900, 1
  %vm1906 = vcmp.gt.s32.totalorder %v1905, 0
  %v1907 = vsel %vm1906, %v1905, 0
  %v1908 = vshrl.u32 %v1907, 5
  %v1909 = vand.u32 %v1907, 31
  %v1910 = vsub.s32 32, %v1909
  %v1911 = vshrl.u32 683565275, %v1910
  %v1912 = vshll.u32 683565275, %v1909
  %v1913 = vshrl.u32 2475754826, %v1910
  %v1914 = vor.u32 %v1912, %v1913
  %v1915 = vshll.u32 2475754826, %v1909
  %v1916 = vshrl.u32 2131351028, %v1910
  %v1917 = vor.u32 %v1915, %v1916
  %v1918 = vshll.u32 2131351028, %v1909
  %v1919 = vshrl.u32 2102212464, %v1910
  %v1920 = vor.u32 %v1918, %v1919
  %v1921 = vshll.u32 2102212464, %v1909
  %v1922 = vshrl.u32 920167782, %v1910
  %v1923 = vor.u32 %v1921, %v1922
  %v1924 = vshll.u32 920167782, %v1909
  %v1925 = vshrl.u32 1326507024, %v1910
  %v1926 = vor.u32 %v1924, %v1925
  %vm1927 = vcmp.lt.s32.totalorder %v1908, 1
  %vm1928 = vcmp.lt.s32.totalorder %v1908, 2
  %vm1929 = vcmp.lt.s32.totalorder %v1908, 3
  %vm1930 = vcmp.lt.s32.totalorder %v1908, 4
  %v1931 = vsel %vm1927, %v1911, %v1914
  %v1932 = vsel %vm1930, %v1920, 2102212464
  %v1933 = vsel %vm1929, %v1917, %v1932
  %v1934 = vsel %vm1928, %v1931, %v1933
  %v1935 = vsel %vm1927, %v1914, %v1917
  %v1936 = vsel %vm1930, %v1923, 920167782
  %v1937 = vsel %vm1929, %v1920, %v1936
  %v1938 = vsel %vm1928, %v1935, %v1937
  %v1939 = vsel %vm1927, %v1917, %v1920
  %v1940 = vsel %vm1930, %v1926, 1326507024
  %v1941 = vsel %vm1929, %v1923, %v1940
  %v1942 = vsel %vm1928, %v1939, %v1941
  %v1943 = vshll.u32 %v1903, 8
  %v1944 = vmul.u32.u64.compose %v1943, %v1942
  %v1945 = vextract.low.u32 %v1944
  %v1946 = vextract.high.u32 %v1944
  %v1947 = vmul.u32.u64.compose %v1943, %v1938
  %v1948 = vextract.low.u32 %v1947
  %v1949 = vextract.high.u32 %v1947
  %v1950 = vmul.u32 %v1943, %v1934
  %v1951 = vadd.s32 %v1946, %v1948
  %vm1952 = vc.u32 %v1946, %v1948
  %v1953 = vadd.s32 %v1949, 1
  %v1954 = vsel %vm1952, %v1953, %v1949
  %v1955 = vadd.s32 %v1950, %v1954
  %v1956 = vadd.s32 %v1955, 536870912
  %v1957 = vshrl.u32 %v1956, 30
  %v1958 = vshll.u32 %v1957, 30
  %v1959 = vsub.s32 %v1955, %v1958
  %vm1960 = vcmp.lt.s32.totalorder %v1959, 0
  %v1961 = vsub.s32 0, %v1959
  %v1962 = vsel %vm1960, %v1961, %v1959
  %v1963 = vclz %v1962
  %v1964 = vsub.s32 %v1963, 2
  %vm1965 = vcmp.gt.s32.totalorder 0, %v1964
  %v1966 = vsel %vm1965, 0, %v1964
  %v1967 = vsub.s32 32, %v1966
  %v1968 = vshll.u32 %v1959, %v1966
  %v1969 = vshrl.u32 %v1951, %v1967
  %v1970 = vor.u32 %v1968, %v1969
  %v1971 = vsub.s32 4294967266, %v1966
  %v1972 = vadd.s32 %v1971, 127
  %v1973 = vshll.u32 %v1972, 23
  %v1974 = vor.u32 4788187, %v1973
  %v1975 = vand.u32 2147483647, %v1974
  %v1977 = vcvt.s32.f32 %v1970
  %v1978 = vmul.f32 %v1977, %v1975
  %v1979 = vxor.u32 %v1978, 2147483648
  %v1980 = vsel %vm1897, %v1979, %v1978
  %v1981 = vsub.s32 4, %v1957
  %v1982 = vsel %vm1897, %v1981, %v1957
  %v1983 = vsel %vm1896, %v1041, %v1980
  %v1984 = vsel %vm1896, 0, %v1982
  %v1985 = vcosq.f32.pop %v1983
  %v1986 = vsinq.f32.pop %v1983
  %vm1987 = vweird.f32 %v1041
  %v1988 = vadd.s32 %v1984, 3
  %v1989 = vand.u32 %v1988, 3
  %vm1990 = vcmp.lt.s32.totalorder %v1989, 2
  %vm1991 = vcmp.eq.s32.totalorder %v1989, 0
  %v1992 = vxor.u32 %v1986, 2147483648
  %v1993 = vsel %vm1991, %v1985, %v1992
  %vm1994 = vcmp.eq.s32.totalorder %v1989, 2
  %v1995 = vxor.u32 %v1985, 2147483648
  %v1996 = vsel %vm1994, %v1995, %v1986
  %v1997 = vsel %vm1990, %v1993, %v1996
  %v1998 = vsel %vm1987, nan, %v1997
  %v1999 = vand.u32 2147483647, %v1043
  %vm2000 = vcmp.le.f32.partialorder %v1999, 0.7853982
  %vm2001 = vcmp.lt.s32.totalorder %v1043, 0
  %v2002 = vand.u32 %v1043, 2139095040
  %v2003 = vshrl.u32 %v2002, 23
  %v2004 = vsub.s32 %v2003, 127
  %v2005 = vand.u32 2147483647, %v1043
  %v2006 = vand.u32 %v2005, 8388607
  %v2007 = vor.u32 %v2006, 8388608
  %v2008 = vsub.s32 0, %v2007
  %v2009 = vadd.s32 %v2004, 1
  %vm2010 = vcmp.gt.s32.totalorder %v2009, 0
  %v2011 = vsel %vm2010, %v2009, 0
  %v2012 = vshrl.u32 %v2011, 5
  %v2013 = vand.u32 %v2011, 31
  %v2014 = vsub.s32 32, %v2013
  %v2015 = vshrl.u32 683565275, %v2014
  %v2016 = vshll.u32 683565275, %v2013
  %v2017 = vshrl.u32 2475754826, %v2014
  %v2018 = vor.u32 %v2016, %v2017
  %v2019 = vshll.u32 2475754826, %v2013
  %v2020 = vshrl.u32 2131351028, %v2014
  %v2021 = vor.u32 %v2019, %v2020
  %v2022 = vshll.u32 2131351028, %v2013
  %v2023 = vshrl.u32 2102212464, %v2014
  %v2024 = vor.u32 %v2022, %v2023
  %v2025 = vshll.u32 2102212464, %v2013
  %v2026 = vshrl.u32 920167782, %v2014
  %v2027 = vor.u32 %v2025, %v2026
  %v2028 = vshll.u32 920167782, %v2013
  %v2029 = vshrl.u32 1326507024, %v2014
  %v2030 = vor.u32 %v2028, %v2029
  %vm2031 = vcmp.lt.s32.totalorder %v2012, 1
  %vm2032 = vcmp.lt.s32.totalorder %v2012, 2
  %vm2033 = vcmp.lt.s32.totalorder %v2012, 3
  %vm2034 = vcmp.lt.s32.totalorder %v2012, 4
  %v2035 = vsel %vm2031, %v2015, %v2018
  %v2036 = vsel %vm2034, %v2024, 2102212464
  %v2037 = vsel %vm2033, %v2021, %v2036
  %v2038 = vsel %vm2032, %v2035, %v2037
  %v2039 = vsel %vm2031, %v2018, %v2021
  %v2040 = vsel %vm2034, %v2027, 920167782
  %v2041 = vsel %vm2033, %v2024, %v2040
  %v2042 = vsel %vm2032, %v2039, %v2041
  %v2043 = vsel %vm2031, %v2021, %v2024
  %v2044 = vsel %vm2034, %v2030, 1326507024
  %v2045 = vsel %vm2033, %v2027, %v2044
  %v2046 = vsel %vm2032, %v2043, %v2045
  %v2047 = vshll.u32 %v2007, 8
  %v2048 = vmul.u32.u64.compose %v2047, %v2046
  %v2049 = vextract.low.u32 %v2048
  %v2050 = vextract.high.u32 %v2048
  %v2051 = vmul.u32.u64.compose %v2047, %v2042
  %v2052 = vextract.low.u32 %v2051
  %v2053 = vextract.high.u32 %v2051
  %v2054 = vmul.u32 %v2047, %v2038
  %v2055 = vadd.s32 %v2050, %v2052
  %vm2056 = vc.u32 %v2050, %v2052
  %v2057 = vadd.s32 %v2053, 1
  %v2058 = vsel %vm2056, %v2057, %v2053
  %v2059 = vadd.s32 %v2054, %v2058
  %v2060 = vadd.s32 %v2059, 536870912
  %v2061 = vshrl.u32 %v2060, 30
  %v2062 = vshll.u32 %v2061, 30
  %v2063 = vsub.s32 %v2059, %v2062
  %vm2064 = vcmp.lt.s32.totalorder %v2063, 0
  %v2065 = vsub.s32 0, %v2063
  %v2066 = vsel %vm2064, %v2065, %v2063
  %v2067 = vclz %v2066
  %v2068 = vsub.s32 %v2067, 2
  %vm2069 = vcmp.gt.s32.totalorder 0, %v2068
  %v2070 = vsel %vm2069, 0, %v2068
  %v2071 = vsub.s32 32, %v2070
  %v2072 = vshll.u32 %v2063, %v2070
  %v2073 = vshrl.u32 %v2055, %v2071
  %v2074 = vor.u32 %v2072, %v2073
  %v2075 = vsub.s32 4294967266, %v2070
  %v2076 = vadd.s32 %v2075, 127
  %v2077 = vshll.u32 %v2076, 23
  %v2078 = vor.u32 4788187, %v2077
  %v2079 = vand.u32 2147483647, %v2078
  %v2081 = vcvt.s32.f32 %v2074
  %v2082 = vmul.f32 %v2081, %v2079
  %v2083 = vxor.u32 %v2082, 2147483648
  %v2084 = vsel %vm2001, %v2083, %v2082
  %v2085 = vsub.s32 4, %v2061
  %v2086 = vsel %vm2001, %v2085, %v2061
  %v2087 = vsel %vm2000, %v1043, %v2084
  %v2088 = vsel %vm2000, 0, %v2086
  %v2089 = vcosq.f32.pop %v2087
  %v2090 = vsinq.f32.pop %v2087
  %vm2091 = vweird.f32 %v1043
  %v2092 = vadd.s32 %v2088, 3
  %v2093 = vand.u32 %v2092, 3
  %vm2094 = vcmp.lt.s32.totalorder %v2093, 2
  %vm2095 = vcmp.eq.s32.totalorder %v2093, 0
  %v2096 = vxor.u32 %v2090, 2147483648
  %v2097 = vsel %vm2095, %v2089, %v2096
  %vm2098 = vcmp.eq.s32.totalorder %v2093, 2
  %v2099 = vxor.u32 %v2089, 2147483648
  %v2100 = vsel %vm2098, %v2099, %v2090
  %v2101 = vsel %vm2094, %v2097, %v2100
  %v2102 = vsel %vm2091, nan, %v2101
  %v2103 = vand.u32 2147483647, %v1047
  %vm2104 = vcmp.le.f32.partialorder %v2103, 0.7853982
  %vm2105 = vcmp.lt.s32.totalorder %v1047, 0
  %v2106 = vand.u32 %v1047, 2139095040
  %v2107 = vshrl.u32 %v2106, 23
  %v2108 = vsub.s32 %v2107, 127
  %v2109 = vand.u32 2147483647, %v1047
  %v2110 = vand.u32 %v2109, 8388607
  %v2111 = vor.u32 %v2110, 8388608
  %v2112 = vsub.s32 0, %v2111
  %v2113 = vadd.s32 %v2108, 1
  %vm2114 = vcmp.gt.s32.totalorder %v2113, 0
  %v2115 = vsel %vm2114, %v2113, 0
  %v2116 = vshrl.u32 %v2115, 5
  %v2117 = vand.u32 %v2115, 31
  %v2118 = vsub.s32 32, %v2117
  %v2119 = vshrl.u32 683565275, %v2118
  %v2120 = vshll.u32 683565275, %v2117
  %v2121 = vshrl.u32 2475754826, %v2118
  %v2122 = vor.u32 %v2120, %v2121
  %v2123 = vshll.u32 2475754826, %v2117
  %v2124 = vshrl.u32 2131351028, %v2118
  %v2125 = vor.u32 %v2123, %v2124
  %v2126 = vshll.u32 2131351028, %v2117
  %v2127 = vshrl.u32 2102212464, %v2118
  %v2128 = vor.u32 %v2126, %v2127
  %v2129 = vshll.u32 2102212464, %v2117
  %v2130 = vshrl.u32 920167782, %v2118
  %v2131 = vor.u32 %v2129, %v2130
  %v2132 = vshll.u32 920167782, %v2117
  %v2133 = vshrl.u32 1326507024, %v2118
  %v2134 = vor.u32 %v2132, %v2133
  %vm2135 = vcmp.lt.s32.totalorder %v2116, 1
  %vm2136 = vcmp.lt.s32.totalorder %v2116, 2
  %vm2137 = vcmp.lt.s32.totalorder %v2116, 3
  %vm2138 = vcmp.lt.s32.totalorder %v2116, 4
  %v2139 = vsel %vm2135, %v2119, %v2122
  %v2140 = vsel %vm2138, %v2128, 2102212464
  %v2141 = vsel %vm2137, %v2125, %v2140
  %v2142 = vsel %vm2136, %v2139, %v2141
  %v2143 = vsel %vm2135, %v2122, %v2125
  %v2144 = vsel %vm2138, %v2131, 920167782
  %v2145 = vsel %vm2137, %v2128, %v2144
  %v2146 = vsel %vm2136, %v2143, %v2145
  %v2147 = vsel %vm2135, %v2125, %v2128
  %v2148 = vsel %vm2138, %v2134, 1326507024
  %v2149 = vsel %vm2137, %v2131, %v2148
  %v2150 = vsel %vm2136, %v2147, %v2149
  %v2151 = vshll.u32 %v2111, 8
  %v2152 = vmul.u32.u64.compose %v2151, %v2150
  %v2153 = vextract.low.u32 %v2152
  %v2154 = vextract.high.u32 %v2152
  %v2155 = vmul.u32.u64.compose %v2151, %v2146
  %v2156 = vextract.low.u32 %v2155
  %v2157 = vextract.high.u32 %v2155
  %v2158 = vmul.u32 %v2151, %v2142
  %v2159 = vadd.s32 %v2154, %v2156
  %vm2160 = vc.u32 %v2154, %v2156
  %v2161 = vadd.s32 %v2157, 1
  %v2162 = vsel %vm2160, %v2161, %v2157
  %v2163 = vadd.s32 %v2158, %v2162
  %v2164 = vadd.s32 %v2163, 536870912
  %v2165 = vshrl.u32 %v2164, 30
  %v2166 = vshll.u32 %v2165, 30
  %v2167 = vsub.s32 %v2163, %v2166
  %vm2168 = vcmp.lt.s32.totalorder %v2167, 0
  %v2169 = vsub.s32 0, %v2167
  %v2170 = vsel %vm2168, %v2169, %v2167
  %v2171 = vclz %v2170
  %v2172 = vsub.s32 %v2171, 2
  %vm2173 = vcmp.gt.s32.totalorder 0, %v2172
  %v2174 = vsel %vm2173, 0, %v2172
  %v2175 = vsub.s32 32, %v2174
  %v2176 = vshll.u32 %v2167, %v2174
  %v2177 = vshrl.u32 %v2159, %v2175
  %v2178 = vor.u32 %v2176, %v2177
  %v2179 = vsub.s32 4294967266, %v2174
  %v2180 = vadd.s32 %v2179, 127
  %v2181 = vshll.u32 %v2180, 23
  %v2182 = vor.u32 4788187, %v2181
  %v2183 = vand.u32 2147483647, %v2182
  %v2185 = vcvt.s32.f32 %v2178
  %v2186 = vmul.f32 %v2185, %v2183
  %v2187 = vxor.u32 %v2186, 2147483648
  %v2188 = vsel %vm2105, %v2187, %v2186
  %v2189 = vsub.s32 4, %v2165
  %v2190 = vsel %vm2105, %v2189, %v2165
  %v2191 = vsel %vm2104, %v1047, %v2188
  %v2192 = vsel %vm2104, 0, %v2190
  %v2193 = vcosq.f32.pop %v2191
  %v2194 = vsinq.f32.pop %v2191
  %vm2195 = vweird.f32 %v1047
  %v2196 = vadd.s32 %v2192, 3
  %v2197 = vand.u32 %v2196, 3
  %vm2198 = vcmp.lt.s32.totalorder %v2197, 2
  %vm2199 = vcmp.eq.s32.totalorder %v2197, 0
  %v2200 = vxor.u32 %v2194, 2147483648
  %v2201 = vsel %vm2199, %v2193, %v2200
  %vm2202 = vcmp.eq.s32.totalorder %v2197, 2
  %v2203 = vxor.u32 %v2193, 2147483648
  %v2204 = vsel %vm2202, %v2203, %v2194
  %v2205 = vsel %vm2198, %v2201, %v2204
  %v2206 = vsel %vm2195, nan, %v2205
  %v2207 = vand.u32 2147483647, %v1049
  %vm2208 = vcmp.le.f32.partialorder %v2207, 0.7853982
  %vm2209 = vcmp.lt.s32.totalorder %v1049, 0
  %v2210 = vand.u32 %v1049, 2139095040
  %v2211 = vshrl.u32 %v2210, 23
  %v2212 = vsub.s32 %v2211, 127
  %v2213 = vand.u32 2147483647, %v1049
  %v2214 = vand.u32 %v2213, 8388607
  %v2215 = vor.u32 %v2214, 8388608
  %v2216 = vsub.s32 0, %v2215
  %v2217 = vadd.s32 %v2212, 1
  %vm2218 = vcmp.gt.s32.totalorder %v2217, 0
  %v2219 = vsel %vm2218, %v2217, 0
  %v2220 = vshrl.u32 %v2219, 5
  %v2221 = vand.u32 %v2219, 31
  %v2222 = vsub.s32 32, %v2221
  %v2223 = vshrl.u32 683565275, %v2222
  %v2224 = vshll.u32 683565275, %v2221
  %v2225 = vshrl.u32 2475754826, %v2222
  %v2226 = vor.u32 %v2224, %v2225
  %v2227 = vshll.u32 2475754826, %v2221
  %v2228 = vshrl.u32 2131351028, %v2222
  %v2229 = vor.u32 %v2227, %v2228
  %v2230 = vshll.u32 2131351028, %v2221
  %v2231 = vshrl.u32 2102212464, %v2222
  %v2232 = vor.u32 %v2230, %v2231
  %v2233 = vshll.u32 2102212464, %v2221
  %v2234 = vshrl.u32 920167782, %v2222
  %v2235 = vor.u32 %v2233, %v2234
  %v2236 = vshll.u32 920167782, %v2221
  %v2237 = vshrl.u32 1326507024, %v2222
  %v2238 = vor.u32 %v2236, %v2237
  %vm2239 = vcmp.lt.s32.totalorder %v2220, 1
  %vm2240 = vcmp.lt.s32.totalorder %v2220, 2
  %vm2241 = vcmp.lt.s32.totalorder %v2220, 3
  %vm2242 = vcmp.lt.s32.totalorder %v2220, 4
  %v2243 = vsel %vm2239, %v2223, %v2226
  %v2244 = vsel %vm2242, %v2232, 2102212464
  %v2245 = vsel %vm2241, %v2229, %v2244
  %v2246 = vsel %vm2240, %v2243, %v2245
  %v2247 = vsel %vm2239, %v2226, %v2229
  %v2248 = vsel %vm2242, %v2235, 920167782
  %v2249 = vsel %vm2241, %v2232, %v2248
  %v2250 = vsel %vm2240, %v2247, %v2249
  %v2251 = vsel %vm2239, %v2229, %v2232
  %v2252 = vsel %vm2242, %v2238, 1326507024
  %v2253 = vsel %vm2241, %v2235, %v2252
  %v2254 = vsel %vm2240, %v2251, %v2253
  %v2255 = vshll.u32 %v2215, 8
  %v2256 = vmul.u32.u64.compose %v2255, %v2254
  %v2257 = vextract.low.u32 %v2256
  %v2258 = vextract.high.u32 %v2256
  %v2259 = vmul.u32.u64.compose %v2255, %v2250
  %v2260 = vextract.low.u32 %v2259
  %v2261 = vextract.high.u32 %v2259
  %v2262 = vmul.u32 %v2255, %v2246
  %v2263 = vadd.s32 %v2258, %v2260
  %vm2264 = vc.u32 %v2258, %v2260
  %v2265 = vadd.s32 %v2261, 1
  %v2266 = vsel %vm2264, %v2265, %v2261
  %v2267 = vadd.s32 %v2262, %v2266
  %v2268 = vadd.s32 %v2267, 536870912
  %v2269 = vshrl.u32 %v2268, 30
  %v2270 = vshll.u32 %v2269, 30
  %v2271 = vsub.s32 %v2267, %v2270
  %vm2272 = vcmp.lt.s32.totalorder %v2271, 0
  %v2273 = vsub.s32 0, %v2271
  %v2274 = vsel %vm2272, %v2273, %v2271
  %v2275 = vclz %v2274
  %v2276 = vsub.s32 %v2275, 2
  %vm2277 = vcmp.gt.s32.totalorder 0, %v2276
  %v2278 = vsel %vm2277, 0, %v2276
  %v2279 = vsub.s32 32, %v2278
  %v2280 = vshll.u32 %v2271, %v2278
  %v2281 = vshrl.u32 %v2263, %v2279
  %v2282 = vor.u32 %v2280, %v2281
  %v2283 = vsub.s32 4294967266, %v2278
  %v2284 = vadd.s32 %v2283, 127
  %v2285 = vshll.u32 %v2284, 23
  %v2286 = vor.u32 4788187, %v2285
  %v2287 = vand.u32 2147483647, %v2286
  %v2289 = vcvt.s32.f32 %v2282
  %v2290 = vmul.f32 %v2289, %v2287
  %v2291 = vxor.u32 %v2290, 2147483648
  %v2292 = vsel %vm2209, %v2291, %v2290
  %v2293 = vsub.s32 4, %v2269
  %v2294 = vsel %vm2209, %v2293, %v2269
  %v2295 = vsel %vm2208, %v1049, %v2292
  %v2296 = vsel %vm2208, 0, %v2294
  %v2297 = vcosq.f32.pop %v2295
  %v2298 = vsinq.f32.pop %v2295
  %vm2299 = vweird.f32 %v1049
  %v2300 = vadd.s32 %v2296, 3
  %v2301 = vand.u32 %v2300, 3
  %vm2302 = vcmp.lt.s32.totalorder %v2301, 2
  %vm2303 = vcmp.eq.s32.totalorder %v2301, 0
  %v2304 = vxor.u32 %v2298, 2147483648
  %v2305 = vsel %vm2303, %v2297, %v2304
  %vm2306 = vcmp.eq.s32.totalorder %v2301, 2
  %v2307 = vxor.u32 %v2297, 2147483648
  %v2308 = vsel %vm2306, %v2307, %v2298
  %v2309 = vsel %vm2302, %v2305, %v2308
  %v2310 = vsel %vm2299, nan, %v2309
  %v2311 = vand.u32 2147483647, %v1053
  %vm2312 = vcmp.le.f32.partialorder %v2311, 0.7853982
  %vm2313 = vcmp.lt.s32.totalorder %v1053, 0
  %v2314 = vand.u32 %v1053, 2139095040
  %v2315 = vshrl.u32 %v2314, 23
  %v2316 = vsub.s32 %v2315, 127
  %v2317 = vand.u32 2147483647, %v1053
  %v2318 = vand.u32 %v2317, 8388607
  %v2319 = vor.u32 %v2318, 8388608
  %v2320 = vsub.s32 0, %v2319
  %v2321 = vadd.s32 %v2316, 1
  %vm2322 = vcmp.gt.s32.totalorder %v2321, 0
  %v2323 = vsel %vm2322, %v2321, 0
  %v2324 = vshrl.u32 %v2323, 5
  %v2325 = vand.u32 %v2323, 31
  %v2326 = vsub.s32 32, %v2325
  %v2327 = vshrl.u32 683565275, %v2326
  %v2328 = vshll.u32 683565275, %v2325
  %v2329 = vshrl.u32 2475754826, %v2326
  %v2330 = vor.u32 %v2328, %v2329
  %v2331 = vshll.u32 2475754826, %v2325
  %v2332 = vshrl.u32 2131351028, %v2326
  %v2333 = vor.u32 %v2331, %v2332
  %v2334 = vshll.u32 2131351028, %v2325
  %v2335 = vshrl.u32 2102212464, %v2326
  %v2336 = vor.u32 %v2334, %v2335
  %v2337 = vshll.u32 2102212464, %v2325
  %v2338 = vshrl.u32 920167782, %v2326
  %v2339 = vor.u32 %v2337, %v2338
  %v2340 = vshll.u32 920167782, %v2325
  %v2341 = vshrl.u32 1326507024, %v2326
  %v2342 = vor.u32 %v2340, %v2341
  %vm2343 = vcmp.lt.s32.totalorder %v2324, 1
  %vm2344 = vcmp.lt.s32.totalorder %v2324, 2
  %vm2345 = vcmp.lt.s32.totalorder %v2324, 3
  %vm2346 = vcmp.lt.s32.totalorder %v2324, 4
  %v2347 = vsel %vm2343, %v2327, %v2330
  %v2348 = vsel %vm2346, %v2336, 2102212464
  %v2349 = vsel %vm2345, %v2333, %v2348
  %v2350 = vsel %vm2344, %v2347, %v2349
  %v2351 = vsel %vm2343, %v2330, %v2333
  %v2352 = vsel %vm2346, %v2339, 920167782
  %v2353 = vsel %vm2345, %v2336, %v2352
  %v2354 = vsel %vm2344, %v2351, %v2353
  %v2355 = vsel %vm2343, %v2333, %v2336
  %v2356 = vsel %vm2346, %v2342, 1326507024
  %v2357 = vsel %vm2345, %v2339, %v2356
  %v2358 = vsel %vm2344, %v2355, %v2357
  %v2359 = vshll.u32 %v2319, 8
  %v2360 = vmul.u32.u64.compose %v2359, %v2358
  %v2361 = vextract.low.u32 %v2360
  %v2362 = vextract.high.u32 %v2360
  %v2363 = vmul.u32.u64.compose %v2359, %v2354
  %v2364 = vextract.low.u32 %v2363
  %v2365 = vextract.high.u32 %v2363
  %v2366 = vmul.u32 %v2359, %v2350
  %v2367 = vadd.s32 %v2362, %v2364
  %vm2368 = vc.u32 %v2362, %v2364
  %v2369 = vadd.s32 %v2365, 1
  %v2370 = vsel %vm2368, %v2369, %v2365
  %v2371 = vadd.s32 %v2366, %v2370
  %v2372 = vadd.s32 %v2371, 536870912
  %v2373 = vshrl.u32 %v2372, 30
  %v2374 = vshll.u32 %v2373, 30
  %v2375 = vsub.s32 %v2371, %v2374
  %vm2376 = vcmp.lt.s32.totalorder %v2375, 0
  %v2377 = vsub.s32 0, %v2375
  %v2378 = vsel %vm2376, %v2377, %v2375
  %v2379 = vclz %v2378
  %v2380 = vsub.s32 %v2379, 2
  %vm2381 = vcmp.gt.s32.totalorder 0, %v2380
  %v2382 = vsel %vm2381, 0, %v2380
  %v2383 = vsub.s32 32, %v2382
  %v2384 = vshll.u32 %v2375, %v2382
  %v2385 = vshrl.u32 %v2367, %v2383
  %v2386 = vor.u32 %v2384, %v2385
  %v2387 = vsub.s32 4294967266, %v2382
  %v2388 = vadd.s32 %v2387, 127
  %v2389 = vshll.u32 %v2388, 23
  %v2390 = vor.u32 4788187, %v2389
  %v2391 = vand.u32 2147483647, %v2390
  %v2393 = vcvt.s32.f32 %v2386
  %v2394 = vmul.f32 %v2393, %v2391
  %v2395 = vxor.u32 %v2394, 2147483648
  %v2396 = vsel %vm2313, %v2395, %v2394
  %v2397 = vsub.s32 4, %v2373
  %v2398 = vsel %vm2313, %v2397, %v2373
  %v2399 = vsel %vm2312, %v1053, %v2396
  %v2400 = vsel %vm2312, 0, %v2398
  %v2401 = vcosq.f32.pop %v2399
  %v2402 = vsinq.f32.pop %v2399
  %vm2403 = vweird.f32 %v1053
  %v2404 = vadd.s32 %v2400, 3
  %v2405 = vand.u32 %v2404, 3
  %vm2406 = vcmp.lt.s32.totalorder %v2405, 2
  %vm2407 = vcmp.eq.s32.totalorder %v2405, 0
  %v2408 = vxor.u32 %v2402, 2147483648
  %v2409 = vsel %vm2407, %v2401, %v2408
  %vm2410 = vcmp.eq.s32.totalorder %v2405, 2
  %v2411 = vxor.u32 %v2401, 2147483648
  %v2412 = vsel %vm2410, %v2411, %v2402
  %v2413 = vsel %vm2406, %v2409, %v2412
  %v2414 = vsel %vm2403, nan, %v2413
  %v2415 = vand.u32 2147483647, %v1055
  %vm2416 = vcmp.le.f32.partialorder %v2415, 0.7853982
  %vm2417 = vcmp.lt.s32.totalorder %v1055, 0
  %v2418 = vand.u32 %v1055, 2139095040
  %v2419 = vshrl.u32 %v2418, 23
  %v2420 = vsub.s32 %v2419, 127
  %v2421 = vand.u32 2147483647, %v1055
  %v2422 = vand.u32 %v2421, 8388607
  %v2423 = vor.u32 %v2422, 8388608
  %v2424 = vsub.s32 0, %v2423
  %v2425 = vadd.s32 %v2420, 1
  %vm2426 = vcmp.gt.s32.totalorder %v2425, 0
  %v2427 = vsel %vm2426, %v2425, 0
  %v2428 = vshrl.u32 %v2427, 5
  %v2429 = vand.u32 %v2427, 31
  %v2430 = vsub.s32 32, %v2429
  %v2431 = vshrl.u32 683565275, %v2430
  %v2432 = vshll.u32 683565275, %v2429
  %v2433 = vshrl.u32 2475754826, %v2430
  %v2434 = vor.u32 %v2432, %v2433
  %v2435 = vshll.u32 2475754826, %v2429
  %v2436 = vshrl.u32 2131351028, %v2430
  %v2437 = vor.u32 %v2435, %v2436
  %v2438 = vshll.u32 2131351028, %v2429
  %v2439 = vshrl.u32 2102212464, %v2430
  %v2440 = vor.u32 %v2438, %v2439
  %v2441 = vshll.u32 2102212464, %v2429
  %v2442 = vshrl.u32 920167782, %v2430
  %v2443 = vor.u32 %v2441, %v2442
  %v2444 = vshll.u32 920167782, %v2429
  %v2445 = vshrl.u32 1326507024, %v2430
  %v2446 = vor.u32 %v2444, %v2445
  %vm2447 = vcmp.lt.s32.totalorder %v2428, 1
  %vm2448 = vcmp.lt.s32.totalorder %v2428, 2
  %vm2449 = vcmp.lt.s32.totalorder %v2428, 3
  %vm2450 = vcmp.lt.s32.totalorder %v2428, 4
  %v2451 = vsel %vm2447, %v2431, %v2434
  %v2452 = vsel %vm2450, %v2440, 2102212464
  %v2453 = vsel %vm2449, %v2437, %v2452
  %v2454 = vsel %vm2448, %v2451, %v2453
  %v2455 = vsel %vm2447, %v2434, %v2437
  %v2456 = vsel %vm2450, %v2443, 920167782
  %v2457 = vsel %vm2449, %v2440, %v2456
  %v2458 = vsel %vm2448, %v2455, %v2457
  %v2459 = vsel %vm2447, %v2437, %v2440
  %v2460 = vsel %vm2450, %v2446, 1326507024
  %v2461 = vsel %vm2449, %v2443, %v2460
  %v2462 = vsel %vm2448, %v2459, %v2461
  %v2463 = vshll.u32 %v2423, 8
  %v2464 = vmul.u32.u64.compose %v2463, %v2462
  %v2465 = vextract.low.u32 %v2464
  %v2466 = vextract.high.u32 %v2464
  %v2467 = vmul.u32.u64.compose %v2463, %v2458
  %v2468 = vextract.low.u32 %v2467
  %v2469 = vextract.high.u32 %v2467
  %v2470 = vmul.u32 %v2463, %v2454
  %v2471 = vadd.s32 %v2466, %v2468
  %vm2472 = vc.u32 %v2466, %v2468
  %v2473 = vadd.s32 %v2469, 1
  %v2474 = vsel %vm2472, %v2473, %v2469
  %v2475 = vadd.s32 %v2470, %v2474
  %v2476 = vadd.s32 %v2475, 536870912
  %v2477 = vshrl.u32 %v2476, 30
  %v2478 = vshll.u32 %v2477, 30
  %v2479 = vsub.s32 %v2475, %v2478
  %vm2480 = vcmp.lt.s32.totalorder %v2479, 0
  %v2481 = vsub.s32 0, %v2479
  %v2482 = vsel %vm2480, %v2481, %v2479
  %v2483 = vclz %v2482
  %v2484 = vsub.s32 %v2483, 2
  %vm2485 = vcmp.gt.s32.totalorder 0, %v2484
  %v2486 = vsel %vm2485, 0, %v2484
  %v2487 = vsub.s32 32, %v2486
  %v2488 = vshll.u32 %v2479, %v2486
  %v2489 = vshrl.u32 %v2471, %v2487
  %v2490 = vor.u32 %v2488, %v2489
  %v2491 = vsub.s32 4294967266, %v2486
  %v2492 = vadd.s32 %v2491, 127
  %v2493 = vshll.u32 %v2492, 23
  %v2494 = vor.u32 4788187, %v2493
  %v2495 = vand.u32 2147483647, %v2494
  %v2497 = vcvt.s32.f32 %v2490
  %v2498 = vmul.f32 %v2497, %v2495
  %v2499 = vxor.u32 %v2498, 2147483648
  %v2500 = vsel %vm2417, %v2499, %v2498
  %v2501 = vsub.s32 4, %v2477
  %v2502 = vsel %vm2417, %v2501, %v2477
  %v2503 = vsel %vm2416, %v1055, %v2500
  %v2504 = vsel %vm2416, 0, %v2502
  %v2505 = vcosq.f32.pop %v2503
  %v2506 = vsinq.f32.pop %v2503
  %vm2507 = vweird.f32 %v1055
  %v2508 = vadd.s32 %v2504, 3
  %v2509 = vand.u32 %v2508, 3
  %vm2510 = vcmp.lt.s32.totalorder %v2509, 2
  %vm2511 = vcmp.eq.s32.totalorder %v2509, 0
  %v2512 = vxor.u32 %v2506, 2147483648
  %v2513 = vsel %vm2511, %v2505, %v2512
  %vm2514 = vcmp.eq.s32.totalorder %v2509, 2
  %v2515 = vxor.u32 %v2505, 2147483648
  %v2516 = vsel %vm2514, %v2515, %v2506
  %v2517 = vsel %vm2510, %v2513, %v2516
  %v2518 = vsel %vm2507, nan, %v2517
  %v2519 = vand.u32 2147483647, %v1059
  %vm2520 = vcmp.le.f32.partialorder %v2519, 0.7853982
  %vm2521 = vcmp.lt.s32.totalorder %v1059, 0
  %v2522 = vand.u32 %v1059, 2139095040
  %v2523 = vshrl.u32 %v2522, 23
  %v2524 = vsub.s32 %v2523, 127
  %v2525 = vand.u32 2147483647, %v1059
  %v2526 = vand.u32 %v2525, 8388607
  %v2527 = vor.u32 %v2526, 8388608
  %v2528 = vsub.s32 0, %v2527
  %v2529 = vadd.s32 %v2524, 1
  %vm2530 = vcmp.gt.s32.totalorder %v2529, 0
  %v2531 = vsel %vm2530, %v2529, 0
  %v2532 = vshrl.u32 %v2531, 5
  %v2533 = vand.u32 %v2531, 31
  %v2534 = vsub.s32 32, %v2533
  %v2535 = vshrl.u32 683565275, %v2534
  %v2536 = vshll.u32 683565275, %v2533
  %v2537 = vshrl.u32 2475754826, %v2534
  %v2538 = vor.u32 %v2536, %v2537
  %v2539 = vshll.u32 2475754826, %v2533
  %v2540 = vshrl.u32 2131351028, %v2534
  %v2541 = vor.u32 %v2539, %v2540
  %v2542 = vshll.u32 2131351028, %v2533
  %v2543 = vshrl.u32 2102212464, %v2534
  %v2544 = vor.u32 %v2542, %v2543
  %v2545 = vshll.u32 2102212464, %v2533
  %v2546 = vshrl.u32 920167782, %v2534
  %v2547 = vor.u32 %v2545, %v2546
  %v2548 = vshll.u32 920167782, %v2533
  %v2549 = vshrl.u32 1326507024, %v2534
  %v2550 = vor.u32 %v2548, %v2549
  %vm2551 = vcmp.lt.s32.totalorder %v2532, 1
  %vm2552 = vcmp.lt.s32.totalorder %v2532, 2
  %vm2553 = vcmp.lt.s32.totalorder %v2532, 3
  %vm2554 = vcmp.lt.s32.totalorder %v2532, 4
  %v2555 = vsel %vm2551, %v2535, %v2538
  %v2556 = vsel %vm2554, %v2544, 2102212464
  %v2557 = vsel %vm2553, %v2541, %v2556
  %v2558 = vsel %vm2552, %v2555, %v2557
  %v2559 = vsel %vm2551, %v2538, %v2541
  %v2560 = vsel %vm2554, %v2547, 920167782
  %v2561 = vsel %vm2553, %v2544, %v2560
  %v2562 = vsel %vm2552, %v2559, %v2561
  %v2563 = vsel %vm2551, %v2541, %v2544
  %v2564 = vsel %vm2554, %v2550, 1326507024
  %v2565 = vsel %vm2553, %v2547, %v2564
  %v2566 = vsel %vm2552, %v2563, %v2565
  %v2567 = vshll.u32 %v2527, 8
  %v2568 = vmul.u32.u64.compose %v2567, %v2566
  %v2569 = vextract.low.u32 %v2568
  %v2570 = vextract.high.u32 %v2568
  %v2571 = vmul.u32.u64.compose %v2567, %v2562
  %v2572 = vextract.low.u32 %v2571
  %v2573 = vextract.high.u32 %v2571
  %v2574 = vmul.u32 %v2567, %v2558
  %v2575 = vadd.s32 %v2570, %v2572
  %vm2576 = vc.u32 %v2570, %v2572
  %v2577 = vadd.s32 %v2573, 1
  %v2578 = vsel %vm2576, %v2577, %v2573
  %v2579 = vadd.s32 %v2574, %v2578
  %v2580 = vadd.s32 %v2579, 536870912
  %v2581 = vshrl.u32 %v2580, 30
  %v2582 = vshll.u32 %v2581, 30
  %v2583 = vsub.s32 %v2579, %v2582
  %vm2584 = vcmp.lt.s32.totalorder %v2583, 0
  %v2585 = vsub.s32 0, %v2583
  %v2586 = vsel %vm2584, %v2585, %v2583
  %v2587 = vclz %v2586
  %v2588 = vsub.s32 %v2587, 2
  %vm2589 = vcmp.gt.s32.totalorder 0, %v2588
  %v2590 = vsel %vm2589, 0, %v2588
  %v2591 = vsub.s32 32, %v2590
  %v2592 = vshll.u32 %v2583, %v2590
  %v2593 = vshrl.u32 %v2575, %v2591
  %v2594 = vor.u32 %v2592, %v2593
  %v2595 = vsub.s32 4294967266, %v2590
  %v2596 = vadd.s32 %v2595, 127
  %v2597 = vshll.u32 %v2596, 23
  %v2598 = vor.u32 4788187, %v2597
  %v2599 = vand.u32 2147483647, %v2598
  %v2601 = vcvt.s32.f32 %v2594
  %v2602 = vmul.f32 %v2601, %v2599
  %v2603 = vxor.u32 %v2602, 2147483648
  %v2604 = vsel %vm2521, %v2603, %v2602
  %v2605 = vsub.s32 4, %v2581
  %v2606 = vsel %vm2521, %v2605, %v2581
  %v2607 = vsel %vm2520, %v1059, %v2604
  %v2608 = vsel %vm2520, 0, %v2606
  %v2609 = vcosq.f32.pop %v2607
  %v2610 = vsinq.f32.pop %v2607
  %vm2611 = vweird.f32 %v1059
  %v2612 = vadd.s32 %v2608, 3
  %v2613 = vand.u32 %v2612, 3
  %vm2614 = vcmp.lt.s32.totalorder %v2613, 2
  %vm2615 = vcmp.eq.s32.totalorder %v2613, 0
  %v2616 = vxor.u32 %v2610, 2147483648
  %v2617 = vsel %vm2615, %v2609, %v2616
  %vm2618 = vcmp.eq.s32.totalorder %v2613, 2
  %v2619 = vxor.u32 %v2609, 2147483648
  %v2620 = vsel %vm2618, %v2619, %v2610
  %v2621 = vsel %vm2614, %v2617, %v2620
  %v2622 = vsel %vm2611, nan, %v2621
  %v2623 = vand.u32 2147483647, %v1061
  %vm2624 = vcmp.le.f32.partialorder %v2623, 0.7853982
  %vm2625 = vcmp.lt.s32.totalorder %v1061, 0
  %v2626 = vand.u32 %v1061, 2139095040
  %v2627 = vshrl.u32 %v2626, 23
  %v2628 = vsub.s32 %v2627, 127
  %v2629 = vand.u32 2147483647, %v1061
  %v2630 = vand.u32 %v2629, 8388607
  %v2631 = vor.u32 %v2630, 8388608
  %v2632 = vsub.s32 0, %v2631
  %v2633 = vadd.s32 %v2628, 1
  %vm2634 = vcmp.gt.s32.totalorder %v2633, 0
  %v2635 = vsel %vm2634, %v2633, 0
  %v2636 = vshrl.u32 %v2635, 5
  %v2637 = vand.u32 %v2635, 31
  %v2638 = vsub.s32 32, %v2637
  %v2639 = vshrl.u32 683565275, %v2638
  %v2640 = vshll.u32 683565275, %v2637
  %v2641 = vshrl.u32 2475754826, %v2638
  %v2642 = vor.u32 %v2640, %v2641
  %v2643 = vshll.u32 2475754826, %v2637
  %v2644 = vshrl.u32 2131351028, %v2638
  %v2645 = vor.u32 %v2643, %v2644
  %v2646 = vshll.u32 2131351028, %v2637
  %v2647 = vshrl.u32 2102212464, %v2638
  %v2648 = vor.u32 %v2646, %v2647
  %v2649 = vshll.u32 2102212464, %v2637
  %v2650 = vshrl.u32 920167782, %v2638
  %v2651 = vor.u32 %v2649, %v2650
  %v2652 = vshll.u32 920167782, %v2637
  %v2653 = vshrl.u32 1326507024, %v2638
  %v2654 = vor.u32 %v2652, %v2653
  %vm2655 = vcmp.lt.s32.totalorder %v2636, 1
  %vm2656 = vcmp.lt.s32.totalorder %v2636, 2
  %vm2657 = vcmp.lt.s32.totalorder %v2636, 3
  %vm2658 = vcmp.lt.s32.totalorder %v2636, 4
  %v2659 = vsel %vm2655, %v2639, %v2642
  %v2660 = vsel %vm2658, %v2648, 2102212464
  %v2661 = vsel %vm2657, %v2645, %v2660
  %v2662 = vsel %vm2656, %v2659, %v2661
  %v2663 = vsel %vm2655, %v2642, %v2645
  %v2664 = vsel %vm2658, %v2651, 920167782
  %v2665 = vsel %vm2657, %v2648, %v2664
  %v2666 = vsel %vm2656, %v2663, %v2665
  %v2667 = vsel %vm2655, %v2645, %v2648
  %v2668 = vsel %vm2658, %v2654, 1326507024
  %v2669 = vsel %vm2657, %v2651, %v2668
  %v2670 = vsel %vm2656, %v2667, %v2669
  %v2671 = vshll.u32 %v2631, 8
  %v2672 = vmul.u32.u64.compose %v2671, %v2670
  %v2673 = vextract.low.u32 %v2672
  %v2674 = vextract.high.u32 %v2672
  %v2675 = vmul.u32.u64.compose %v2671, %v2666
  %v2676 = vextract.low.u32 %v2675
  %v2677 = vextract.high.u32 %v2675
  %v2678 = vmul.u32 %v2671, %v2662
  %v2679 = vadd.s32 %v2674, %v2676
  %vm2680 = vc.u32 %v2674, %v2676
  %v2681 = vadd.s32 %v2677, 1
  %v2682 = vsel %vm2680, %v2681, %v2677
  %v2683 = vadd.s32 %v2678, %v2682
  %v2684 = vadd.s32 %v2683, 536870912
  %v2685 = vshrl.u32 %v2684, 30
  %v2686 = vshll.u32 %v2685, 30
  %v2687 = vsub.s32 %v2683, %v2686
  %vm2688 = vcmp.lt.s32.totalorder %v2687, 0
  %v2689 = vsub.s32 0, %v2687
  %v2690 = vsel %vm2688, %v2689, %v2687
  %v2691 = vclz %v2690
  %v2692 = vsub.s32 %v2691, 2
  %vm2693 = vcmp.gt.s32.totalorder 0, %v2692
  %v2694 = vsel %vm2693, 0, %v2692
  %v2695 = vsub.s32 32, %v2694
  %v2696 = vshll.u32 %v2687, %v2694
  %v2697 = vshrl.u32 %v2679, %v2695
  %v2698 = vor.u32 %v2696, %v2697
  %v2699 = vsub.s32 4294967266, %v2694
  %v2700 = vadd.s32 %v2699, 127
  %v2701 = vshll.u32 %v2700, 23
  %v2702 = vor.u32 4788187, %v2701
  %v2703 = vand.u32 2147483647, %v2702
  %v2705 = vcvt.s32.f32 %v2698
  %v2706 = vmul.f32 %v2705, %v2703
  %v2707 = vxor.u32 %v2706, 2147483648
  %v2708 = vsel %vm2625, %v2707, %v2706
  %v2709 = vsub.s32 4, %v2685
  %v2710 = vsel %vm2625, %v2709, %v2685
  %v2711 = vsel %vm2624, %v1061, %v2708
  %v2712 = vsel %vm2624, 0, %v2710
  %v2713 = vcosq.f32.pop %v2711
  %v2714 = vsinq.f32.pop %v2711
  %vm2715 = vweird.f32 %v1061
  %v2716 = vadd.s32 %v2712, 3
  %v2717 = vand.u32 %v2716, 3
  %vm2718 = vcmp.lt.s32.totalorder %v2717, 2
  %vm2719 = vcmp.eq.s32.totalorder %v2717, 0
  %v2720 = vxor.u32 %v2714, 2147483648
  %v2721 = vsel %vm2719, %v2713, %v2720
  %vm2722 = vcmp.eq.s32.totalorder %v2717, 2
  %v2723 = vxor.u32 %v2713, 2147483648
  %v2724 = vsel %vm2722, %v2723, %v2714
  %v2725 = vsel %vm2718, %v2721, %v2724
  %v2726 = vsel %vm2715, nan, %v2725
  %v2727 = vadd.f32 %v1166, %v1374
  %v2728 = vadd.f32 %v2727, %v1582
  %v2729 = vadd.f32 %v2728, %v1790
  %v2730 = vadd.f32 %v2729, %v1998
  %v2731 = vadd.f32 %v2730, %v2206
  %v2732 = vadd.f32 %v2731, %v2414
  %v2733 = vadd.f32 %v2732, %v2622
  %v2734 = vrot.slane %v2733, 4
  %v2735 = vadd.f32 %v2733, %v2734
  %v2736 = vrot.slane %v2735, 2
  %v2737 = vadd.f32 %v2735, %v2736
  %v2738 = vrot.slane %v2737, 1
  %v2739 = vadd.f32 %v2737, %v2738
  %v2740 = vadd.f32 %v1270, %v1478
  %v2741 = vadd.f32 %v2740, %v1686
  %v2742 = vadd.f32 %v2741, %v1894
  %v2743 = vadd.f32 %v2742, %v2102
  %v2744 = vadd.f32 %v2743, %v2310
  %v2745 = vadd.f32 %v2744, %v2518
  %v2746 = vadd.f32 %v2745, %v2726
  %v2747 = vrot.slane %v2746, 4
  %v2748 = vadd.f32 %v2746, %v2747
  %v2749 = vrot.slane %v2748, 2
  %v2750 = vadd.f32 %v2748, %v2749
  %v2751 = vrot.slane %v2750, 1
  %v2752 = vadd.f32 %v2750, %v2751
  %v2753 = vmul.f32 %v2739, %v377
  %v2754 = vmul.f32 %v2752, %v377
  %v2755 = vsel %vm211, %v904, 0.0
  %v2756 = vsel %vm211, %v905, 0.0
  %v2757 = vadd.f32 %v2755, %v2756
  %v2758 = vsel %vm211, %v906, 0.0
  %v2759 = vadd.f32 %v2757, %v2758
  %v2760 = vsel %vm211, %v907, 0.0
  %v2761 = vadd.f32 %v2759, %v2760
  %v2762 = vsel %vm211, %v908, 0.0
  %v2763 = vadd.f32 %v2761, %v2762
  %v2764 = vsel %vm211, %v909, 0.0
  %v2765 = vadd.f32 %v2763, %v2764
  %v2766 = vsel %vm211, %v910, 0.0
  %v2767 = vadd.f32 %v2765, %v2766
  %v2768 = vsel %vm211, %v911, 0.0
  %v2769 = vadd.f32 %v2767, %v2768
  %v2770 = vrot.slane %v2769, 4
  %v2771 = vadd.f32 %v2769, %v2770
  %v2772 = vrot.slane %v2771, 2
  %v2773 = vadd.f32 %v2771, %v2772
  %v2774 = vrot.slane %v2773, 1
  %v2775 = vadd.f32 %v2773, %v2774
  %v2776 = vmul.f32 %v2775, %v377
  %v2777 = vld [vmem:[%s5] sm:$0xff]
  %v2778 = vld [vmem:[%s5 + $0x8] sm:$0xff]
  %v2779 = vld [vmem:[%s5 + $0x10] sm:$0xff]
  %v2780 = vld [vmem:[%s5 + $0x18] sm:$0xff]
  %v2781 = vld [vmem:[%s5 + $0x20] sm:$0xff]
  %v2782 = vld [vmem:[%s5 + $0x28] sm:$0xff]
  %v2783 = vld [vmem:[%s5 + $0x30] sm:$0xff]
  %v2784 = vld [vmem:[%s5 + $0x38] sm:$0xff]
  %v2785 = vld [vmem:[%s5 + $0x40] sm:$0xff]
  %v2786 = vld [vmem:[%s5 + $0x48] sm:$0xff]
  %v2787 = vld [vmem:[%s5 + $0x50] sm:$0xff]
  %v2788 = vld [vmem:[%s5 + $0x58] sm:$0xff]
  %v2789 = vld [vmem:[%s5 + $0x60] sm:$0xff]
  %v2790 = vld [vmem:[%s5 + $0x68] sm:$0xff]
  %v2791 = vld [vmem:[%s5 + $0x70] sm:$0xff]
  %v2792 = vld [vmem:[%s5 + $0x78] sm:$0xff]
  %v2793 = vld [vmem:[%s5 + $0x80] sm:$0xff]
  %v2794 = vld [vmem:[%s5 + $0x88] sm:$0xff]
  %v2795 = vld [vmem:[%s5 + $0x90] sm:$0xff]
  %v2796 = vld [vmem:[%s5 + $0x98] sm:$0xff]
  %v2797 = vld [vmem:[%s5 + $0xa0] sm:$0xff]
  %v2798 = vld [vmem:[%s5 + $0xa8] sm:$0xff]
  %v2799 = vld [vmem:[%s5 + $0xb0] sm:$0xff]
  %v2800 = vld [vmem:[%s5 + $0xb8] sm:$0xff]
  %v2801 = vld [vmem:[%s5 + $0xc0] sm:$0xff]
  %v2802 = vld [vmem:[%s5 + $0xc8] sm:$0xff]
  %v2803 = vld [vmem:[%s5 + $0xd0] sm:$0xff]
  %v2804 = vld [vmem:[%s5 + $0xd8] sm:$0xff]
  %v2805 = vld [vmem:[%s5 + $0xe0] sm:$0xff]
  %v2806 = vld [vmem:[%s5 + $0xe8] sm:$0xff]
  %v2807 = vld [vmem:[%s5 + $0xf0] sm:$0xff]
  %v2808 = vld [vmem:[%s5 + $0xf8] sm:$0xff]
  %v2809 = vld [vmem:[%s5 + $0x100] sm:$0xff]
  %v2810 = vld [vmem:[%s5 + $0x108] sm:$0xff]
  %v2811 = vld [vmem:[%s5 + $0x110] sm:$0xff]
  %v2812 = vld [vmem:[%s5 + $0x118] sm:$0xff]
  %v2813 = vld [vmem:[%s5 + $0x120] sm:$0xff]
  %v2814 = vld [vmem:[%s5 + $0x128] sm:$0xff]
  %v2815 = vld [vmem:[%s5 + $0x130] sm:$0xff]
  %v2816 = vld [vmem:[%s5 + $0x138] sm:$0xff]
  %v2818 = vrot.slane %v42, 6
  %v2821 = vsel %vm211, %v2776, 0
  %2823 = vmatprep.subr.mxu0 0.0
  %2824 = vmatpush1.msra.mxu0 %v2792
  %2825 = vmatprep.subr.mxu0 0.0
  %2826 = vmatpush1.msra.mxu0 %v2791
  %2827 = vmatprep.subr.mxu0 0.0
  %2828 = vmatpush1.msra.mxu0 %v2790
  %2829 = vmatprep.subr.mxu0 0.0
  %2830 = vmatpush1.msra.mxu0 %v2789
  %2831 = vmatprep.subr.mxu0 0.0
  %2832 = vmatpush1.msra.mxu0 %v2788
  %2833 = vmatprep.subr.mxu0 0.0
  %2834 = vmatpush1.msra.mxu0 %v2787
  %2835 = vmatprep.subr.mxu0 0.0
  %2836 = vmatpush1.msra.mxu0 %v2786
  %2837 = vmatprep.subr.mxu0 0.0
  %2838 = vmatpush1.msra.mxu0 %v2785
  %2839 = vmatprep.subr.mxu0 0.0
  %2840 = vmatpush1.msra.mxu0 %v2784
  %2841 = vmatprep.subr.mxu0 0.0
  %2842 = vmatpush1.msra.mxu0 %v2783
  %2843 = vmatprep.subr.mxu0 0.0
  %2844 = vmatpush1.msra.mxu0 %v2782
  %2845 = vmatprep.subr.mxu0 0.0
  %2846 = vmatpush1.msra.mxu0 %v2781
  %2847 = vmatprep.subr.mxu0 0.0
  %2848 = vmatpush1.msra.mxu0 %v2780
  %2849 = vmatprep.subr.mxu0 0.0
  %2850 = vmatpush1.msra.mxu0 %v2779
  %2851 = vmatprep.subr.mxu0 0.0
  %2852 = vmatpush1.msra.mxu0 %v2778
  %2853 = vmatprep.subr.mxu0 0.0
  %2854 = vmatpush1.msra.mxu0 %v2777
  %2855 = vmatprep.subr.mxu0 0.0
  %2856 = vmatpush2.msra.mxu0 %v2808
  %2857 = vmatprep.subr.mxu0 0.0
  %2858 = vmatpush2.msra.mxu0 %v2807
  %2859 = vmatprep.subr.mxu0 0.0
  %2860 = vmatpush2.msra.mxu0 %v2806
  %2861 = vmatprep.subr.mxu0 0.0
  %2862 = vmatpush2.msra.mxu0 %v2805
  %2863 = vmatprep.subr.mxu0 0.0
  %2864 = vmatpush2.msra.mxu0 %v2804
  %2865 = vmatprep.subr.mxu0 0.0
  %2866 = vmatpush2.msra.mxu0 %v2803
  %2867 = vmatprep.subr.mxu0 0.0
  %2868 = vmatpush2.msra.mxu0 %v2802
  %2869 = vmatprep.subr.mxu0 0.0
  %2870 = vmatpush2.msra.mxu0 %v2801
  %2871 = vmatprep.subr.mxu0 0.0
  %2872 = vmatpush2.msra.mxu0 %v2800
  %2873 = vmatprep.subr.mxu0 0.0
  %2874 = vmatpush2.msra.mxu0 %v2799
  %2875 = vmatprep.subr.mxu0 0.0
  %2876 = vmatpush2.msra.mxu0 %v2798
  %2877 = vmatprep.subr.mxu0 0.0
  %2878 = vmatpush2.msra.mxu0 %v2797
  %2879 = vmatprep.subr.mxu0 0.0
  %2880 = vmatpush2.msra.mxu0 %v2796
  %2881 = vmatprep.subr.mxu0 0.0
  %2882 = vmatpush2.msra.mxu0 %v2795
  %2883 = vmatprep.subr.mxu0 0.0
  %2884 = vmatpush2.msra.mxu0 %v2794
  %2885 = vmatprep.subr.mxu0 0.0
  %2886 = vmatpush2.msra.mxu0 %v2793
  %2887 = vmatprep.mubr.f32.mxu0 %v2754
  %2888 = vmatmul.mubr.f32.gmra.mxu0 %v2753
  %v2889 = vpop.f32.mrf.mxu0
  %v2890 = vadd.f32 %v2818, %v2889
  %v2891 = vpop.f32.mrf.mxu0
  %2892 = vdwg.mxu0
  %2893 = vmatprep.subr.mxu0 0.0
  %2894 = vmatpush1.msra.mxu0 0.0
  %2895 = vmatprep.subr.mxu0 0.0
  %2896 = vmatpush1.msra.mxu0 0.0
  %2897 = vmatprep.subr.mxu0 0.0
  %2898 = vmatpush1.msra.mxu0 0.0
  %2899 = vmatprep.subr.mxu0 0.0
  %2900 = vmatpush1.msra.mxu0 0.0
  %2901 = vmatprep.subr.mxu0 0.0
  %2902 = vmatpush1.msra.mxu0 0.0
  %2903 = vmatprep.subr.mxu0 0.0
  %2904 = vmatpush1.msra.mxu0 0.0
  %2905 = vmatprep.subr.mxu0 0.0
  %2906 = vmatpush1.msra.mxu0 0.0
  %2907 = vmatprep.subr.mxu0 0.0
  %2908 = vmatpush1.msra.mxu0 0.0
  %2909 = vmatprep.subr.mxu0 0.0
  %2910 = vmatpush1.msra.mxu0 %v2816
  %2911 = vmatprep.subr.mxu0 0.0
  %2912 = vmatpush1.msra.mxu0 %v2815
  %2913 = vmatprep.subr.mxu0 0.0
  %2914 = vmatpush1.msra.mxu0 %v2814
  %2915 = vmatprep.subr.mxu0 0.0
  %2916 = vmatpush1.msra.mxu0 %v2813
  %2917 = vmatprep.subr.mxu0 0.0
  %2918 = vmatpush1.msra.mxu0 %v2812
  %2919 = vmatprep.subr.mxu0 0.0
  %2920 = vmatpush1.msra.mxu0 %v2811
  %2921 = vmatprep.subr.mxu0 0.0
  %2922 = vmatpush1.msra.mxu0 %v2810
  %2923 = vmatprep.subr.mxu0 0.0
  %2924 = vmatpush1.msra.mxu0 %v2809
  %2925 = vmatprep.subr.mxu0 0.0
  %2926 = vmatpush2.msra.mxu0 0.0
  %2927 = vmatprep.subr.mxu0 0.0
  %2928 = vmatpush2.msra.mxu0 0.0
  %2929 = vmatprep.subr.mxu0 0.0
  %2930 = vmatpush2.msra.mxu0 0.0
  %2931 = vmatprep.subr.mxu0 0.0
  %2932 = vmatpush2.msra.mxu0 0.0
  %2933 = vmatprep.subr.mxu0 0.0
  %2934 = vmatpush2.msra.mxu0 0.0
  %2935 = vmatprep.subr.mxu0 0.0
  %2936 = vmatpush2.msra.mxu0 0.0
  %2937 = vmatprep.subr.mxu0 0.0
  %2938 = vmatpush2.msra.mxu0 0.0
  %2939 = vmatprep.subr.mxu0 0.0
  %2940 = vmatpush2.msra.mxu0 0.0
  %2941 = vmatprep.subr.mxu0 0.0
  %2942 = vmatpush2.msra.mxu0 0.0
  %2943 = vmatprep.subr.mxu0 0.0
  %2944 = vmatpush2.msra.mxu0 0.0
  %2945 = vmatprep.subr.mxu0 0.0
  %2946 = vmatpush2.msra.mxu0 0.0
  %2947 = vmatprep.subr.mxu0 0.0
  %2948 = vmatpush2.msra.mxu0 0.0
  %2949 = vmatprep.subr.mxu0 0.0
  %2950 = vmatpush2.msra.mxu0 0.0
  %2951 = vmatprep.subr.mxu0 0.0
  %2952 = vmatpush2.msra.mxu0 0.0
  %2953 = vmatprep.subr.mxu0 0.0
  %2954 = vmatpush2.msra.mxu0 0.0
  %2955 = vmatprep.subr.mxu0 0.0
  %2956 = vmatpush2.msra.mxu0 0.0
  %2957 = vmatprep.mubr.f32.mxu0 0.0
  %2958 = vmatmul.mubr.f32.gmra.mxu0 %v2821
  %v2959 = vpop.f32.mrf.mxu0
  %v2960 = vadd.f32 %v2890, %v2959
  %v2961 = vpop.f32.mrf.mxu0
  %2962 = vdwg.mxu0
  %vm2963 = vcmask 516096
  %v2964 = vsel %vm2963, %v2960, 0.0
  %2965 = vadd.xlane.f32.xlu0 %v2964
  %v2966 = vpop.xlane.xlu0 %2965
  %v2967 = vmul.f32 %v2966, %v377
  %v2968 = vsub.f32 %v2960, %v2967
  %v2969 = vmul.f32 %v2968, %v2968
  %v2970 = vsel %vm2963, %v2969, 0.0
  %2971 = vadd.xlane.f32.xlu0 %v2970
  %v2972 = vpop.xlane.xlu0 %2971
  %v2973 = vmul.f32 %v2972, %v377
  %v2974 = vadd.f32 %v2973, 1e-05
  %v2975 = vrsqrt.pop %v2974
  %v2976 = vmul.f32 %v2968, %v2975
  %v2977 = vrot.slane %v42, 7
  %v2979 = vmul.f32 %v2976, %v2977
  %v2980 = vadd.f32 %v2979, %v43
  %v2981 = vld [vmem:[%s5 + $0x140] sm:$0xff]
  %v2982 = vld [vmem:[%s5 + $0x148] sm:$0xff]
  %v2983 = vld [vmem:[%s5 + $0x150] sm:$0xff]
  %v2984 = vld [vmem:[%s5 + $0x158] sm:$0xff]
  %v2985 = vld [vmem:[%s5 + $0x160] sm:$0xff]
  %v2986 = vld [vmem:[%s5 + $0x168] sm:$0xff]
  %v2987 = vld [vmem:[%s5 + $0x170] sm:$0xff]
  %v2988 = vld [vmem:[%s5 + $0x178] sm:$0xff]
  %v2990 = vrot.slane %v43, 1
  %v2993 = vsel %vm211, %v2980, 0
  %2995 = vmatprep.subr.mxu0 0.0
  %2996 = vmatpush1.msra.mxu0 0.0
  %2997 = vmatprep.subr.mxu0 0.0
  %2998 = vmatpush1.msra.mxu0 0.0
  %2999 = vmatprep.subr.mxu0 0.0
  %3000 = vmatpush1.msra.mxu0 0.0
  %3001 = vmatprep.subr.mxu0 0.0
  %3002 = vmatpush1.msra.mxu0 0.0
  %3003 = vmatprep.subr.mxu0 0.0
  %3004 = vmatpush1.msra.mxu0 0.0
  %3005 = vmatprep.subr.mxu0 0.0
  %3006 = vmatpush1.msra.mxu0 0.0
  %3007 = vmatprep.subr.mxu0 0.0
  %3008 = vmatpush1.msra.mxu0 0.0
  %3009 = vmatprep.subr.mxu0 0.0
  %3010 = vmatpush1.msra.mxu0 0.0
  %3011 = vmatprep.subr.mxu0 0.0
  %3012 = vmatpush1.msra.mxu0 %v2988
  %3013 = vmatprep.subr.mxu0 0.0
  %3014 = vmatpush1.msra.mxu0 %v2987
  %3015 = vmatprep.subr.mxu0 0.0
  %3016 = vmatpush1.msra.mxu0 %v2986
  %3017 = vmatprep.subr.mxu0 0.0
  %3018 = vmatpush1.msra.mxu0 %v2985
  %3019 = vmatprep.subr.mxu0 0.0
  %3020 = vmatpush1.msra.mxu0 %v2984
  %3021 = vmatprep.subr.mxu0 0.0
  %3022 = vmatpush1.msra.mxu0 %v2983
  %3023 = vmatprep.subr.mxu0 0.0
  %3024 = vmatpush1.msra.mxu0 %v2982
  %3025 = vmatprep.subr.mxu0 0.0
  %3026 = vmatpush1.msra.mxu0 %v2981
  %3027 = vmatprep.subr.mxu0 0.0
  %3028 = vmatpush2.msra.mxu0 0.0
  %3029 = vmatprep.subr.mxu0 0.0
  %3030 = vmatpush2.msra.mxu0 0.0
  %3031 = vmatprep.subr.mxu0 0.0
  %3032 = vmatpush2.msra.mxu0 0.0
  %3033 = vmatprep.subr.mxu0 0.0
  %3034 = vmatpush2.msra.mxu0 0.0
  %3035 = vmatprep.subr.mxu0 0.0
  %3036 = vmatpush2.msra.mxu0 0.0
  %3037 = vmatprep.subr.mxu0 0.0
  %3038 = vmatpush2.msra.mxu0 0.0
  %3039 = vmatprep.subr.mxu0 0.0
  %3040 = vmatpush2.msra.mxu0 0.0
  %3041 = vmatprep.subr.mxu0 0.0
  %3042 = vmatpush2.msra.mxu0 0.0
  %3043 = vmatprep.subr.mxu0 0.0
  %3044 = vmatpush2.msra.mxu0 0.0
  %3045 = vmatprep.subr.mxu0 0.0
  %3046 = vmatpush2.msra.mxu0 0.0
  %3047 = vmatprep.subr.mxu0 0.0
  %3048 = vmatpush2.msra.mxu0 0.0
  %3049 = vmatprep.subr.mxu0 0.0
  %3050 = vmatpush2.msra.mxu0 0.0
  %3051 = vmatprep.subr.mxu0 0.0
  %3052 = vmatpush2.msra.mxu0 0.0
  %3053 = vmatprep.subr.mxu0 0.0
  %3054 = vmatpush2.msra.mxu0 0.0
  %3055 = vmatprep.subr.mxu0 0.0
  %3056 = vmatpush2.msra.mxu0 0.0
  %3057 = vmatprep.subr.mxu0 0.0
  %3058 = vmatpush2.msra.mxu0 0.0
  %3059 = vmatprep.mubr.f32.mxu0 0.0
  %3060 = vmatmul.mubr.f32.gmra.mxu0 %v2993
  %v3061 = vpop.f32.mrf.mxu0
  %v3062 = vadd.f32 %v2990, %v3061
  %v3063 = vpop.f32.mrf.mxu0
  %3064 = vdwg.mxu0
  %v3065 = vld [vmem:[%s2] sm:$0xff]
  %v3066 = vld [vmem:[%s2 + $0x8] sm:$0xff]
  %v3067 = vld [vmem:[%s2 + $0x10] sm:$0xff]
  %v3068 = vld [vmem:[%s2 + $0x18] sm:$0xff]
  %v3069 = vld [vmem:[%s2 + $0x20] sm:$0xff]
  %v3070 = vld [vmem:[%s2 + $0x28] sm:$0xff]
  %v3071 = vld [vmem:[%s2 + $0x30] sm:$0xff]
  %v3072 = vld [vmem:[%s2 + $0x38] sm:$0xff]
  %v3073 = vld [vmem:[%s2 + $0x40] sm:$0xff]
  %v3074 = vld [vmem:[%s2 + $0x48] sm:$0xff]
  %v3075 = vld [vmem:[%s2 + $0x50] sm:$0xff]
  %v3076 = vld [vmem:[%s2 + $0x58] sm:$0xff]
  %v3077 = vld [vmem:[%s2 + $0x60] sm:$0xff]
  %v3078 = vld [vmem:[%s2 + $0x68] sm:$0xff]
  %v3079 = vld [vmem:[%s2 + $0x70] sm:$0xff]
  %v3080 = vld [vmem:[%s2 + $0x78] sm:$0xff]
  %v3081 = vld [vmem:[%s5 + $0x200] sm:$0x7]
  %v3082 = vlaneseq
  %v3083 = vshrl.u32 %v3082, 7
  %v3084 = vsub.s32 0, %v3083
  %v3085 = vrot.slane %v3062, %v3084
  %v3087 = vsel %vm928, %v3065, 0
  %v3090 = vsel %vm928, %v3066, 0
  %v3093 = vsel %vm928, %v3067, 0
  %v3096 = vsel %vm928, %v3068, 0
  %v3099 = vsel %vm928, %v3069, 0
  %v3102 = vsel %vm928, %v3070, 0
  %v3105 = vsel %vm928, %v3071, 0
  %v3108 = vsel %vm928, %v3072, 0
  %v3111 = vsel %vm928, %v3073, 0
  %v3114 = vsel %vm928, %v3074, 0
  %v3117 = vsel %vm928, %v3075, 0
  %v3120 = vsel %vm928, %v3076, 0
  %v3123 = vsel %vm928, %v3077, 0
  %v3126 = vsel %vm928, %v3078, 0
  %v3129 = vsel %vm928, %v3079, 0
  %v3132 = vsel %vm928, %v3080, 0
  %v3135 = vsel %vm945, %v3081, 0
  %3137 = vmatprep.subr.mxu0 0.0
  %3138 = vmatpush1.msra.mxu0 0.0
  %3139 = vmatprep.subr.mxu0 0.0
  %3140 = vmatpush1.msra.mxu0 0.0
  %3141 = vmatprep.subr.mxu0 0.0
  %3142 = vmatpush1.msra.mxu0 0.0
  %3143 = vmatprep.subr.mxu0 0.0
  %3144 = vmatpush1.msra.mxu0 0.0
  %3145 = vmatprep.subr.mxu0 0.0
  %3146 = vmatpush1.msra.mxu0 0.0
  %3147 = vmatprep.subr.mxu0 0.0
  %3148 = vmatpush1.msra.mxu0 0.0
  %3149 = vmatprep.subr.mxu0 0.0
  %3150 = vmatpush1.msra.mxu0 0.0
  %3151 = vmatprep.subr.mxu0 0.0
  %3152 = vmatpush1.msra.mxu0 0.0
  %3153 = vmatprep.subr.mxu0 0.0
  %3154 = vmatpush1.msra.mxu0 0.0
  %3155 = vmatprep.subr.mxu0 0.0
  %3156 = vmatpush1.msra.mxu0 0.0
  %3157 = vmatprep.subr.mxu0 0.0
  %3158 = vmatpush1.msra.mxu0 0.0
  %3159 = vmatprep.subr.mxu0 0.0
  %3160 = vmatpush1.msra.mxu0 0.0
  %3161 = vmatprep.subr.mxu0 0.0
  %3162 = vmatpush1.msra.mxu0 0.0
  %3163 = vmatprep.subr.mxu0 0.0
  %3164 = vmatpush1.msra.mxu0 0.0
  %3165 = vmatprep.subr.mxu0 0.0
  %3166 = vmatpush1.msra.mxu0 0.0
  %3167 = vmatprep.subr.mxu0 0.0
  %3168 = vmatpush1.msra.mxu0 %v3135
  %3169 = vmatprep.subr.mxu0 0.0
  %3170 = vmatpush2.msra.mxu0 0.0
  %3171 = vmatprep.subr.mxu0 0.0
  %3172 = vmatpush2.msra.mxu0 0.0
  %3173 = vmatprep.subr.mxu0 0.0
  %3174 = vmatpush2.msra.mxu0 0.0
  %3175 = vmatprep.subr.mxu0 0.0
  %3176 = vmatpush2.msra.mxu0 0.0
  %3177 = vmatprep.subr.mxu0 0.0
  %3178 = vmatpush2.msra.mxu0 0.0
  %3179 = vmatprep.subr.mxu0 0.0
  %3180 = vmatpush2.msra.mxu0 0.0
  %3181 = vmatprep.subr.mxu0 0.0
  %3182 = vmatpush2.msra.mxu0 0.0
  %3183 = vmatprep.subr.mxu0 0.0
  %3184 = vmatpush2.msra.mxu0 0.0
  %3185 = vmatprep.subr.mxu0 0.0
  %3186 = vmatpush2.msra.mxu0 0.0
  %3187 = vmatprep.subr.mxu0 0.0
  %3188 = vmatpush2.msra.mxu0 0.0
  %3189 = vmatprep.subr.mxu0 0.0
  %3190 = vmatpush2.msra.mxu0 0.0
  %3191 = vmatprep.subr.mxu0 0.0
  %3192 = vmatpush2.msra.mxu0 0.0
  %3193 = vmatprep.subr.mxu0 0.0
  %3194 = vmatpush2.msra.mxu0 0.0
  %3195 = vmatprep.subr.mxu0 0.0
  %3196 = vmatpush2.msra.mxu0 0.0
  %3197 = vmatprep.subr.mxu0 0.0
  %3198 = vmatpush2.msra.mxu0 0.0
  %3199 = vmatprep.subr.mxu0 0.0
  %3200 = vmatpush2.msra.mxu0 0.0
  %3201 = vmatprep.mubr.f32.mxu0 0.0
  %3202 = vmatmul.mubr.f32.gmra.mxu0 %v3087
  %v3203 = vpop.f32.mrf.mxu0
  %v3204 = vadd.f32 %v3085, %v3203
  %v3205 = vpop.f32.mrf.mxu0
  %3206 = vmatprep.mubr.f32.mxu0 0.0
  %3207 = vmatmul.mubr.f32.gmra.mxu0 %v3090
  %v3208 = vpop.f32.mrf.mxu0
  %v3209 = vadd.f32 %v3085, %v3208
  %v3210 = vpop.f32.mrf.mxu0
  %3211 = vmatprep.mubr.f32.mxu0 0.0
  %3212 = vmatmul.mubr.f32.gmra.mxu0 %v3093
  %v3213 = vpop.f32.mrf.mxu0
  %v3214 = vadd.f32 %v3085, %v3213
  %v3215 = vpop.f32.mrf.mxu0
  %3216 = vmatprep.mubr.f32.mxu0 0.0
  %3217 = vmatmul.mubr.f32.gmra.mxu0 %v3096
  %v3218 = vpop.f32.mrf.mxu0
  %v3219 = vadd.f32 %v3085, %v3218
  %v3220 = vpop.f32.mrf.mxu0
  %3221 = vmatprep.mubr.f32.mxu0 0.0
  %3222 = vmatmul.mubr.f32.gmra.mxu0 %v3099
  %v3223 = vpop.f32.mrf.mxu0
  %v3224 = vadd.f32 %v3085, %v3223
  %v3225 = vpop.f32.mrf.mxu0
  %3226 = vmatprep.mubr.f32.mxu0 0.0
  %3227 = vmatmul.mubr.f32.gmra.mxu0 %v3102
  %v3228 = vpop.f32.mrf.mxu0
  %v3229 = vadd.f32 %v3085, %v3228
  %v3230 = vpop.f32.mrf.mxu0
  %3231 = vmatprep.mubr.f32.mxu0 0.0
  %3232 = vmatmul.mubr.f32.gmra.mxu0 %v3105
  %v3233 = vpop.f32.mrf.mxu0
  %v3234 = vadd.f32 %v3085, %v3233
  %v3235 = vpop.f32.mrf.mxu0
  %3236 = vmatprep.mubr.f32.mxu0 0.0
  %3237 = vmatmul.mubr.f32.gmra.mxu0 %v3108
  %v3238 = vpop.f32.mrf.mxu0
  %v3239 = vadd.f32 %v3085, %v3238
  %v3240 = vpop.f32.mrf.mxu0
  %3241 = vmatprep.mubr.f32.mxu0 0.0
  %3242 = vmatmul.mubr.f32.gmra.mxu0 %v3111
  %v3243 = vpop.f32.mrf.mxu0
  %v3244 = vadd.f32 %v3085, %v3243
  %v3245 = vpop.f32.mrf.mxu0
  %3246 = vmatprep.mubr.f32.mxu0 0.0
  %3247 = vmatmul.mubr.f32.gmra.mxu0 %v3114
  %v3248 = vpop.f32.mrf.mxu0
  %v3249 = vadd.f32 %v3085, %v3248
  %v3250 = vpop.f32.mrf.mxu0
  %3251 = vmatprep.mubr.f32.mxu0 0.0
  %3252 = vmatmul.mubr.f32.gmra.mxu0 %v3117
  %v3253 = vpop.f32.mrf.mxu0
  %v3254 = vadd.f32 %v3085, %v3253
  %v3255 = vpop.f32.mrf.mxu0
  %3256 = vmatprep.mubr.f32.mxu0 0.0
  %3257 = vmatmul.mubr.f32.gmra.mxu0 %v3120
  %v3258 = vpop.f32.mrf.mxu0
  %v3259 = vadd.f32 %v3085, %v3258
  %v3260 = vpop.f32.mrf.mxu0
  %3261 = vmatprep.mubr.f32.mxu0 0.0
  %3262 = vmatmul.mubr.f32.gmra.mxu0 %v3123
  %v3263 = vpop.f32.mrf.mxu0
  %v3264 = vadd.f32 %v3085, %v3263
  %v3265 = vpop.f32.mrf.mxu0
  %3266 = vmatprep.mubr.f32.mxu0 0.0
  %3267 = vmatmul.mubr.f32.gmra.mxu0 %v3126
  %v3268 = vpop.f32.mrf.mxu0
  %v3269 = vadd.f32 %v3085, %v3268
  %v3270 = vpop.f32.mrf.mxu0
  %3271 = vmatprep.mubr.f32.mxu0 0.0
  %3272 = vmatmul.mubr.f32.gmra.mxu0 %v3129
  %v3273 = vpop.f32.mrf.mxu0
  %v3274 = vadd.f32 %v3085, %v3273
  %v3275 = vpop.f32.mrf.mxu0
  %3276 = vmatprep.mubr.f32.mxu0 0.0
  %3277 = vmatmul.mubr.f32.gmra.mxu0 %v3132
  %v3278 = vpop.f32.mrf.mxu0
  %v3279 = vadd.f32 %v3085, %v3278
  %v3280 = vpop.f32.mrf.mxu0
  %3281 = vdwg.mxu0
  %v3282 = vmax.f32 %v3204, 0.0
  %v3283 = vmax.f32 %v3209, 0.0
  %v3284 = vmax.f32 %v3214, 0.0
  %v3285 = vmax.f32 %v3219, 0.0
  %v3286 = vmax.f32 %v3224, 0.0
  %v3287 = vmax.f32 %v3229, 0.0
  %v3288 = vmax.f32 %v3234, 0.0
  %v3289 = vmax.f32 %v3239, 0.0
  %v3290 = vmax.f32 %v3244, 0.0
  %v3291 = vmax.f32 %v3249, 0.0
  %v3292 = vmax.f32 %v3254, 0.0
  %v3293 = vmax.f32 %v3259, 0.0
  %v3294 = vmax.f32 %v3264, 0.0
  %v3295 = vmax.f32 %v3269, 0.0
  %v3296 = vmax.f32 %v3274, 0.0
  %v3297 = vmax.f32 %v3279, 0.0
  %v3298 = vld [vmem:[%s5 + $0x180] sm:$0xff]
  %v3299 = vld [vmem:[%s5 + $0x188] sm:$0xff]
  %v3300 = vld [vmem:[%s5 + $0x190] sm:$0xff]
  %v3301 = vld [vmem:[%s5 + $0x198] sm:$0xff]
  %v3302 = vld [vmem:[%s5 + $0x1a0] sm:$0xff]
  %v3303 = vld [vmem:[%s5 + $0x1a8] sm:$0xff]
  %v3304 = vld [vmem:[%s5 + $0x1b0] sm:$0xff]
  %v3305 = vld [vmem:[%s5 + $0x1b8] sm:$0xff]
  %v3306 = vlaneseq
  %v3307 = vshrl.u32 %v3306, 7
  %v3308 = vsub.s32 2, %v3307
  %v3309 = vrot.slane %v43, %v3308
  %v3311 = vsel %vm211, %v3282, 0
  %v3314 = vsel %vm211, %v3283, 0
  %v3317 = vsel %vm211, %v3284, 0
  %v3320 = vsel %vm211, %v3285, 0
  %v3323 = vsel %vm211, %v3286, 0
  %v3326 = vsel %vm211, %v3287, 0
  %v3329 = vsel %vm211, %v3288, 0
  %v3332 = vsel %vm211, %v3289, 0
  %v3335 = vsel %vm211, %v3290, 0
  %v3338 = vsel %vm211, %v3291, 0
  %v3341 = vsel %vm211, %v3292, 0
  %v3344 = vsel %vm211, %v3293, 0
  %v3347 = vsel %vm211, %v3294, 0
  %v3350 = vsel %vm211, %v3295, 0
  %v3353 = vsel %vm211, %v3296, 0
  %v3356 = vsel %vm211, %v3297, 0
  %3358 = vmatprep.subr.mxu0 0.0
  %3359 = vmatpush1.msra.mxu0 0.0
  %3360 = vmatprep.subr.mxu0 0.0
  %3361 = vmatpush1.msra.mxu0 0.0
  %3362 = vmatprep.subr.mxu0 0.0
  %3363 = vmatpush1.msra.mxu0 0.0
  %3364 = vmatprep.subr.mxu0 0.0
  %3365 = vmatpush1.msra.mxu0 0.0
  %3366 = vmatprep.subr.mxu0 0.0
  %3367 = vmatpush1.msra.mxu0 0.0
  %3368 = vmatprep.subr.mxu0 0.0
  %3369 = vmatpush1.msra.mxu0 0.0
  %3370 = vmatprep.subr.mxu0 0.0
  %3371 = vmatpush1.msra.mxu0 0.0
  %3372 = vmatprep.subr.mxu0 0.0
  %3373 = vmatpush1.msra.mxu0 0.0
  %3374 = vmatprep.subr.mxu0 0.0
  %3375 = vmatpush1.msra.mxu0 %v3305
  %3376 = vmatprep.subr.mxu0 0.0
  %3377 = vmatpush1.msra.mxu0 %v3304
  %3378 = vmatprep.subr.mxu0 0.0
  %3379 = vmatpush1.msra.mxu0 %v3303
  %3380 = vmatprep.subr.mxu0 0.0
  %3381 = vmatpush1.msra.mxu0 %v3302
  %3382 = vmatprep.subr.mxu0 0.0
  %3383 = vmatpush1.msra.mxu0 %v3301
  %3384 = vmatprep.subr.mxu0 0.0
  %3385 = vmatpush1.msra.mxu0 %v3300
  %3386 = vmatprep.subr.mxu0 0.0
  %3387 = vmatpush1.msra.mxu0 %v3299
  %3388 = vmatprep.subr.mxu0 0.0
  %3389 = vmatpush1.msra.mxu0 %v3298
  %3390 = vmatprep.subr.mxu0 0.0
  %3391 = vmatpush2.msra.mxu0 0.0
  %3392 = vmatprep.subr.mxu0 0.0
  %3393 = vmatpush2.msra.mxu0 0.0
  %3394 = vmatprep.subr.mxu0 0.0
  %3395 = vmatpush2.msra.mxu0 0.0
  %3396 = vmatprep.subr.mxu0 0.0
  %3397 = vmatpush2.msra.mxu0 0.0
  %3398 = vmatprep.subr.mxu0 0.0
  %3399 = vmatpush2.msra.mxu0 0.0
  %3400 = vmatprep.subr.mxu0 0.0
  %3401 = vmatpush2.msra.mxu0 0.0
  %3402 = vmatprep.subr.mxu0 0.0
  %3403 = vmatpush2.msra.mxu0 0.0
  %3404 = vmatprep.subr.mxu0 0.0
  %3405 = vmatpush2.msra.mxu0 0.0
  %3406 = vmatprep.subr.mxu0 0.0
  %3407 = vmatpush2.msra.mxu0 0.0
  %3408 = vmatprep.subr.mxu0 0.0
  %3409 = vmatpush2.msra.mxu0 0.0
  %3410 = vmatprep.subr.mxu0 0.0
  %3411 = vmatpush2.msra.mxu0 0.0
  %3412 = vmatprep.subr.mxu0 0.0
  %3413 = vmatpush2.msra.mxu0 0.0
  %3414 = vmatprep.subr.mxu0 0.0
  %3415 = vmatpush2.msra.mxu0 0.0
  %3416 = vmatprep.subr.mxu0 0.0
  %3417 = vmatpush2.msra.mxu0 0.0
  %3418 = vmatprep.subr.mxu0 0.0
  %3419 = vmatpush2.msra.mxu0 0.0
  %3420 = vmatprep.subr.mxu0 0.0
  %3421 = vmatpush2.msra.mxu0 0.0
  %3422 = vmatprep.mubr.f32.mxu0 0.0
  %3423 = vmatmul.mubr.f32.gmra.mxu0 %v3311
  %v3424 = vpop.f32.mrf.mxu0
  %v3425 = vadd.f32 %v3309, %v3424
  %v3426 = vpop.f32.mrf.mxu0
  %3427 = vmatprep.mubr.f32.mxu0 0.0
  %3428 = vmatmul.mubr.f32.gmra.mxu0 %v3314
  %v3429 = vpop.f32.mrf.mxu0
  %v3430 = vadd.f32 %v3309, %v3429
  %v3431 = vpop.f32.mrf.mxu0
  %3432 = vmatprep.mubr.f32.mxu0 0.0
  %3433 = vmatmul.mubr.f32.gmra.mxu0 %v3317
  %v3434 = vpop.f32.mrf.mxu0
  %v3435 = vadd.f32 %v3309, %v3434
  %v3436 = vpop.f32.mrf.mxu0
  %3437 = vmatprep.mubr.f32.mxu0 0.0
  %3438 = vmatmul.mubr.f32.gmra.mxu0 %v3320
  %v3439 = vpop.f32.mrf.mxu0
  %v3440 = vadd.f32 %v3309, %v3439
  %v3441 = vpop.f32.mrf.mxu0
  %3442 = vmatprep.mubr.f32.mxu0 0.0
  %3443 = vmatmul.mubr.f32.gmra.mxu0 %v3323
  %v3444 = vpop.f32.mrf.mxu0
  %v3445 = vadd.f32 %v3309, %v3444
  %v3446 = vpop.f32.mrf.mxu0
  %3447 = vmatprep.mubr.f32.mxu0 0.0
  %3448 = vmatmul.mubr.f32.gmra.mxu0 %v3326
  %v3449 = vpop.f32.mrf.mxu0
  %v3450 = vadd.f32 %v3309, %v3449
  %v3451 = vpop.f32.mrf.mxu0
  %3452 = vmatprep.mubr.f32.mxu0 0.0
  %3453 = vmatmul.mubr.f32.gmra.mxu0 %v3329
  %v3454 = vpop.f32.mrf.mxu0
  %v3455 = vadd.f32 %v3309, %v3454
  %v3456 = vpop.f32.mrf.mxu0
  %3457 = vmatprep.mubr.f32.mxu0 0.0
  %3458 = vmatmul.mubr.f32.gmra.mxu0 %v3332
  %v3459 = vpop.f32.mrf.mxu0
  %v3460 = vadd.f32 %v3309, %v3459
  %v3461 = vpop.f32.mrf.mxu0
  %3462 = vmatprep.mubr.f32.mxu0 0.0
  %3463 = vmatmul.mubr.f32.gmra.mxu0 %v3335
  %v3464 = vpop.f32.mrf.mxu0
  %v3465 = vadd.f32 %v3309, %v3464
  %v3466 = vpop.f32.mrf.mxu0
  %3467 = vmatprep.mubr.f32.mxu0 0.0
  %3468 = vmatmul.mubr.f32.gmra.mxu0 %v3338
  %v3469 = vpop.f32.mrf.mxu0
  %v3470 = vadd.f32 %v3309, %v3469
  %v3471 = vpop.f32.mrf.mxu0
  %3472 = vmatprep.mubr.f32.mxu0 0.0
  %3473 = vmatmul.mubr.f32.gmra.mxu0 %v3341
  %v3474 = vpop.f32.mrf.mxu0
  %v3475 = vadd.f32 %v3309, %v3474
  %v3476 = vpop.f32.mrf.mxu0
  %3477 = vmatprep.mubr.f32.mxu0 0.0
  %3478 = vmatmul.mubr.f32.gmra.mxu0 %v3344
  %v3479 = vpop.f32.mrf.mxu0
  %v3480 = vadd.f32 %v3309, %v3479
  %v3481 = vpop.f32.mrf.mxu0
  %3482 = vmatprep.mubr.f32.mxu0 0.0
  %3483 = vmatmul.mubr.f32.gmra.mxu0 %v3347
  %v3484 = vpop.f32.mrf.mxu0
  %v3485 = vadd.f32 %v3309, %v3484
  %v3486 = vpop.f32.mrf.mxu0
  %3487 = vmatprep.mubr.f32.mxu0 0.0
  %3488 = vmatmul.mubr.f32.gmra.mxu0 %v3350
  %v3489 = vpop.f32.mrf.mxu0
  %v3490 = vadd.f32 %v3309, %v3489
  %v3491 = vpop.f32.mrf.mxu0
  %3492 = vmatprep.mubr.f32.mxu0 0.0
  %3493 = vmatmul.mubr.f32.gmra.mxu0 %v3353
  %v3494 = vpop.f32.mrf.mxu0
  %v3495 = vadd.f32 %v3309, %v3494
  %v3496 = vpop.f32.mrf.mxu0
  %3497 = vmatprep.mubr.f32.mxu0 0.0
  %3498 = vmatmul.mubr.f32.gmra.mxu0 %v3356
  %v3499 = vpop.f32.mrf.mxu0
  %v3500 = vadd.f32 %v3309, %v3499
  %v3501 = vpop.f32.mrf.mxu0
  %3502 = vdwg.mxu0
  %v3503 = vmax.f32 %v3425, 0.0
  %v3504 = vmax.f32 %v3430, 0.0
  %v3505 = vmax.f32 %v3435, 0.0
  %v3506 = vmax.f32 %v3440, 0.0
  %v3507 = vmax.f32 %v3445, 0.0
  %v3508 = vmax.f32 %v3450, 0.0
  %v3509 = vmax.f32 %v3455, 0.0
  %v3510 = vmax.f32 %v3460, 0.0
  %v3511 = vmax.f32 %v3465, 0.0
  %v3512 = vmax.f32 %v3470, 0.0
  %v3513 = vmax.f32 %v3475, 0.0
  %v3514 = vmax.f32 %v3480, 0.0
  %v3515 = vmax.f32 %v3485, 0.0
  %v3516 = vmax.f32 %v3490, 0.0
  %v3517 = vmax.f32 %v3495, 0.0
  %v3518 = vmax.f32 %v3500, 0.0
  %v3519 = vld [vmem:[%s5 + $0x1c0] sm:$0xff]
  %v3520 = vld [vmem:[%s5 + $0x1c8] sm:$0xff]
  %v3521 = vld [vmem:[%s5 + $0x1d0] sm:$0xff]
  %v3522 = vld [vmem:[%s5 + $0x1d8] sm:$0xff]
  %v3523 = vld [vmem:[%s5 + $0x1e0] sm:$0xff]
  %v3524 = vld [vmem:[%s5 + $0x1e8] sm:$0xff]
  %v3525 = vld [vmem:[%s5 + $0x1f0] sm:$0xff]
  %v3526 = vld [vmem:[%s5 + $0x1f8] sm:$0xff]
  %v3527 = vlaneseq
  %v3528 = vshrl.u32 %v3527, 7
  %v3529 = vsub.s32 3, %v3528
  %v3530 = vrot.slane %v43, %v3529
  %v3532 = vsel %vm211, %v3503, 0
  %v3535 = vsel %vm211, %v3504, 0
  %v3538 = vsel %vm211, %v3505, 0
  %v3541 = vsel %vm211, %v3506, 0
  %v3544 = vsel %vm211, %v3507, 0
  %v3547 = vsel %vm211, %v3508, 0
  %v3550 = vsel %vm211, %v3509, 0
  %v3553 = vsel %vm211, %v3510, 0
  %v3556 = vsel %vm211, %v3511, 0
  %v3559 = vsel %vm211, %v3512, 0
  %v3562 = vsel %vm211, %v3513, 0
  %v3565 = vsel %vm211, %v3514, 0
  %v3568 = vsel %vm211, %v3515, 0
  %v3571 = vsel %vm211, %v3516, 0
  %v3574 = vsel %vm211, %v3517, 0
  %v3577 = vsel %vm211, %v3518, 0
  %3579 = vmatprep.subr.mxu0 0.0
  %3580 = vmatpush1.msra.mxu0 0.0
  %3581 = vmatprep.subr.mxu0 0.0
  %3582 = vmatpush1.msra.mxu0 0.0
  %3583 = vmatprep.subr.mxu0 0.0
  %3584 = vmatpush1.msra.mxu0 0.0
  %3585 = vmatprep.subr.mxu0 0.0
  %3586 = vmatpush1.msra.mxu0 0.0
  %3587 = vmatprep.subr.mxu0 0.0
  %3588 = vmatpush1.msra.mxu0 0.0
  %3589 = vmatprep.subr.mxu0 0.0
  %3590 = vmatpush1.msra.mxu0 0.0
  %3591 = vmatprep.subr.mxu0 0.0
  %3592 = vmatpush1.msra.mxu0 0.0
  %3593 = vmatprep.subr.mxu0 0.0
  %3594 = vmatpush1.msra.mxu0 0.0
  %3595 = vmatprep.subr.mxu0 0.0
  %3596 = vmatpush1.msra.mxu0 %v3526
  %3597 = vmatprep.subr.mxu0 0.0
  %3598 = vmatpush1.msra.mxu0 %v3525
  %3599 = vmatprep.subr.mxu0 0.0
  %3600 = vmatpush1.msra.mxu0 %v3524
  %3601 = vmatprep.subr.mxu0 0.0
  %3602 = vmatpush1.msra.mxu0 %v3523
  %3603 = vmatprep.subr.mxu0 0.0
  %3604 = vmatpush1.msra.mxu0 %v3522
  %3605 = vmatprep.subr.mxu0 0.0
  %3606 = vmatpush1.msra.mxu0 %v3521
  %3607 = vmatprep.subr.mxu0 0.0
  %3608 = vmatpush1.msra.mxu0 %v3520
  %3609 = vmatprep.subr.mxu0 0.0
  %3610 = vmatpush1.msra.mxu0 %v3519
  %3611 = vmatprep.subr.mxu0 0.0
  %3612 = vmatpush2.msra.mxu0 0.0
  %3613 = vmatprep.subr.mxu0 0.0
  %3614 = vmatpush2.msra.mxu0 0.0
  %3615 = vmatprep.subr.mxu0 0.0
  %3616 = vmatpush2.msra.mxu0 0.0
  %3617 = vmatprep.subr.mxu0 0.0
  %3618 = vmatpush2.msra.mxu0 0.0
  %3619 = vmatprep.subr.mxu0 0.0
  %3620 = vmatpush2.msra.mxu0 0.0
  %3621 = vmatprep.subr.mxu0 0.0
  %3622 = vmatpush2.msra.mxu0 0.0
  %3623 = vmatprep.subr.mxu0 0.0
  %3624 = vmatpush2.msra.mxu0 0.0
  %3625 = vmatprep.subr.mxu0 0.0
  %3626 = vmatpush2.msra.mxu0 0.0
  %3627 = vmatprep.subr.mxu0 0.0
  %3628 = vmatpush2.msra.mxu0 0.0
  %3629 = vmatprep.subr.mxu0 0.0
  %3630 = vmatpush2.msra.mxu0 0.0
  %3631 = vmatprep.subr.mxu0 0.0
  %3632 = vmatpush2.msra.mxu0 0.0
  %3633 = vmatprep.subr.mxu0 0.0
  %3634 = vmatpush2.msra.mxu0 0.0
  %3635 = vmatprep.subr.mxu0 0.0
  %3636 = vmatpush2.msra.mxu0 0.0
  %3637 = vmatprep.subr.mxu0 0.0
  %3638 = vmatpush2.msra.mxu0 0.0
  %3639 = vmatprep.subr.mxu0 0.0
  %3640 = vmatpush2.msra.mxu0 0.0
  %3641 = vmatprep.subr.mxu0 0.0
  %3642 = vmatpush2.msra.mxu0 0.0
  %3643 = vmatprep.mubr.f32.mxu0 0.0
  %3644 = vmatmul.mubr.f32.gmra.mxu0 %v3532
  %v3645 = vpop.f32.mrf.mxu0
  %v3646 = vadd.f32 %v3530, %v3645
  %v3647 = vpop.f32.mrf.mxu0
  %3648 = vmatprep.mubr.f32.mxu0 0.0
  %3649 = vmatmul.mubr.f32.gmra.mxu0 %v3535
  %v3650 = vpop.f32.mrf.mxu0
  %v3651 = vadd.f32 %v3530, %v3650
  %v3652 = vpop.f32.mrf.mxu0
  %3653 = vmatprep.mubr.f32.mxu0 0.0
  %3654 = vmatmul.mubr.f32.gmra.mxu0 %v3538
  %v3655 = vpop.f32.mrf.mxu0
  %v3656 = vadd.f32 %v3530, %v3655
  %v3657 = vpop.f32.mrf.mxu0
  %3658 = vmatprep.mubr.f32.mxu0 0.0
  %3659 = vmatmul.mubr.f32.gmra.mxu0 %v3541
  %v3660 = vpop.f32.mrf.mxu0
  %v3661 = vadd.f32 %v3530, %v3660
  %v3662 = vpop.f32.mrf.mxu0
  %3663 = vmatprep.mubr.f32.mxu0 0.0
  %3664 = vmatmul.mubr.f32.gmra.mxu0 %v3544
  %v3665 = vpop.f32.mrf.mxu0
  %v3666 = vadd.f32 %v3530, %v3665
  %v3667 = vpop.f32.mrf.mxu0
  %3668 = vmatprep.mubr.f32.mxu0 0.0
  %3669 = vmatmul.mubr.f32.gmra.mxu0 %v3547
  %v3670 = vpop.f32.mrf.mxu0
  %v3671 = vadd.f32 %v3530, %v3670
  %v3672 = vpop.f32.mrf.mxu0
  %3673 = vmatprep.mubr.f32.mxu0 0.0
  %3674 = vmatmul.mubr.f32.gmra.mxu0 %v3550
  %v3675 = vpop.f32.mrf.mxu0
  %v3676 = vadd.f32 %v3530, %v3675
  %v3677 = vpop.f32.mrf.mxu0
  %3678 = vmatprep.mubr.f32.mxu0 0.0
  %3679 = vmatmul.mubr.f32.gmra.mxu0 %v3553
  %v3680 = vpop.f32.mrf.mxu0
  %v3681 = vadd.f32 %v3530, %v3680
  %v3682 = vpop.f32.mrf.mxu0
  %3683 = vmatprep.mubr.f32.mxu0 0.0
  %3684 = vmatmul.mubr.f32.gmra.mxu0 %v3556
  %v3685 = vpop.f32.mrf.mxu0
  %v3686 = vadd.f32 %v3530, %v3685
  %v3687 = vpop.f32.mrf.mxu0
  %3688 = vmatprep.mubr.f32.mxu0 0.0
  %3689 = vmatmul.mubr.f32.gmra.mxu0 %v3559
  %v3690 = vpop.f32.mrf.mxu0
  %v3691 = vadd.f32 %v3530, %v3690
  %v3692 = vpop.f32.mrf.mxu0
  %3693 = vmatprep.mubr.f32.mxu0 0.0
  %3694 = vmatmul.mubr.f32.gmra.mxu0 %v3562
  %v3695 = vpop.f32.mrf.mxu0
  %v3696 = vadd.f32 %v3530, %v3695
  %v3697 = vpop.f32.mrf.mxu0
  %3698 = vmatprep.mubr.f32.mxu0 0.0
  %3699 = vmatmul.mubr.f32.gmra.mxu0 %v3565
  %v3700 = vpop.f32.mrf.mxu0
  %v3701 = vadd.f32 %v3530, %v3700
  %v3702 = vpop.f32.mrf.mxu0
  %3703 = vmatprep.mubr.f32.mxu0 0.0
  %3704 = vmatmul.mubr.f32.gmra.mxu0 %v3568
  %v3705 = vpop.f32.mrf.mxu0
  %v3706 = vadd.f32 %v3530, %v3705
  %v3707 = vpop.f32.mrf.mxu0
  %3708 = vmatprep.mubr.f32.mxu0 0.0
  %3709 = vmatmul.mubr.f32.gmra.mxu0 %v3571
  %v3710 = vpop.f32.mrf.mxu0
  %v3711 = vadd.f32 %v3530, %v3710
  %v3712 = vpop.f32.mrf.mxu0
  %3713 = vmatprep.mubr.f32.mxu0 0.0
  %3714 = vmatmul.mubr.f32.gmra.mxu0 %v3574
  %v3715 = vpop.f32.mrf.mxu0
  %v3716 = vadd.f32 %v3530, %v3715
  %v3717 = vpop.f32.mrf.mxu0
  %3718 = vmatprep.mubr.f32.mxu0 0.0
  %3719 = vmatmul.mubr.f32.gmra.mxu0 %v3577
  %v3720 = vpop.f32.mrf.mxu0
  %v3721 = vadd.f32 %v3530, %v3720
  %v3722 = vpop.f32.mrf.mxu0
  %3723 = vdwg.mxu0
  %vm3724 = vcmask 64512
  %3725 = vst.msk [vmem:[%s7] sm:$0xff] %vm3724, %v3646
  %3726 = vst.msk [vmem:[%s7 + $0x8] sm:$0xff] %vm3724, %v3651
  %3727 = vst.msk [vmem:[%s7 + $0x10] sm:$0xff] %vm3724, %v3656
  %3728 = vst.msk [vmem:[%s7 + $0x18] sm:$0xff] %vm3724, %v3661
  %3729 = vst.msk [vmem:[%s7 + $0x20] sm:$0xff] %vm3724, %v3666
  %3730 = vst.msk [vmem:[%s7 + $0x28] sm:$0xff] %vm3724, %v3671
  %3731 = vst.msk [vmem:[%s7 + $0x30] sm:$0xff] %vm3724, %v3676
  %3732 = vst.msk [vmem:[%s7 + $0x38] sm:$0xff] %vm3724, %v3681
  %3733 = vst.msk [vmem:[%s7 + $0x40] sm:$0xff] %vm3724, %v3686
  %3734 = vst.msk [vmem:[%s7 + $0x48] sm:$0xff] %vm3724, %v3691
  %3735 = vst.msk [vmem:[%s7 + $0x50] sm:$0xff] %vm3724, %v3696
  %3736 = vst.msk [vmem:[%s7 + $0x58] sm:$0xff] %vm3724, %v3701
  %3737 = vst.msk [vmem:[%s7 + $0x60] sm:$0xff] %vm3724, %v3706
  %3738 = vst.msk [vmem:[%s7 + $0x68] sm:$0xff] %vm3724, %v3711
  %3739 = vst.msk [vmem:[%s7 + $0x70] sm:$0xff] %vm3724, %v3716
  %3740 = vst.msk [vmem:[%s7 + $0x78] sm:$0xff] %vm3724, %v3721
  // Predicated region
  $region30: #{tpu_custom_call.1} parent=0 // pred_check
    _
  $region31: #{tpu_custom_call.1} parent=0 // pred_check_branch
    %3742 = sbr.rel (0) target = $region33
  $region32: #{tpu_custom_call.1} parent=0 // pred_region
    _
  $region33: #{tpu_custom_call.1} parent=0 // pred_fallthru
    _
  // Predicated region
  $region34: #{tpu_custom_call.1} parent=0 // pred_check
    _
  $region35: #{tpu_custom_call.1} parent=0 // pred_check_branch
    %3744 = sbr.rel (0) target = $region37
  $region36: #{tpu_custom_call.1} parent=0 // pred_region
    _
  $region37: #{tpu_custom_call.1} parent=0 // pred_fallthru
    _

</llo_original>
